<compile_context>
chip_gen: v5e
topology: v5e:2x2
jax: 0.10.0
libtpu: 0.0.40
codegen_flags: <defaults>
</compile_context>

<pallas_src>
import jax
import jax.numpy as jnp
from jax import lax
from jax.experimental import pallas as pl
from jax.experimental.pallas import tpu as pltpu


def _round_up(x, m):
    return (x + m - 1) // m * m


# --------------------------------------------------------------------------
# Stage 1: embedding gather (DMA) + max_norm renorm + context mean
# --------------------------------------------------------------------------
def gather_mean_kernel(idx_ref, emb_hbm, mean_ref, gath, sem):
    # idx_ref : (B, C) int32 in SMEM (scalar prefetch)
    # emb_hbm : (V, D)  f32 embedding table, left in HBM (pl.ANY)
    # mean_ref: (B_pad, D) f32 output (context mean, rows >= B are zero)
    # gath    : (B*C, D) f32 VMEM scratch for gathered rows
    # sem     : (1,) shared DMA semaphore
    B, C = idx_ref.shape
    B_pad, D = mean_ref.shape

    # Issue every row DMA before waiting on any -> all B*C copies overlap.
    # One shared semaphore; waits reuse the descriptors used for start.
    # (Rows are not deduplicated; at B*C this small it is not worth it.)
    copies = []
    for t in range(B * C):
        row = idx_ref[t // C, t % C]
        cp = pltpu.make_async_copy(
            emb_hbm.at[pl.ds(row, 1), :],
            gath.at[pl.ds(t, 1), :],
            sem.at[0],
        )
        cp.start()
        copies.append(cp)
    for cp in copies:
        cp.wait()

    e = gath[...].reshape(B, C, D)
    # nn.Embedding(max_norm=1): rescale looked-up rows with ||row||_2 > 1
    # (PyTorch uses scale = max_norm / (norm + 1e-7)).
    norm = jnp.sqrt(jnp.sum(e * e, axis=-1, keepdims=True))
    scale = jnp.where(norm > 1.0, pl.reciprocal(norm + 1e-7, approx=False), 1.0)
    m = jnp.mean(e * scale, axis=1)                     # (B, D) f32

    mean_ref[...] = jnp.zeros((B_pad, D), jnp.float32)  # zero the padded rows
    mean_ref[pl.ds(0, B), :] = m


# --------------------------------------------------------------------------
# Stage 2: vocab-tiled projection  logits = mean @ W.T + b
# --------------------------------------------------------------------------
def projection_kernel(mean_ref, w_ref, b_ref, o_ref):
    # mean_ref: (B_pad, D) f32, resident across all vocab tiles
    # w_ref   : (TV, D)   bf16 weight tile (native PyTorch (V, D) layout)
    # b_ref   : (1, TV)   f32 bias tile
    # o_ref   : (B_pad, TV) f32 logits tile
    m = mean_ref[...].astype(jnp.bfloat16)              # bf16 MXU operands,
    logits = lax.dot_general(                           # f32 accumulation
        m, w_ref[...],
        dimension_numbers=(((1,), (1,)), ((), ())),     # contract D with D
        preferred_element_type=jnp.float32,
    )
    o_ref[...] = logits + b_ref[...]


# --------------------------------------------------------------------------
# Wrappers
# --------------------------------------------------------------------------
def prepare_cbow_params(emb_table, w, b, *, max_tv=2048, vmem_budget_bytes=8 << 20):
    """One-time parameter preparation (done at init, NOT per forward call):
    pads the vocab dim to a lane-dense multiple and stores W as bf16."""
    V, D = emb_table.shape
    assert w.shape == (V, D) and b.shape == (V,)

    v_pad = _round_up(V, 128)
    # Largest lane-dense vocab tile that divides v_pad, caps at max_tv and
    # double-buffers (bf16) within the VMEM budget.  Re-derive the budget for
    # v7x (64 MiB physical VMEM) vs v5e/v6e (128 MiB) if raising it.
    n128 = v_pad // 128
    tv = 128
    for k in range(1, n128 + 1):
        if n128 % k == 0:
            cand = k * 128
            if cand <= max_tv and 2 * cand * D * 2 <= vmem_budget_bytes:
                tv = cand

    # Pad + cast ONCE: the kernel streams the weight as bf16 from HBM.
    # (int8 is also an option on v5e/v6e; on v7x use bf16 or fp8.)
    w_p = jnp.zeros((v_pad, D), jnp.bfloat16).at[:V, :].set(w.astype(jnp.bfloat16))
    b_p = jnp.zeros((1, v_pad), jnp.float32).at[0, :V].set(b.astype(jnp.float32))

    return {
        "emb": emb_table.astype(jnp.float32),
        "w": w_p,
        "b": b_p,
        "V": V,
        "D": D,
        "tv": tv,
        "v_pad": v_pad,
    }


def cbow_forward(x_idx, params):
    """x_idx: (B, C) int32 context-word indices -> (B, V) logits."""
    B, C = x_idx.shape
    V, D = params["V"], params["D"]
    tv, v_pad = params["tv"], params["v_pad"]

    # Pad B to a full (bf16) sublane group so the MXU LHS and output stores
    # use full-width rows; the weight stream dominates HBM traffic anyway.
    B_pad = _round_up(B, 16)

    # ---- Stage 1: gather + renorm + mean -> (B_pad, D) f32 -----------------
    mean = pl.pallas_call(
        gather_mean_kernel,
        out_shape=jax.ShapeDtypeStruct((B_pad, D), jnp.float32),
        grid_spec=pltpu.PrefetchScalarGridSpec(
            num_scalar_prefetch=1,                     # x_idx -> SMEM
            grid=(1,),
            in_specs=[pl.BlockSpec(memory_space=pl.ANY)],   # table stays in HBM
            out_specs=pl.BlockSpec((B_pad, D), lambda i, idx: (0, 0)),
            scratch_shapes=[
                pltpu.VMEM((B * C, D), jnp.float32),   # gathered rows
                pltpu.SemaphoreType.DMA((1,)),         # ONE shared DMA semaphore
            ],
        ),
        compiler_params=pltpu.CompilerParams(dimension_semantics=("arbitrary",)),
    )(x_idx.astype(jnp.int32), params["emb"])

    # ---- Stage 2: vocab-tiled GEMV, bf16 weight stream ---------------------
    num_tiles = v_pad // tv
    logits = pl.pallas_call(
        projection_kernel,
        out_shape=jax.ShapeDtypeStruct((B_pad, v_pad), jnp.float32),
        grid=(num_tiles,),
        in_specs=[
            pl.BlockSpec((B_pad, D), lambda j: (0, 0)),   # mean: resident
            pl.BlockSpec((tv, D), lambda j: (j, 0)),      # bf16 weight tile
            pl.BlockSpec((1, tv), lambda j: (0, j)),      # bias tile
        ],
        out_specs=pl.BlockSpec((B_pad, tv), lambda j: (0, j)),
        compiler_params=pltpu.CompilerParams(
            # No cross-tile dependency -> vocab axis is parallel (2x on v7x's
            # two TensorCores; no-op on v5e/v6e).
            dimension_semantics=("parallel",),
            vmem_limit_bytes=32 * 1024 * 1024,
        ),
    )(mean, params["w"], params["b"])

    return logits[:B, :V]


def reference_forward(x_idx, emb_table, w, b):
    """Pure-JAX (f32) reference mirroring the PyTorch semantics."""
    e = jnp.take(emb_table, x_idx, axis=0)
    norm = jnp.sqrt(jnp.sum(e * e, axis=-1, keepdims=True))
    scale = jnp.where(norm > 1.0, 1.0 / (norm + 1e-7), 1.0)
    e = e * scale
    m = jnp.mean(e, axis=1)
    return m @ w.T + b


if __name__ == "__main__":
    # Small shapes consistent with Modelo_CBOW(embedding_dim, vocab_size);
    # vocab_size=4000 -> padded to 4096 -> two 2048-wide vocab tiles.
    embedding_dim = 64
    vocab_size = 4000
    batch = 4
    context = 8

    key = jax.random.PRNGKey(0)
    k_emb, k_w, k_b, k_idx = jax.random.split(key, 4)

    emb_table = jax.random.normal(k_emb, (vocab_size, embedding_dim), jnp.float32)
    w = jax.random.normal(k_w, (vocab_size, embedding_dim), jnp.float32) * 0.1
    b = jax.random.normal(k_b, (vocab_size,), jnp.float32) * 0.01
    x_idx = jax.random.randint(k_idx, (batch, context), 0, vocab_size, jnp.int32)

    params = prepare_cbow_params(emb_table, w, b)   # one-time (init) prep

    out = cbow_forward(x_idx, params)
    out = jax.block_until_ready(out)

    ref = reference_forward(x_idx, emb_table, w, b)
    assert out.shape == (batch, vocab_size)
    max_err = float(jnp.max(jnp.abs(out - ref)))
    # Tolerance sized for bf16 weight/mean streaming with f32 accumulation.
    assert jnp.allclose(out, ref, atol=1e-2, rtol=1e-2), max_err

    print("KERNEL_OK")
</pallas_src>

<mosaic_0001>
module attributes {stable_mosaic.version = 11 : i64} {
  func.func @gather_mean_kernel(%arg0: i32, %arg1: memref<4x8xi32, #tpu.memory_space<smem>>, %arg2: memref<4000x64xf32, #tpu.memory_space<any>>, %arg3: memref<16x64xf32, #tpu.memory_space<vmem>>, %arg4: memref<32x64xf32, #tpu.memory_space<vmem>>, %arg5: memref<1x!tpu.dma_semaphore, #tpu.memory_space<semaphore_mem>>) attributes {dimension_semantics = [#tpu.dimension_semantics<arbitrary>], iteration_bounds = array<i64: 1>, scalar_prefetch = 1 : i64, scratch_operands = 2 : i64, tpu.core_type = #tpu.core_type<tc>, window_params = [{}, {pipeline_mode = #tpu.pipeline_mode<synchronous>, transform_indices = @transform_1, window_bounds = array<i64: 16, 64>}]} {
    %c0 = arith.constant 0 : index
    %c0_0 = arith.constant 0 : index
    %0 = memref.load %arg1[%c0, %c0_0] : memref<4x8xi32, #tpu.memory_space<smem>>
    %c0_i32 = arith.constant 0 : i32
    %c0_i32_1 = arith.constant 0 : i32
    %1 = tpu.memref_slice %arg2[%0, %c0_i32_1] : memref<4000x64xf32, #tpu.memory_space<any>> -> memref<1x64xf32, #tpu.memory_space<any>>
    %c0_i32_2 = arith.constant 0 : i32
    %c0_i32_3 = arith.constant 0 : i32
    %2 = tpu.memref_slice %arg4[%c0_i32_2, %c0_i32_3] : memref<32x64xf32, #tpu.memory_space<vmem>> -> memref<1x64xf32, #tpu.memory_space<vmem>>
    %3 = tpu.memref_slice %arg5[%c0_i32] : memref<1x!tpu.dma_semaphore, #tpu.memory_space<semaphore_mem>> -> memref<1x!tpu.dma_semaphore, #tpu.memory_space<semaphore_mem>>
    %4 = tpu.memref_squeeze %3 : memref<1x!tpu.dma_semaphore, #tpu.memory_space<semaphore_mem>> -> memref<!tpu.dma_semaphore, #tpu.memory_space<semaphore_mem>>
    tpu.enqueue_dma source(%1 : memref<1x64xf32, #tpu.memory_space<any>>) target(%2 : memref<1x64xf32, #tpu.memory_space<vmem>>) target_semaphore(%4 : memref<!tpu.dma_semaphore, #tpu.memory_space<semaphore_mem>>)
    %c0_4 = arith.constant 0 : index
    %c1 = arith.constant 1 : index
    %5 = memref.load %arg1[%c0_4, %c1] : memref<4x8xi32, #tpu.memory_space<smem>>
    %c0_i32_5 = arith.constant 0 : i32
    %c0_i32_6 = arith.constant 0 : i32
    %6 = tpu.memref_slice %arg2[%5, %c0_i32_6] : memref<4000x64xf32, #tpu.memory_space<any>> -> memref<1x64xf32, #tpu.memory_space<any>>
    %c1_i32 = arith.constant 1 : i32
    %c0_i32_7 = arith.constant 0 : i32
    %7 = tpu.memref_slice %arg4[%c1_i32, %c0_i32_7] : memref<32x64xf32, #tpu.memory_space<vmem>> -> memref<1x64xf32, #tpu.memory_space<vmem>>
    %8 = tpu.memref_slice %arg5[%c0_i32_5] : memref<1x!tpu.dma_semaphore, #tpu.memory_space<semaphore_mem>> -> memref<1x!tpu.dma_semaphore, #tpu.memory_space<semaphore_mem>>
    %9 = tpu.memref_squeeze %8 : memref<1x!tpu.dma_semaphore, #tpu.memory_space<semaphore_mem>> -> memref<!tpu.dma_semaphore, #tpu.memory_space<semaphore_mem>>
    tpu.enqueue_dma source(%6 : memref<1x64xf32, #tpu.memory_space<any>>) target(%7 : memref<1x64xf32, #tpu.memory_space<vmem>>) target_semaphore(%9 : memref<!tpu.dma_semaphore, #tpu.memory_space<semaphore_mem>>)
    %c0_8 = arith.constant 0 : index
    %c2 = arith.constant 2 : index
    %10 = memref.load %arg1[%c0_8, %c2] : memref<4x8xi32, #tpu.memory_space<smem>>
    %c0_i32_9 = arith.constant 0 : i32
    %c0_i32_10 = arith.constant 0 : i32
    %11 = tpu.memref_slice %arg2[%10, %c0_i32_10] : memref<4000x64xf32, #tpu.memory_space<any>> -> memref<1x64xf32, #tpu.memory_space<any>>
    %c2_i32 = arith.constant 2 : i32
    %c0_i32_11 = arith.constant 0 : i32
    %12 = tpu.memref_slice %arg4[%c2_i32, %c0_i32_11] : memref<32x64xf32, #tpu.memory_space<vmem>> -> memref<1x64xf32, #tpu.memory_space<vmem>>
    %13 = tpu.memref_slice %arg5[%c0_i32_9] : memref<1x!tpu.dma_semaphore, #tpu.memory_space<semaphore_mem>> -> memref<1x!tpu.dma_semaphore, #tpu.memory_space<semaphore_mem>>
    %14 = tpu.memref_squeeze %13 : memref<1x!tpu.dma_semaphore, #tpu.memory_space<semaphore_mem>> -> memref<!tpu.dma_semaphore, #tpu.memory_space<semaphore_mem>>
    tpu.enqueue_dma source(%11 : memref<1x64xf32, #tpu.memory_space<any>>) target(%12 : memref<1x64xf32, #tpu.memory_space<vmem>>) target_semaphore(%14 : memref<!tpu.dma_semaphore, #tpu.memory_space<semaphore_mem>>)
    %c0_12 = arith.constant 0 : index
    %c3 = arith.constant 3 : index
    %15 = memref.load %arg1[%c0_12, %c3] : memref<4x8xi32, #tpu.memory_space<smem>>
    %c0_i32_13 = arith.constant 0 : i32
    %c0_i32_14 = arith.constant 0 : i32
    %16 = tpu.memref_slice %arg2[%15, %c0_i32_14] : memref<4000x64xf32, #tpu.memory_space<any>> -> memref<1x64xf32, #tpu.memory_space<any>>
    %c3_i32 = arith.constant 3 : i32
    %c0_i32_15 = arith.constant 0 : i32
    %17 = tpu.memref_slice %arg4[%c3_i32, %c0_i32_15] : memref<32x64xf32, #tpu.memory_space<vmem>> -> memref<1x64xf32, #tpu.memory_space<vmem>>
    %18 = tpu.memref_slice %arg5[%c0_i32_13] : memref<1x!tpu.dma_semaphore, #tpu.memory_space<semaphore_mem>> -> memref<1x!tpu.dma_semaphore, #tpu.memory_space<semaphore_mem>>
    %19 = tpu.memref_squeeze %18 : memref<1x!tpu.dma_semaphore, #tpu.memory_space<semaphore_mem>> -> memref<!tpu.dma_semaphore, #tpu.memory_space<semaphore_mem>>
    tpu.enqueue_dma source(%16 : memref<1x64xf32, #tpu.memory_space<any>>) target(%17 : memref<1x64xf32, #tpu.memory_space<vmem>>) target_semaphore(%19 : memref<!tpu.dma_semaphore, #tpu.memory_space<semaphore_mem>>)
    %c0_16 = arith.constant 0 : index
    %c4 = arith.constant 4 : index
    %20 = memref.load %arg1[%c0_16, %c4] : memref<4x8xi32, #tpu.memory_space<smem>>
    %c0_i32_17 = arith.constant 0 : i32
    %c0_i32_18 = arith.constant 0 : i32
    %21 = tpu.memref_slice %arg2[%20, %c0_i32_18] : memref<4000x64xf32, #tpu.memory_space<any>> -> memref<1x64xf32, #tpu.memory_space<any>>
    %c4_i32 = arith.constant 4 : i32
    %c0_i32_19 = arith.constant 0 : i32
    %22 = tpu.memref_slice %arg4[%c4_i32, %c0_i32_19] : memref<32x64xf32, #tpu.memory_space<vmem>> -> memref<1x64xf32, #tpu.memory_space<vmem>>
    %23 = tpu.memref_slice %arg5[%c0_i32_17] : memref<1x!tpu.dma_semaphore, #tpu.memory_space<semaphore_mem>> -> memref<1x!tpu.dma_semaphore, #tpu.memory_space<semaphore_mem>>
    %24 = tpu.memref_squeeze %23 : memref<1x!tpu.dma_semaphore, #tpu.memory_space<semaphore_mem>> -> memref<!tpu.dma_semaphore, #tpu.memory_space<semaphore_mem>>
    tpu.enqueue_dma source(%21 : memref<1x64xf32, #tpu.memory_space<any>>) target(%22 : memref<1x64xf32, #tpu.memory_space<vmem>>) target_semaphore(%24 : memref<!tpu.dma_semaphore, #tpu.memory_space<semaphore_mem>>)
    %c0_20 = arith.constant 0 : index
    %c5 = arith.constant 5 : index
    %25 = memref.load %arg1[%c0_20, %c5] : memref<4x8xi32, #tpu.memory_space<smem>>
    %c0_i32_21 = arith.constant 0 : i32
    %c0_i32_22 = arith.constant 0 : i32
    %26 = tpu.memref_slice %arg2[%25, %c0_i32_22] : memref<4000x64xf32, #tpu.memory_space<any>> -> memref<1x64xf32, #tpu.memory_space<any>>
    %c5_i32 = arith.constant 5 : i32
    %c0_i32_23 = arith.constant 0 : i32
    %27 = tpu.memref_slice %arg4[%c5_i32, %c0_i32_23] : memref<32x64xf32, #tpu.memory_space<vmem>> -> memref<1x64xf32, #tpu.memory_space<vmem>>
    %28 = tpu.memref_slice %arg5[%c0_i32_21] : memref<1x!tpu.dma_semaphore, #tpu.memory_space<semaphore_mem>> -> memref<1x!tpu.dma_semaphore, #tpu.memory_space<semaphore_mem>>
    %29 = tpu.memref_squeeze %28 : memref<1x!tpu.dma_semaphore, #tpu.memory_space<semaphore_mem>> -> memref<!tpu.dma_semaphore, #tpu.memory_space<semaphore_mem>>
    tpu.enqueue_dma source(%26 : memref<1x64xf32, #tpu.memory_space<any>>) target(%27 : memref<1x64xf32, #tpu.memory_space<vmem>>) target_semaphore(%29 : memref<!tpu.dma_semaphore, #tpu.memory_space<semaphore_mem>>)
    %c0_24 = arith.constant 0 : index
    %c6 = arith.constant 6 : index
    %30 = memref.load %arg1[%c0_24, %c6] : memref<4x8xi32, #tpu.memory_space<smem>>
    %c0_i32_25 = arith.constant 0 : i32
    %c0_i32_26 = arith.constant 0 : i32
    %31 = tpu.memref_slice %arg2[%30, %c0_i32_26] : memref<4000x64xf32, #tpu.memory_space<any>> -> memref<1x64xf32, #tpu.memory_space<any>>
    %c6_i32 = arith.constant 6 : i32
    %c0_i32_27 = arith.constant 0 : i32
    %32 = tpu.memref_slice %arg4[%c6_i32, %c0_i32_27] : memref<32x64xf32, #tpu.memory_space<vmem>> -> memref<1x64xf32, #tpu.memory_space<vmem>>
    %33 = tpu.memref_slice %arg5[%c0_i32_25] : memref<1x!tpu.dma_semaphore, #tpu.memory_space<semaphore_mem>> -> memref<1x!tpu.dma_semaphore, #tpu.memory_space<semaphore_mem>>
    %34 = tpu.memref_squeeze %33 : memref<1x!tpu.dma_semaphore, #tpu.memory_space<semaphore_mem>> -> memref<!tpu.dma_semaphore, #tpu.memory_space<semaphore_mem>>
    tpu.enqueue_dma source(%31 : memref<1x64xf32, #tpu.memory_space<any>>) target(%32 : memref<1x64xf32, #tpu.memory_space<vmem>>) target_semaphore(%34 : memref<!tpu.dma_semaphore, #tpu.memory_space<semaphore_mem>>)
    %c0_28 = arith.constant 0 : index
    %c7 = arith.constant 7 : index
    %35 = memref.load %arg1[%c0_28, %c7] : memref<4x8xi32, #tpu.memory_space<smem>>
    %c0_i32_29 = arith.constant 0 : i32
    %c0_i32_30 = arith.constant 0 : i32
    %36 = tpu.memref_slice %arg2[%35, %c0_i32_30] : memref<4000x64xf32, #tpu.memory_space<any>> -> memref<1x64xf32, #tpu.memory_space<any>>
    %c7_i32 = arith.constant 7 : i32
    %c0_i32_31 = arith.constant 0 : i32
    %37 = tpu.memref_slice %arg4[%c7_i32, %c0_i32_31] : memref<32x64xf32, #tpu.memory_space<vmem>> -> memref<1x64xf32, #tpu.memory_space<vmem>>
    %38 = tpu.memref_slice %arg5[%c0_i32_29] : memref<1x!tpu.dma_semaphore, #tpu.memory_space<semaphore_mem>> -> memref<1x!tpu.dma_semaphore, #tpu.memory_space<semaphore_mem>>
    %39 = tpu.memref_squeeze %38 : memref<1x!tpu.dma_semaphore, #tpu.memory_space<semaphore_mem>> -> memref<!tpu.dma_semaphore, #tpu.memory_space<semaphore_mem>>
    tpu.enqueue_dma source(%36 : memref<1x64xf32, #tpu.memory_space<any>>) target(%37 : memref<1x64xf32, #tpu.memory_space<vmem>>) target_semaphore(%39 : memref<!tpu.dma_semaphore, #tpu.memory_space<semaphore_mem>>)
    %c1_32 = arith.constant 1 : index
    %c0_33 = arith.constant 0 : index
    %40 = memref.load %arg1[%c1_32, %c0_33] : memref<4x8xi32, #tpu.memory_space<smem>>
    %c0_i32_34 = arith.constant 0 : i32
    %c0_i32_35 = arith.constant 0 : i32
    %41 = tpu.memref_slice %arg2[%40, %c0_i32_35] : memref<4000x64xf32, #tpu.memory_space<any>> -> memref<1x64xf32, #tpu.memory_space<any>>
    %c8_i32 = arith.constant 8 : i32
    %c0_i32_36 = arith.constant 0 : i32
    %42 = tpu.memref_slice %arg4[%c8_i32, %c0_i32_36] : memref<32x64xf32, #tpu.memory_space<vmem>> -> memref<1x64xf32, #tpu.memory_space<vmem>>
    %43 = tpu.memref_slice %arg5[%c0_i32_34] : memref<1x!tpu.dma_semaphore, #tpu.memory_space<semaphore_mem>> -> memref<1x!tpu.dma_semaphore, #tpu.memory_space<semaphore_mem>>
    %44 = tpu.memref_squeeze %43 : memref<1x!tpu.dma_semaphore, #tpu.memory_space<semaphore_mem>> -> memref<!tpu.dma_semaphore, #tpu.memory_space<semaphore_mem>>
    tpu.enqueue_dma source(%41 : memref<1x64xf32, #tpu.memory_space<any>>) target(%42 : memref<1x64xf32, #tpu.memory_space<vmem>>) target_semaphore(%44 : memref<!tpu.dma_semaphore, #tpu.memory_space<semaphore_mem>>)
    %c1_37 = arith.constant 1 : index
    %c1_38 = arith.constant 1 : index
    %45 = memref.load %arg1[%c1_37, %c1_38] : memref<4x8xi32, #tpu.memory_space<smem>>
    %c0_i32_39 = arith.constant 0 : i32
    %c0_i32_40 = arith.constant 0 : i32
    %46 = tpu.memref_slice %arg2[%45, %c0_i32_40] : memref<4000x64xf32, #tpu.memory_space<any>> -> memref<1x64xf32, #tpu.memory_space<any>>
    %c9_i32 = arith.constant 9 : i32
    %c0_i32_41 = arith.constant 0 : i32
    %47 = tpu.memref_slice %arg4[%c9_i32, %c0_i32_41] : memref<32x64xf32, #tpu.memory_space<vmem>> -> memref<1x64xf32, #tpu.memory_space<vmem>>
    %48 = tpu.memref_slice %arg5[%c0_i32_39] : memref<1x!tpu.dma_semaphore, #tpu.memory_space<semaphore_mem>> -> memref<1x!tpu.dma_semaphore, #tpu.memory_space<semaphore_mem>>
    %49 = tpu.memref_squeeze %48 : memref<1x!tpu.dma_semaphore, #tpu.memory_space<semaphore_mem>> -> memref<!tpu.dma_semaphore, #tpu.memory_space<semaphore_mem>>
    tpu.enqueue_dma source(%46 : memref<1x64xf32, #tpu.memory_space<any>>) target(%47 : memref<1x64xf32, #tpu.memory_space<vmem>>) target_semaphore(%49 : memref<!tpu.dma_semaphore, #tpu.memory_space<semaphore_mem>>)
    %c1_42 = arith.constant 1 : index
    %c2_43 = arith.constant 2 : index
    %50 = memref.load %arg1[%c1_42, %c2_43] : memref<4x8xi32, #tpu.memory_space<smem>>
    %c0_i32_44 = arith.constant 0 : i32
    %c0_i32_45 = arith.constant 0 : i32
    %51 = tpu.memref_slice %arg2[%50, %c0_i32_45] : memref<4000x64xf32, #tpu.memory_space<any>> -> memref<1x64xf32, #tpu.memory_space<any>>
    %c10_i32 = arith.constant 10 : i32
    %c0_i32_46 = arith.constant 0 : i32
    %52 = tpu.memref_slice %arg4[%c10_i32, %c0_i32_46] : memref<32x64xf32, #tpu.memory_space<vmem>> -> memref<1x64xf32, #tpu.memory_space<vmem>>
    %53 = tpu.memref_slice %arg5[%c0_i32_44] : memref<1x!tpu.dma_semaphore, #tpu.memory_space<semaphore_mem>> -> memref<1x!tpu.dma_semaphore, #tpu.memory_space<semaphore_mem>>
    %54 = tpu.memref_squeeze %53 : memref<1x!tpu.dma_semaphore, #tpu.memory_space<semaphore_mem>> -> memref<!tpu.dma_semaphore, #tpu.memory_space<semaphore_mem>>
    tpu.enqueue_dma source(%51 : memref<1x64xf32, #tpu.memory_space<any>>) target(%52 : memref<1x64xf32, #tpu.memory_space<vmem>>) target_semaphore(%54 : memref<!tpu.dma_semaphore, #tpu.memory_space<semaphore_mem>>)
    %c1_47 = arith.constant 1 : index
    %c3_48 = arith.constant 3 : index
    %55 = memref.load %arg1[%c1_47, %c3_48] : memref<4x8xi32, #tpu.memory_space<smem>>
    %c0_i32_49 = arith.constant 0 : i32
    %c0_i32_50 = arith.constant 0 : i32
    %56 = tpu.memref_slice %arg2[%55, %c0_i32_50] : memref<4000x64xf32, #tpu.memory_space<any>> -> memref<1x64xf32, #tpu.memory_space<any>>
    %c11_i32 = arith.constant 11 : i32
    %c0_i32_51 = arith.constant 0 : i32
    %57 = tpu.memref_slice %arg4[%c11_i32, %c0_i32_51] : memref<32x64xf32, #tpu.memory_space<vmem>> -> memref<1x64xf32, #tpu.memory_space<vmem>>
    %58 = tpu.memref_slice %arg5[%c0_i32_49] : memref<1x!tpu.dma_semaphore, #tpu.memory_space<semaphore_mem>> -> memref<1x!tpu.dma_semaphore, #tpu.memory_space<semaphore_mem>>
    %59 = tpu.memref_squeeze %58 : memref<1x!tpu.dma_semaphore, #tpu.memory_space<semaphore_mem>> -> memref<!tpu.dma_semaphore, #tpu.memory_space<semaphore_mem>>
    tpu.enqueue_dma source(%56 : memref<1x64xf32, #tpu.memory_space<any>>) target(%57 : memref<1x64xf32, #tpu.memory_space<vmem>>) target_semaphore(%59 : memref<!tpu.dma_semaphore, #tpu.memory_space<semaphore_mem>>)
    %c1_52 = arith.constant 1 : index
    %c4_53 = arith.constant 4 : index
    %60 = memref.load %arg1[%c1_52, %c4_53] : memref<4x8xi32, #tpu.memory_space<smem>>
    %c0_i32_54 = arith.constant 0 : i32
    %c0_i32_55 = arith.constant 0 : i32
    %61 = tpu.memref_slice %arg2[%60, %c0_i32_55] : memref<4000x64xf32, #tpu.memory_space<any>> -> memref<1x64xf32, #tpu.memory_space<any>>
    %c12_i32 = arith.constant 12 : i32
    %c0_i32_56 = arith.constant 0 : i32
    %62 = tpu.memref_slice %arg4[%c12_i32, %c0_i32_56] : memref<32x64xf32, #tpu.memory_space<vmem>> -> memref<1x64xf32, #tpu.memory_space<vmem>>
    %63 = tpu.memref_slice %arg5[%c0_i32_54] : memref<1x!tpu.dma_semaphore, #tpu.memory_space<semaphore_mem>> -> memref<1x!tpu.dma_semaphore, #tpu.memory_space<semaphore_mem>>
    %64 = tpu.memref_squeeze %63 : memref<1x!tpu.dma_semaphore, #tpu.memory_space<semaphore_mem>> -> memref<!tpu.dma_semaphore, #tpu.memory_space<semaphore_mem>>
    tpu.enqueue_dma source(%61 : memref<1x64xf32, #tpu.memory_space<any>>) target(%62 : memref<1x64xf32, #tpu.memory_space<vmem>>) target_semaphore(%64 : memref<!tpu.dma_semaphore, #tpu.memory_space<semaphore_mem>>)
    %c1_57 = arith.constant 1 : index
    %c5_58 = arith.constant 5 : index
    %65 = memref.load %arg1[%c1_57, %c5_58] : memref<4x8xi32, #tpu.memory_space<smem>>
    %c0_i32_59 = arith.constant 0 : i32
    %c0_i32_60 = arith.constant 0 : i32
    %66 = tpu.memref_slice %arg2[%65, %c0_i32_60] : memref<4000x64xf32, #tpu.memory_space<any>> -> memref<1x64xf32, #tpu.memory_space<any>>
    %c13_i32 = arith.constant 13 : i32
    %c0_i32_61 = arith.constant 0 : i32
    %67 = tpu.memref_slice %arg4[%c13_i32, %c0_i32_61] : memref<32x64xf32, #tpu.memory_space<vmem>> -> memref<1x64xf32, #tpu.memory_space<vmem>>
    %68 = tpu.memref_slice %arg5[%c0_i32_59] : memref<1x!tpu.dma_semaphore, #tpu.memory_space<semaphore_mem>> -> memref<1x!tpu.dma_semaphore, #tpu.memory_space<semaphore_mem>>
    %69 = tpu.memref_squeeze %68 : memref<1x!tpu.dma_semaphore, #tpu.memory_space<semaphore_mem>> -> memref<!tpu.dma_semaphore, #tpu.memory_space<semaphore_mem>>
    tpu.enqueue_dma source(%66 : memref<1x64xf32, #tpu.memory_space<any>>) target(%67 : memref<1x64xf32, #tpu.memory_space<vmem>>) target_semaphore(%69 : memref<!tpu.dma_semaphore, #tpu.memory_space<semaphore_mem>>)
    %c1_62 = arith.constant 1 : index
    %c6_63 = arith.constant 6 : index
    %70 = memref.load %arg1[%c1_62, %c6_63] : memref<4x8xi32, #tpu.memory_space<smem>>
    %c0_i32_64 = arith.constant 0 : i32
    %c0_i32_65 = arith.constant 0 : i32
    %71 = tpu.memref_slice %arg2[%70, %c0_i32_65] : memref<4000x64xf32, #tpu.memory_space<any>> -> memref<1x64xf32, #tpu.memory_space<any>>
    %c14_i32 = arith.constant 14 : i32
    %c0_i32_66 = arith.constant 0 : i32
    %72 = tpu.memref_slice %arg4[%c14_i32, %c0_i32_66] : memref<32x64xf32, #tpu.memory_space<vmem>> -> memref<1x64xf32, #tpu.memory_space<vmem>>
    %73 = tpu.memref_slice %arg5[%c0_i32_64] : memref<1x!tpu.dma_semaphore, #tpu.memory_space<semaphore_mem>> -> memref<1x!tpu.dma_semaphore, #tpu.memory_space<semaphore_mem>>
    %74 = tpu.memref_squeeze %73 : memref<1x!tpu.dma_semaphore, #tpu.memory_space<semaphore_mem>> -> memref<!tpu.dma_semaphore, #tpu.memory_space<semaphore_mem>>
    tpu.enqueue_dma source(%71 : memref<1x64xf32, #tpu.memory_space<any>>) target(%72 : memref<1x64xf32, #tpu.memory_space<vmem>>) target_semaphore(%74 : memref<!tpu.dma_semaphore, #tpu.memory_space<semaphore_mem>>)
    %c1_67 = arith.constant 1 : index
    %c7_68 = arith.constant 7 : index
    %75 = memref.load %arg1[%c1_67, %c7_68] : memref<4x8xi32, #tpu.memory_space<smem>>
    %c0_i32_69 = arith.constant 0 : i32
    %c0_i32_70 = arith.constant 0 : i32
    %76 = tpu.memref_slice %arg2[%75, %c0_i32_70] : memref<4000x64xf32, #tpu.memory_space<any>> -> memref<1x64xf32, #tpu.memory_space<any>>
    %c15_i32 = arith.constant 15 : i32
    %c0_i32_71 = arith.constant 0 : i32
    %77 = tpu.memref_slice %arg4[%c15_i32, %c0_i32_71] : memref<32x64xf32, #tpu.memory_space<vmem>> -> memref<1x64xf32, #tpu.memory_space<vmem>>
    %78 = tpu.memref_slice %arg5[%c0_i32_69] : memref<1x!tpu.dma_semaphore, #tpu.memory_space<semaphore_mem>> -> memref<1x!tpu.dma_semaphore, #tpu.memory_space<semaphore_mem>>
    %79 = tpu.memref_squeeze %78 : memref<1x!tpu.dma_semaphore, #tpu.memory_space<semaphore_mem>> -> memref<!tpu.dma_semaphore, #tpu.memory_space<semaphore_mem>>
    tpu.enqueue_dma source(%76 : memref<1x64xf32, #tpu.memory_space<any>>) target(%77 : memref<1x64xf32, #tpu.memory_space<vmem>>) target_semaphore(%79 : memref<!tpu.dma_semaphore, #tpu.memory_space<semaphore_mem>>)
    %c2_72 = arith.constant 2 : index
    %c0_73 = arith.constant 0 : index
    %80 = memref.load %arg1[%c2_72, %c0_73] : memref<4x8xi32, #tpu.memory_space<smem>>
    %c0_i32_74 = arith.constant 0 : i32
    %c0_i32_75 = arith.constant 0 : i32
    %81 = tpu.memref_slice %arg2[%80, %c0_i32_75] : memref<4000x64xf32, #tpu.memory_space<any>> -> memref<1x64xf32, #tpu.memory_space<any>>
    %c16_i32 = arith.constant 16 : i32
    %c0_i32_76 = arith.constant 0 : i32
    %82 = tpu.memref_slice %arg4[%c16_i32, %c0_i32_76] : memref<32x64xf32, #tpu.memory_space<vmem>> -> memref<1x64xf32, #tpu.memory_space<vmem>>
    %83 = tpu.memref_slice %arg5[%c0_i32_74] : memref<1x!tpu.dma_semaphore, #tpu.memory_space<semaphore_mem>> -> memref<1x!tpu.dma_semaphore, #tpu.memory_space<semaphore_mem>>
    %84 = tpu.memref_squeeze %83 : memref<1x!tpu.dma_semaphore, #tpu.memory_space<semaphore_mem>> -> memref<!tpu.dma_semaphore, #tpu.memory_space<semaphore_mem>>
    tpu.enqueue_dma source(%81 : memref<1x64xf32, #tpu.memory_space<any>>) target(%82 : memref<1x64xf32, #tpu.memory_space<vmem>>) target_semaphore(%84 : memref<!tpu.dma_semaphore, #tpu.memory_space<semaphore_mem>>)
    %c2_77 = arith.constant 2 : index
    %c1_78 = arith.constant 1 : index
    %85 = memref.load %arg1[%c2_77, %c1_78] : memref<4x8xi32, #tpu.memory_space<smem>>
    %c0_i32_79 = arith.constant 0 : i32
    %c0_i32_80 = arith.constant 0 : i32
    %86 = tpu.memref_slice %arg2[%85, %c0_i32_80] : memref<4000x64xf32, #tpu.memory_space<any>> -> memref<1x64xf32, #tpu.memory_space<any>>
    %c17_i32 = arith.constant 17 : i32
    %c0_i32_81 = arith.constant 0 : i32
    %87 = tpu.memref_slice %arg4[%c17_i32, %c0_i32_81] : memref<32x64xf32, #tpu.memory_space<vmem>> -> memref<1x64xf32, #tpu.memory_space<vmem>>
    %88 = tpu.memref_slice %arg5[%c0_i32_79] : memref<1x!tpu.dma_semaphore, #tpu.memory_space<semaphore_mem>> -> memref<1x!tpu.dma_semaphore, #tpu.memory_space<semaphore_mem>>
    %89 = tpu.memref_squeeze %88 : memref<1x!tpu.dma_semaphore, #tpu.memory_space<semaphore_mem>> -> memref<!tpu.dma_semaphore, #tpu.memory_space<semaphore_mem>>
    tpu.enqueue_dma source(%86 : memref<1x64xf32, #tpu.memory_space<any>>) target(%87 : memref<1x64xf32, #tpu.memory_space<vmem>>) target_semaphore(%89 : memref<!tpu.dma_semaphore, #tpu.memory_space<semaphore_mem>>)
    %c2_82 = arith.constant 2 : index
    %c2_83 = arith.constant 2 : index
    %90 = memref.load %arg1[%c2_82, %c2_83] : memref<4x8xi32, #tpu.memory_space<smem>>
    %c0_i32_84 = arith.constant 0 : i32
    %c0_i32_85 = arith.constant 0 : i32
    %91 = tpu.memref_slice %arg2[%90, %c0_i32_85] : memref<4000x64xf32, #tpu.memory_space<any>> -> memref<1x64xf32, #tpu.memory_space<any>>
    %c18_i32 = arith.constant 18 : i32
    %c0_i32_86 = arith.constant 0 : i32
    %92 = tpu.memref_slice %arg4[%c18_i32, %c0_i32_86] : memref<32x64xf32, #tpu.memory_space<vmem>> -> memref<1x64xf32, #tpu.memory_space<vmem>>
    %93 = tpu.memref_slice %arg5[%c0_i32_84] : memref<1x!tpu.dma_semaphore, #tpu.memory_space<semaphore_mem>> -> memref<1x!tpu.dma_semaphore, #tpu.memory_space<semaphore_mem>>
    %94 = tpu.memref_squeeze %93 : memref<1x!tpu.dma_semaphore, #tpu.memory_space<semaphore_mem>> -> memref<!tpu.dma_semaphore, #tpu.memory_space<semaphore_mem>>
    tpu.enqueue_dma source(%91 : memref<1x64xf32, #tpu.memory_space<any>>) target(%92 : memref<1x64xf32, #tpu.memory_space<vmem>>) target_semaphore(%94 : memref<!tpu.dma_semaphore, #tpu.memory_space<semaphore_mem>>)
    %c2_87 = arith.constant 2 : index
    %c3_88 = arith.constant 3 : index
    %95 = memref.load %arg1[%c2_87, %c3_88] : memref<4x8xi32, #tpu.memory_space<smem>>
    %c0_i32_89 = arith.constant 0 : i32
    %c0_i32_90 = arith.constant 0 : i32
    %96 = tpu.memref_slice %arg2[%95, %c0_i32_90] : memref<4000x64xf32, #tpu.memory_space<any>> -> memref<1x64xf32, #tpu.memory_space<any>>
    %c19_i32 = arith.constant 19 : i32
    %c0_i32_91 = arith.constant 0 : i32
    %97 = tpu.memref_slice %arg4[%c19_i32, %c0_i32_91] : memref<32x64xf32, #tpu.memory_space<vmem>> -> memref<1x64xf32, #tpu.memory_space<vmem>>
    %98 = tpu.memref_slice %arg5[%c0_i32_89] : memref<1x!tpu.dma_semaphore, #tpu.memory_space<semaphore_mem>> -> memref<1x!tpu.dma_semaphore, #tpu.memory_space<semaphore_mem>>
    %99 = tpu.memref_squeeze %98 : memref<1x!tpu.dma_semaphore, #tpu.memory_space<semaphore_mem>> -> memref<!tpu.dma_semaphore, #tpu.memory_space<semaphore_mem>>
    tpu.enqueue_dma source(%96 : memref<1x64xf32, #tpu.memory_space<any>>) target(%97 : memref<1x64xf32, #tpu.memory_space<vmem>>) target_semaphore(%99 : memref<!tpu.dma_semaphore, #tpu.memory_space<semaphore_mem>>)
    %c2_92 = arith.constant 2 : index
    %c4_93 = arith.constant 4 : index
    %100 = memref.load %arg1[%c2_92, %c4_93] : memref<4x8xi32, #tpu.memory_space<smem>>
    %c0_i32_94 = arith.constant 0 : i32
    %c0_i32_95 = arith.constant 0 : i32
    %101 = tpu.memref_slice %arg2[%100, %c0_i32_95] : memref<4000x64xf32, #tpu.memory_space<any>> -> memref<1x64xf32, #tpu.memory_space<any>>
    %c20_i32 = arith.constant 20 : i32
    %c0_i32_96 = arith.constant 0 : i32
    %102 = tpu.memref_slice %arg4[%c20_i32, %c0_i32_96] : memref<32x64xf32, #tpu.memory_space<vmem>> -> memref<1x64xf32, #tpu.memory_space<vmem>>
    %103 = tpu.memref_slice %arg5[%c0_i32_94] : memref<1x!tpu.dma_semaphore, #tpu.memory_space<semaphore_mem>> -> memref<1x!tpu.dma_semaphore, #tpu.memory_space<semaphore_mem>>
    %104 = tpu.memref_squeeze %103 : memref<1x!tpu.dma_semaphore, #tpu.memory_space<semaphore_mem>> -> memref<!tpu.dma_semaphore, #tpu.memory_space<semaphore_mem>>
    tpu.enqueue_dma source(%101 : memref<1x64xf32, #tpu.memory_space<any>>) target(%102 : memref<1x64xf32, #tpu.memory_space<vmem>>) target_semaphore(%104 : memref<!tpu.dma_semaphore, #tpu.memory_space<semaphore_mem>>)
    %c2_97 = arith.constant 2 : index
    %c5_98 = arith.constant 5 : index
    %105 = memref.load %arg1[%c2_97, %c5_98] : memref<4x8xi32, #tpu.memory_space<smem>>
    %c0_i32_99 = arith.constant 0 : i32
    %c0_i32_100 = arith.constant 0 : i32
    %106 = tpu.memref_slice %arg2[%105, %c0_i32_100] : memref<4000x64xf32, #tpu.memory_space<any>> -> memref<1x64xf32, #tpu.memory_space<any>>
    %c21_i32 = arith.constant 21 : i32
    %c0_i32_101 = arith.constant 0 : i32
    %107 = tpu.memref_slice %arg4[%c21_i32, %c0_i32_101] : memref<32x64xf32, #tpu.memory_space<vmem>> -> memref<1x64xf32, #tpu.memory_space<vmem>>
    %108 = tpu.memref_slice %arg5[%c0_i32_99] : memref<1x!tpu.dma_semaphore, #tpu.memory_space<semaphore_mem>> -> memref<1x!tpu.dma_semaphore, #tpu.memory_space<semaphore_mem>>
    %109 = tpu.memref_squeeze %108 : memref<1x!tpu.dma_semaphore, #tpu.memory_space<semaphore_mem>> -> memref<!tpu.dma_semaphore, #tpu.memory_space<semaphore_mem>>
    tpu.enqueue_dma source(%106 : memref<1x64xf32, #tpu.memory_space<any>>) target(%107 : memref<1x64xf32, #tpu.memory_space<vmem>>) target_semaphore(%109 : memref<!tpu.dma_semaphore, #tpu.memory_space<semaphore_mem>>)
    %c2_102 = arith.constant 2 : index
    %c6_103 = arith.constant 6 : index
    %110 = memref.load %arg1[%c2_102, %c6_103] : memref<4x8xi32, #tpu.memory_space<smem>>
    %c0_i32_104 = arith.constant 0 : i32
    %c0_i32_105 = arith.constant 0 : i32
    %111 = tpu.memref_slice %arg2[%110, %c0_i32_105] : memref<4000x64xf32, #tpu.memory_space<any>> -> memref<1x64xf32, #tpu.memory_space<any>>
    %c22_i32 = arith.constant 22 : i32
    %c0_i32_106 = arith.constant 0 : i32
    %112 = tpu.memref_slice %arg4[%c22_i32, %c0_i32_106] : memref<32x64xf32, #tpu.memory_space<vmem>> -> memref<1x64xf32, #tpu.memory_space<vmem>>
    %113 = tpu.memref_slice %arg5[%c0_i32_104] : memref<1x!tpu.dma_semaphore, #tpu.memory_space<semaphore_mem>> -> memref<1x!tpu.dma_semaphore, #tpu.memory_space<semaphore_mem>>
    %114 = tpu.memref_squeeze %113 : memref<1x!tpu.dma_semaphore, #tpu.memory_space<semaphore_mem>> -> memref<!tpu.dma_semaphore, #tpu.memory_space<semaphore_mem>>
    tpu.enqueue_dma source(%111 : memref<1x64xf32, #tpu.memory_space<any>>) target(%112 : memref<1x64xf32, #tpu.memory_space<vmem>>) target_semaphore(%114 : memref<!tpu.dma_semaphore, #tpu.memory_space<semaphore_mem>>)
    %c2_107 = arith.constant 2 : index
    %c7_108 = arith.constant 7 : index
    %115 = memref.load %arg1[%c2_107, %c7_108] : memref<4x8xi32, #tpu.memory_space<smem>>
    %c0_i32_109 = arith.constant 0 : i32
    %c0_i32_110 = arith.constant 0 : i32
    %116 = tpu.memref_slice %arg2[%115, %c0_i32_110] : memref<4000x64xf32, #tpu.memory_space<any>> -> memref<1x64xf32, #tpu.memory_space<any>>
    %c23_i32 = arith.constant 23 : i32
    %c0_i32_111 = arith.constant 0 : i32
    %117 = tpu.memref_slice %arg4[%c23_i32, %c0_i32_111] : memref<32x64xf32, #tpu.memory_space<vmem>> -> memref<1x64xf32, #tpu.memory_space<vmem>>
    %118 = tpu.memref_slice %arg5[%c0_i32_109] : memref<1x!tpu.dma_semaphore, #tpu.memory_space<semaphore_mem>> -> memref<1x!tpu.dma_semaphore, #tpu.memory_space<semaphore_mem>>
    %119 = tpu.memref_squeeze %118 : memref<1x!tpu.dma_semaphore, #tpu.memory_space<semaphore_mem>> -> memref<!tpu.dma_semaphore, #tpu.memory_space<semaphore_mem>>
    tpu.enqueue_dma source(%116 : memref<1x64xf32, #tpu.memory_space<any>>) target(%117 : memref<1x64xf32, #tpu.memory_space<vmem>>) target_semaphore(%119 : memref<!tpu.dma_semaphore, #tpu.memory_space<semaphore_mem>>)
    %c3_112 = arith.constant 3 : index
    %c0_113 = arith.constant 0 : index
    %120 = memref.load %arg1[%c3_112, %c0_113] : memref<4x8xi32, #tpu.memory_space<smem>>
    %c0_i32_114 = arith.constant 0 : i32
    %c0_i32_115 = arith.constant 0 : i32
    %121 = tpu.memref_slice %arg2[%120, %c0_i32_115] : memref<4000x64xf32, #tpu.memory_space<any>> -> memref<1x64xf32, #tpu.memory_space<any>>
    %c24_i32 = arith.constant 24 : i32
    %c0_i32_116 = arith.constant 0 : i32
    %122 = tpu.memref_slice %arg4[%c24_i32, %c0_i32_116] : memref<32x64xf32, #tpu.memory_space<vmem>> -> memref<1x64xf32, #tpu.memory_space<vmem>>
    %123 = tpu.memref_slice %arg5[%c0_i32_114] : memref<1x!tpu.dma_semaphore, #tpu.memory_space<semaphore_mem>> -> memref<1x!tpu.dma_semaphore, #tpu.memory_space<semaphore_mem>>
    %124 = tpu.memref_squeeze %123 : memref<1x!tpu.dma_semaphore, #tpu.memory_space<semaphore_mem>> -> memref<!tpu.dma_semaphore, #tpu.memory_space<semaphore_mem>>
    tpu.enqueue_dma source(%121 : memref<1x64xf32, #tpu.memory_space<any>>) target(%122 : memref<1x64xf32, #tpu.memory_space<vmem>>) target_semaphore(%124 : memref<!tpu.dma_semaphore, #tpu.memory_space<semaphore_mem>>)
    %c3_117 = arith.constant 3 : index
    %c1_118 = arith.constant 1 : index
    %125 = memref.load %arg1[%c3_117, %c1_118] : memref<4x8xi32, #tpu.memory_space<smem>>
    %c0_i32_119 = arith.constant 0 : i32
    %c0_i32_120 = arith.constant 0 : i32
    %126 = tpu.memref_slice %arg2[%125, %c0_i32_120] : memref<4000x64xf32, #tpu.memory_space<any>> -> memref<1x64xf32, #tpu.memory_space<any>>
    %c25_i32 = arith.constant 25 : i32
    %c0_i32_121 = arith.constant 0 : i32
    %127 = tpu.memref_slice %arg4[%c25_i32, %c0_i32_121] : memref<32x64xf32, #tpu.memory_space<vmem>> -> memref<1x64xf32, #tpu.memory_space<vmem>>
    %128 = tpu.memref_slice %arg5[%c0_i32_119] : memref<1x!tpu.dma_semaphore, #tpu.memory_space<semaphore_mem>> -> memref<1x!tpu.dma_semaphore, #tpu.memory_space<semaphore_mem>>
    %129 = tpu.memref_squeeze %128 : memref<1x!tpu.dma_semaphore, #tpu.memory_space<semaphore_mem>> -> memref<!tpu.dma_semaphore, #tpu.memory_space<semaphore_mem>>
    tpu.enqueue_dma source(%126 : memref<1x64xf32, #tpu.memory_space<any>>) target(%127 : memref<1x64xf32, #tpu.memory_space<vmem>>) target_semaphore(%129 : memref<!tpu.dma_semaphore, #tpu.memory_space<semaphore_mem>>)
    %c3_122 = arith.constant 3 : index
    %c2_123 = arith.constant 2 : index
    %130 = memref.load %arg1[%c3_122, %c2_123] : memref<4x8xi32, #tpu.memory_space<smem>>
    %c0_i32_124 = arith.constant 0 : i32
    %c0_i32_125 = arith.constant 0 : i32
    %131 = tpu.memref_slice %arg2[%130, %c0_i32_125] : memref<4000x64xf32, #tpu.memory_space<any>> -> memref<1x64xf32, #tpu.memory_space<any>>
    %c26_i32 = arith.constant 26 : i32
    %c0_i32_126 = arith.constant 0 : i32
    %132 = tpu.memref_slice %arg4[%c26_i32, %c0_i32_126] : memref<32x64xf32, #tpu.memory_space<vmem>> -> memref<1x64xf32, #tpu.memory_space<vmem>>
    %133 = tpu.memref_slice %arg5[%c0_i32_124] : memref<1x!tpu.dma_semaphore, #tpu.memory_space<semaphore_mem>> -> memref<1x!tpu.dma_semaphore, #tpu.memory_space<semaphore_mem>>
    %134 = tpu.memref_squeeze %133 : memref<1x!tpu.dma_semaphore, #tpu.memory_space<semaphore_mem>> -> memref<!tpu.dma_semaphore, #tpu.memory_space<semaphore_mem>>
    tpu.enqueue_dma source(%131 : memref<1x64xf32, #tpu.memory_space<any>>) target(%132 : memref<1x64xf32, #tpu.memory_space<vmem>>) target_semaphore(%134 : memref<!tpu.dma_semaphore, #tpu.memory_space<semaphore_mem>>)
    %c3_127 = arith.constant 3 : index
    %c3_128 = arith.constant 3 : index
    %135 = memref.load %arg1[%c3_127, %c3_128] : memref<4x8xi32, #tpu.memory_space<smem>>
    %c0_i32_129 = arith.constant 0 : i32
    %c0_i32_130 = arith.constant 0 : i32
    %136 = tpu.memref_slice %arg2[%135, %c0_i32_130] : memref<4000x64xf32, #tpu.memory_space<any>> -> memref<1x64xf32, #tpu.memory_space<any>>
    %c27_i32 = arith.constant 27 : i32
    %c0_i32_131 = arith.constant 0 : i32
    %137 = tpu.memref_slice %arg4[%c27_i32, %c0_i32_131] : memref<32x64xf32, #tpu.memory_space<vmem>> -> memref<1x64xf32, #tpu.memory_space<vmem>>
    %138 = tpu.memref_slice %arg5[%c0_i32_129] : memref<1x!tpu.dma_semaphore, #tpu.memory_space<semaphore_mem>> -> memref<1x!tpu.dma_semaphore, #tpu.memory_space<semaphore_mem>>
    %139 = tpu.memref_squeeze %138 : memref<1x!tpu.dma_semaphore, #tpu.memory_space<semaphore_mem>> -> memref<!tpu.dma_semaphore, #tpu.memory_space<semaphore_mem>>
    tpu.enqueue_dma source(%136 : memref<1x64xf32, #tpu.memory_space<any>>) target(%137 : memref<1x64xf32, #tpu.memory_space<vmem>>) target_semaphore(%139 : memref<!tpu.dma_semaphore, #tpu.memory_space<semaphore_mem>>)
    %c3_132 = arith.constant 3 : index
    %c4_133 = arith.constant 4 : index
    %140 = memref.load %arg1[%c3_132, %c4_133] : memref<4x8xi32, #tpu.memory_space<smem>>
    %c0_i32_134 = arith.constant 0 : i32
    %c0_i32_135 = arith.constant 0 : i32
    %141 = tpu.memref_slice %arg2[%140, %c0_i32_135] : memref<4000x64xf32, #tpu.memory_space<any>> -> memref<1x64xf32, #tpu.memory_space<any>>
    %c28_i32 = arith.constant 28 : i32
    %c0_i32_136 = arith.constant 0 : i32
    %142 = tpu.memref_slice %arg4[%c28_i32, %c0_i32_136] : memref<32x64xf32, #tpu.memory_space<vmem>> -> memref<1x64xf32, #tpu.memory_space<vmem>>
    %143 = tpu.memref_slice %arg5[%c0_i32_134] : memref<1x!tpu.dma_semaphore, #tpu.memory_space<semaphore_mem>> -> memref<1x!tpu.dma_semaphore, #tpu.memory_space<semaphore_mem>>
    %144 = tpu.memref_squeeze %143 : memref<1x!tpu.dma_semaphore, #tpu.memory_space<semaphore_mem>> -> memref<!tpu.dma_semaphore, #tpu.memory_space<semaphore_mem>>
    tpu.enqueue_dma source(%141 : memref<1x64xf32, #tpu.memory_space<any>>) target(%142 : memref<1x64xf32, #tpu.memory_space<vmem>>) target_semaphore(%144 : memref<!tpu.dma_semaphore, #tpu.memory_space<semaphore_mem>>)
    %c3_137 = arith.constant 3 : index
    %c5_138 = arith.constant 5 : index
    %145 = memref.load %arg1[%c3_137, %c5_138] : memref<4x8xi32, #tpu.memory_space<smem>>
    %c0_i32_139 = arith.constant 0 : i32
    %c0_i32_140 = arith.constant 0 : i32
    %146 = tpu.memref_slice %arg2[%145, %c0_i32_140] : memref<4000x64xf32, #tpu.memory_space<any>> -> memref<1x64xf32, #tpu.memory_space<any>>
    %c29_i32 = arith.constant 29 : i32
    %c0_i32_141 = arith.constant 0 : i32
    %147 = tpu.memref_slice %arg4[%c29_i32, %c0_i32_141] : memref<32x64xf32, #tpu.memory_space<vmem>> -> memref<1x64xf32, #tpu.memory_space<vmem>>
    %148 = tpu.memref_slice %arg5[%c0_i32_139] : memref<1x!tpu.dma_semaphore, #tpu.memory_space<semaphore_mem>> -> memref<1x!tpu.dma_semaphore, #tpu.memory_space<semaphore_mem>>
    %149 = tpu.memref_squeeze %148 : memref<1x!tpu.dma_semaphore, #tpu.memory_space<semaphore_mem>> -> memref<!tpu.dma_semaphore, #tpu.memory_space<semaphore_mem>>
    tpu.enqueue_dma source(%146 : memref<1x64xf32, #tpu.memory_space<any>>) target(%147 : memref<1x64xf32, #tpu.memory_space<vmem>>) target_semaphore(%149 : memref<!tpu.dma_semaphore, #tpu.memory_space<semaphore_mem>>)
    %c3_142 = arith.constant 3 : index
    %c6_143 = arith.constant 6 : index
    %150 = memref.load %arg1[%c3_142, %c6_143] : memref<4x8xi32, #tpu.memory_space<smem>>
    %c0_i32_144 = arith.constant 0 : i32
    %c0_i32_145 = arith.constant 0 : i32
    %151 = tpu.memref_slice %arg2[%150, %c0_i32_145] : memref<4000x64xf32, #tpu.memory_space<any>> -> memref<1x64xf32, #tpu.memory_space<any>>
    %c30_i32 = arith.constant 30 : i32
    %c0_i32_146 = arith.constant 0 : i32
    %152 = tpu.memref_slice %arg4[%c30_i32, %c0_i32_146] : memref<32x64xf32, #tpu.memory_space<vmem>> -> memref<1x64xf32, #tpu.memory_space<vmem>>
    %153 = tpu.memref_slice %arg5[%c0_i32_144] : memref<1x!tpu.dma_semaphore, #tpu.memory_space<semaphore_mem>> -> memref<1x!tpu.dma_semaphore, #tpu.memory_space<semaphore_mem>>
    %154 = tpu.memref_squeeze %153 : memref<1x!tpu.dma_semaphore, #tpu.memory_space<semaphore_mem>> -> memref<!tpu.dma_semaphore, #tpu.memory_space<semaphore_mem>>
    tpu.enqueue_dma source(%151 : memref<1x64xf32, #tpu.memory_space<any>>) target(%152 : memref<1x64xf32, #tpu.memory_space<vmem>>) target_semaphore(%154 : memref<!tpu.dma_semaphore, #tpu.memory_space<semaphore_mem>>)
    %c3_147 = arith.constant 3 : index
    %c7_148 = arith.constant 7 : index
    %155 = memref.load %arg1[%c3_147, %c7_148] : memref<4x8xi32, #tpu.memory_space<smem>>
    %c0_i32_149 = arith.constant 0 : i32
    %c0_i32_150 = arith.constant 0 : i32
    %156 = tpu.memref_slice %arg2[%155, %c0_i32_150] : memref<4000x64xf32, #tpu.memory_space<any>> -> memref<1x64xf32, #tpu.memory_space<any>>
    %c31_i32 = arith.constant 31 : i32
    %c0_i32_151 = arith.constant 0 : i32
    %157 = tpu.memref_slice %arg4[%c31_i32, %c0_i32_151] : memref<32x64xf32, #tpu.memory_space<vmem>> -> memref<1x64xf32, #tpu.memory_space<vmem>>
    %158 = tpu.memref_slice %arg5[%c0_i32_149] : memref<1x!tpu.dma_semaphore, #tpu.memory_space<semaphore_mem>> -> memref<1x!tpu.dma_semaphore, #tpu.memory_space<semaphore_mem>>
    %159 = tpu.memref_squeeze %158 : memref<1x!tpu.dma_semaphore, #tpu.memory_space<semaphore_mem>> -> memref<!tpu.dma_semaphore, #tpu.memory_space<semaphore_mem>>
    tpu.enqueue_dma source(%156 : memref<1x64xf32, #tpu.memory_space<any>>) target(%157 : memref<1x64xf32, #tpu.memory_space<vmem>>) target_semaphore(%159 : memref<!tpu.dma_semaphore, #tpu.memory_space<semaphore_mem>>)
    %c0_i32_152 = arith.constant 0 : i32
    %c0_i32_153 = arith.constant 0 : i32
    %160 = tpu.memref_slice %arg2[%0, %c0_i32_153] : memref<4000x64xf32, #tpu.memory_space<any>> -> memref<1x64xf32, #tpu.memory_space<any>>
    %c0_i32_154 = arith.constant 0 : i32
    %c0_i32_155 = arith.constant 0 : i32
    %161 = tpu.memref_slice %arg4[%c0_i32_154, %c0_i32_155] : memref<32x64xf32, #tpu.memory_space<vmem>> -> memref<1x64xf32, #tpu.memory_space<vmem>>
    %162 = tpu.memref_slice %arg5[%c0_i32_152] : memref<1x!tpu.dma_semaphore, #tpu.memory_space<semaphore_mem>> -> memref<1x!tpu.dma_semaphore, #tpu.memory_space<semaphore_mem>>
    %163 = tpu.memref_squeeze %162 : memref<1x!tpu.dma_semaphore, #tpu.memory_space<semaphore_mem>> -> memref<!tpu.dma_semaphore, #tpu.memory_space<semaphore_mem>>
    tpu.wait_dma2 semaphore(%163 : memref<!tpu.dma_semaphore, #tpu.memory_space<semaphore_mem>>) src(%160 : memref<1x64xf32, #tpu.memory_space<any>>) dst(%161 : memref<1x64xf32, #tpu.memory_space<vmem>>)
    %c0_i32_156 = arith.constant 0 : i32
    %c0_i32_157 = arith.constant 0 : i32
    %164 = tpu.memref_slice %arg2[%5, %c0_i32_157] : memref<4000x64xf32, #tpu.memory_space<any>> -> memref<1x64xf32, #tpu.memory_space<any>>
    %c1_i32_158 = arith.constant 1 : i32
    %c0_i32_159 = arith.constant 0 : i32
    %165 = tpu.memref_slice %arg4[%c1_i32_158, %c0_i32_159] : memref<32x64xf32, #tpu.memory_space<vmem>> -> memref<1x64xf32, #tpu.memory_space<vmem>>
    %166 = tpu.memref_slice %arg5[%c0_i32_156] : memref<1x!tpu.dma_semaphore, #tpu.memory_space<semaphore_mem>> -> memref<1x!tpu.dma_semaphore, #tpu.memory_space<semaphore_mem>>
    %167 = tpu.memref_squeeze %166 : memref<1x!tpu.dma_semaphore, #tpu.memory_space<semaphore_mem>> -> memref<!tpu.dma_semaphore, #tpu.memory_space<semaphore_mem>>
    tpu.wait_dma2 semaphore(%167 : memref<!tpu.dma_semaphore, #tpu.memory_space<semaphore_mem>>) src(%164 : memref<1x64xf32, #tpu.memory_space<any>>) dst(%165 : memref<1x64xf32, #tpu.memory_space<vmem>>)
    %c0_i32_160 = arith.constant 0 : i32
    %c0_i32_161 = arith.constant 0 : i32
    %168 = tpu.memref_slice %arg2[%10, %c0_i32_161] : memref<4000x64xf32, #tpu.memory_space<any>> -> memref<1x64xf32, #tpu.memory_space<any>>
    %c2_i32_162 = arith.constant 2 : i32
    %c0_i32_163 = arith.constant 0 : i32
    %169 = tpu.memref_slice %arg4[%c2_i32_162, %c0_i32_163] : memref<32x64xf32, #tpu.memory_space<vmem>> -> memref<1x64xf32, #tpu.memory_space<vmem>>
    %170 = tpu.memref_slice %arg5[%c0_i32_160] : memref<1x!tpu.dma_semaphore, #tpu.memory_space<semaphore_mem>> -> memref<1x!tpu.dma_semaphore, #tpu.memory_space<semaphore_mem>>
    %171 = tpu.memref_squeeze %170 : memref<1x!tpu.dma_semaphore, #tpu.memory_space<semaphore_mem>> -> memref<!tpu.dma_semaphore, #tpu.memory_space<semaphore_mem>>
    tpu.wait_dma2 semaphore(%171 : memref<!tpu.dma_semaphore, #tpu.memory_space<semaphore_mem>>) src(%168 : memref<1x64xf32, #tpu.memory_space<any>>) dst(%169 : memref<1x64xf32, #tpu.memory_space<vmem>>)
    %c0_i32_164 = arith.constant 0 : i32
    %c0_i32_165 = arith.constant 0 : i32
    %172 = tpu.memref_slice %arg2[%15, %c0_i32_165] : memref<4000x64xf32, #tpu.memory_space<any>> -> memref<1x64xf32, #tpu.memory_space<any>>
    %c3_i32_166 = arith.constant 3 : i32
    %c0_i32_167 = arith.constant 0 : i32
    %173 = tpu.memref_slice %arg4[%c3_i32_166, %c0_i32_167] : memref<32x64xf32, #tpu.memory_space<vmem>> -> memref<1x64xf32, #tpu.memory_space<vmem>>
    %174 = tpu.memref_slice %arg5[%c0_i32_164] : memref<1x!tpu.dma_semaphore, #tpu.memory_space<semaphore_mem>> -> memref<1x!tpu.dma_semaphore, #tpu.memory_space<semaphore_mem>>
    %175 = tpu.memref_squeeze %174 : memref<1x!tpu.dma_semaphore, #tpu.memory_space<semaphore_mem>> -> memref<!tpu.dma_semaphore, #tpu.memory_space<semaphore_mem>>
    tpu.wait_dma2 semaphore(%175 : memref<!tpu.dma_semaphore, #tpu.memory_space<semaphore_mem>>) src(%172 : memref<1x64xf32, #tpu.memory_space<any>>) dst(%173 : memref<1x64xf32, #tpu.memory_space<vmem>>)
    %c0_i32_168 = arith.constant 0 : i32
    %c0_i32_169 = arith.constant 0 : i32
    %176 = tpu.memref_slice %arg2[%20, %c0_i32_169] : memref<4000x64xf32, #tpu.memory_space<any>> -> memref<1x64xf32, #tpu.memory_space<any>>
    %c4_i32_170 = arith.constant 4 : i32
    %c0_i32_171 = arith.constant 0 : i32
    %177 = tpu.memref_slice %arg4[%c4_i32_170, %c0_i32_171] : memref<32x64xf32, #tpu.memory_space<vmem>> -> memref<1x64xf32, #tpu.memory_space<vmem>>
    %178 = tpu.memref_slice %arg5[%c0_i32_168] : memref<1x!tpu.dma_semaphore, #tpu.memory_space<semaphore_mem>> -> memref<1x!tpu.dma_semaphore, #tpu.memory_space<semaphore_mem>>
    %179 = tpu.memref_squeeze %178 : memref<1x!tpu.dma_semaphore, #tpu.memory_space<semaphore_mem>> -> memref<!tpu.dma_semaphore, #tpu.memory_space<semaphore_mem>>
    tpu.wait_dma2 semaphore(%179 : memref<!tpu.dma_semaphore, #tpu.memory_space<semaphore_mem>>) src(%176 : memref<1x64xf32, #tpu.memory_space<any>>) dst(%177 : memref<1x64xf32, #tpu.memory_space<vmem>>)
    %c0_i32_172 = arith.constant 0 : i32
    %c0_i32_173 = arith.constant 0 : i32
    %180 = tpu.memref_slice %arg2[%25, %c0_i32_173] : memref<4000x64xf32, #tpu.memory_space<any>> -> memref<1x64xf32, #tpu.memory_space<any>>
    %c5_i32_174 = arith.constant 5 : i32
    %c0_i32_175 = arith.constant 0 : i32
    %181 = tpu.memref_slice %arg4[%c5_i32_174, %c0_i32_175] : memref<32x64xf32, #tpu.memory_space<vmem>> -> memref<1x64xf32, #tpu.memory_space<vmem>>
    %182 = tpu.memref_slice %arg5[%c0_i32_172] : memref<1x!tpu.dma_semaphore, #tpu.memory_space<semaphore_mem>> -> memref<1x!tpu.dma_semaphore, #tpu.memory_space<semaphore_mem>>
    %183 = tpu.memref_squeeze %182 : memref<1x!tpu.dma_semaphore, #tpu.memory_space<semaphore_mem>> -> memref<!tpu.dma_semaphore, #tpu.memory_space<semaphore_mem>>
    tpu.wait_dma2 semaphore(%183 : memref<!tpu.dma_semaphore, #tpu.memory_space<semaphore_mem>>) src(%180 : memref<1x64xf32, #tpu.memory_space<any>>) dst(%181 : memref<1x64xf32, #tpu.memory_space<vmem>>)
    %c0_i32_176 = arith.constant 0 : i32
    %c0_i32_177 = arith.constant 0 : i32
    %184 = tpu.memref_slice %arg2[%30, %c0_i32_177] : memref<4000x64xf32, #tpu.memory_space<any>> -> memref<1x64xf32, #tpu.memory_space<any>>
    %c6_i32_178 = arith.constant 6 : i32
    %c0_i32_179 = arith.constant 0 : i32
    %185 = tpu.memref_slice %arg4[%c6_i32_178, %c0_i32_179] : memref<32x64xf32, #tpu.memory_space<vmem>> -> memref<1x64xf32, #tpu.memory_space<vmem>>
    %186 = tpu.memref_slice %arg5[%c0_i32_176] : memref<1x!tpu.dma_semaphore, #tpu.memory_space<semaphore_mem>> -> memref<1x!tpu.dma_semaphore, #tpu.memory_space<semaphore_mem>>
    %187 = tpu.memref_squeeze %186 : memref<1x!tpu.dma_semaphore, #tpu.memory_space<semaphore_mem>> -> memref<!tpu.dma_semaphore, #tpu.memory_space<semaphore_mem>>
    tpu.wait_dma2 semaphore(%187 : memref<!tpu.dma_semaphore, #tpu.memory_space<semaphore_mem>>) src(%184 : memref<1x64xf32, #tpu.memory_space<any>>) dst(%185 : memref<1x64xf32, #tpu.memory_space<vmem>>)
    %c0_i32_180 = arith.constant 0 : i32
    %c0_i32_181 = arith.constant 0 : i32
    %188 = tpu.memref_slice %arg2[%35, %c0_i32_181] : memref<4000x64xf32, #tpu.memory_space<any>> -> memref<1x64xf32, #tpu.memory_space<any>>
    %c7_i32_182 = arith.constant 7 : i32
    %c0_i32_183 = arith.constant 0 : i32
    %189 = tpu.memref_slice %arg4[%c7_i32_182, %c0_i32_183] : memref<32x64xf32, #tpu.memory_space<vmem>> -> memref<1x64xf32, #tpu.memory_space<vmem>>
    %190 = tpu.memref_slice %arg5[%c0_i32_180] : memref<1x!tpu.dma_semaphore, #tpu.memory_space<semaphore_mem>> -> memref<1x!tpu.dma_semaphore, #tpu.memory_space<semaphore_mem>>
    %191 = tpu.memref_squeeze %190 : memref<1x!tpu.dma_semaphore, #tpu.memory_space<semaphore_mem>> -> memref<!tpu.dma_semaphore, #tpu.memory_space<semaphore_mem>>
    tpu.wait_dma2 semaphore(%191 : memref<!tpu.dma_semaphore, #tpu.memory_space<semaphore_mem>>) src(%188 : memref<1x64xf32, #tpu.memory_space<any>>) dst(%189 : memref<1x64xf32, #tpu.memory_space<vmem>>)
    %c0_i32_184 = arith.constant 0 : i32
    %c0_i32_185 = arith.constant 0 : i32
    %192 = tpu.memref_slice %arg2[%40, %c0_i32_185] : memref<4000x64xf32, #tpu.memory_space<any>> -> memref<1x64xf32, #tpu.memory_space<any>>
    %c8_i32_186 = arith.constant 8 : i32
    %c0_i32_187 = arith.constant 0 : i32
    %193 = tpu.memref_slice %arg4[%c8_i32_186, %c0_i32_187] : memref<32x64xf32, #tpu.memory_space<vmem>> -> memref<1x64xf32, #tpu.memory_space<vmem>>
    %194 = tpu.memref_slice %arg5[%c0_i32_184] : memref<1x!tpu.dma_semaphore, #tpu.memory_space<semaphore_mem>> -> memref<1x!tpu.dma_semaphore, #tpu.memory_space<semaphore_mem>>
    %195 = tpu.memref_squeeze %194 : memref<1x!tpu.dma_semaphore, #tpu.memory_space<semaphore_mem>> -> memref<!tpu.dma_semaphore, #tpu.memory_space<semaphore_mem>>
    tpu.wait_dma2 semaphore(%195 : memref<!tpu.dma_semaphore, #tpu.memory_space<semaphore_mem>>) src(%192 : memref<1x64xf32, #tpu.memory_space<any>>) dst(%193 : memref<1x64xf32, #tpu.memory_space<vmem>>)
    %c0_i32_188 = arith.constant 0 : i32
    %c0_i32_189 = arith.constant 0 : i32
    %196 = tpu.memref_slice %arg2[%45, %c0_i32_189] : memref<4000x64xf32, #tpu.memory_space<any>> -> memref<1x64xf32, #tpu.memory_space<any>>
    %c9_i32_190 = arith.constant 9 : i32
    %c0_i32_191 = arith.constant 0 : i32
    %197 = tpu.memref_slice %arg4[%c9_i32_190, %c0_i32_191] : memref<32x64xf32, #tpu.memory_space<vmem>> -> memref<1x64xf32, #tpu.memory_space<vmem>>
    %198 = tpu.memref_slice %arg5[%c0_i32_188] : memref<1x!tpu.dma_semaphore, #tpu.memory_space<semaphore_mem>> -> memref<1x!tpu.dma_semaphore, #tpu.memory_space<semaphore_mem>>
    %199 = tpu.memref_squeeze %198 : memref<1x!tpu.dma_semaphore, #tpu.memory_space<semaphore_mem>> -> memref<!tpu.dma_semaphore, #tpu.memory_space<semaphore_mem>>
    tpu.wait_dma2 semaphore(%199 : memref<!tpu.dma_semaphore, #tpu.memory_space<semaphore_mem>>) src(%196 : memref<1x64xf32, #tpu.memory_space<any>>) dst(%197 : memref<1x64xf32, #tpu.memory_space<vmem>>)
    %c0_i32_192 = arith.constant 0 : i32
    %c0_i32_193 = arith.constant 0 : i32
    %200 = tpu.memref_slice %arg2[%50, %c0_i32_193] : memref<4000x64xf32, #tpu.memory_space<any>> -> memref<1x64xf32, #tpu.memory_space<any>>
    %c10_i32_194 = arith.constant 10 : i32
    %c0_i32_195 = arith.constant 0 : i32
    %201 = tpu.memref_slice %arg4[%c10_i32_194, %c0_i32_195] : memref<32x64xf32, #tpu.memory_space<vmem>> -> memref<1x64xf32, #tpu.memory_space<vmem>>
    %202 = tpu.memref_slice %arg5[%c0_i32_192] : memref<1x!tpu.dma_semaphore, #tpu.memory_space<semaphore_mem>> -> memref<1x!tpu.dma_semaphore, #tpu.memory_space<semaphore_mem>>
    %203 = tpu.memref_squeeze %202 : memref<1x!tpu.dma_semaphore, #tpu.memory_space<semaphore_mem>> -> memref<!tpu.dma_semaphore, #tpu.memory_space<semaphore_mem>>
    tpu.wait_dma2 semaphore(%203 : memref<!tpu.dma_semaphore, #tpu.memory_space<semaphore_mem>>) src(%200 : memref<1x64xf32, #tpu.memory_space<any>>) dst(%201 : memref<1x64xf32, #tpu.memory_space<vmem>>)
    %c0_i32_196 = arith.constant 0 : i32
    %c0_i32_197 = arith.constant 0 : i32
    %204 = tpu.memref_slice %arg2[%55, %c0_i32_197] : memref<4000x64xf32, #tpu.memory_space<any>> -> memref<1x64xf32, #tpu.memory_space<any>>
    %c11_i32_198 = arith.constant 11 : i32
    %c0_i32_199 = arith.constant 0 : i32
    %205 = tpu.memref_slice %arg4[%c11_i32_198, %c0_i32_199] : memref<32x64xf32, #tpu.memory_space<vmem>> -> memref<1x64xf32, #tpu.memory_space<vmem>>
    %206 = tpu.memref_slice %arg5[%c0_i32_196] : memref<1x!tpu.dma_semaphore, #tpu.memory_space<semaphore_mem>> -> memref<1x!tpu.dma_semaphore, #tpu.memory_space<semaphore_mem>>
    %207 = tpu.memref_squeeze %206 : memref<1x!tpu.dma_semaphore, #tpu.memory_space<semaphore_mem>> -> memref<!tpu.dma_semaphore, #tpu.memory_space<semaphore_mem>>
    tpu.wait_dma2 semaphore(%207 : memref<!tpu.dma_semaphore, #tpu.memory_space<semaphore_mem>>) src(%204 : memref<1x64xf32, #tpu.memory_space<any>>) dst(%205 : memref<1x64xf32, #tpu.memory_space<vmem>>)
    %c0_i32_200 = arith.constant 0 : i32
    %c0_i32_201 = arith.constant 0 : i32
    %208 = tpu.memref_slice %arg2[%60, %c0_i32_201] : memref<4000x64xf32, #tpu.memory_space<any>> -> memref<1x64xf32, #tpu.memory_space<any>>
    %c12_i32_202 = arith.constant 12 : i32
    %c0_i32_203 = arith.constant 0 : i32
    %209 = tpu.memref_slice %arg4[%c12_i32_202, %c0_i32_203] : memref<32x64xf32, #tpu.memory_space<vmem>> -> memref<1x64xf32, #tpu.memory_space<vmem>>
    %210 = tpu.memref_slice %arg5[%c0_i32_200] : memref<1x!tpu.dma_semaphore, #tpu.memory_space<semaphore_mem>> -> memref<1x!tpu.dma_semaphore, #tpu.memory_space<semaphore_mem>>
    %211 = tpu.memref_squeeze %210 : memref<1x!tpu.dma_semaphore, #tpu.memory_space<semaphore_mem>> -> memref<!tpu.dma_semaphore, #tpu.memory_space<semaphore_mem>>
    tpu.wait_dma2 semaphore(%211 : memref<!tpu.dma_semaphore, #tpu.memory_space<semaphore_mem>>) src(%208 : memref<1x64xf32, #tpu.memory_space<any>>) dst(%209 : memref<1x64xf32, #tpu.memory_space<vmem>>)
    %c0_i32_204 = arith.constant 0 : i32
    %c0_i32_205 = arith.constant 0 : i32
    %212 = tpu.memref_slice %arg2[%65, %c0_i32_205] : memref<4000x64xf32, #tpu.memory_space<any>> -> memref<1x64xf32, #tpu.memory_space<any>>
    %c13_i32_206 = arith.constant 13 : i32
    %c0_i32_207 = arith.constant 0 : i32
    %213 = tpu.memref_slice %arg4[%c13_i32_206, %c0_i32_207] : memref<32x64xf32, #tpu.memory_space<vmem>> -> memref<1x64xf32, #tpu.memory_space<vmem>>
    %214 = tpu.memref_slice %arg5[%c0_i32_204] : memref<1x!tpu.dma_semaphore, #tpu.memory_space<semaphore_mem>> -> memref<1x!tpu.dma_semaphore, #tpu.memory_space<semaphore_mem>>
    %215 = tpu.memref_squeeze %214 : memref<1x!tpu.dma_semaphore, #tpu.memory_space<semaphore_mem>> -> memref<!tpu.dma_semaphore, #tpu.memory_space<semaphore_mem>>
    tpu.wait_dma2 semaphore(%215 : memref<!tpu.dma_semaphore, #tpu.memory_space<semaphore_mem>>) src(%212 : memref<1x64xf32, #tpu.memory_space<any>>) dst(%213 : memref<1x64xf32, #tpu.memory_space<vmem>>)
    %c0_i32_208 = arith.constant 0 : i32
    %c0_i32_209 = arith.constant 0 : i32
    %216 = tpu.memref_slice %arg2[%70, %c0_i32_209] : memref<4000x64xf32, #tpu.memory_space<any>> -> memref<1x64xf32, #tpu.memory_space<any>>
    %c14_i32_210 = arith.constant 14 : i32
    %c0_i32_211 = arith.constant 0 : i32
    %217 = tpu.memref_slice %arg4[%c14_i32_210, %c0_i32_211] : memref<32x64xf32, #tpu.memory_space<vmem>> -> memref<1x64xf32, #tpu.memory_space<vmem>>
    %218 = tpu.memref_slice %arg5[%c0_i32_208] : memref<1x!tpu.dma_semaphore, #tpu.memory_space<semaphore_mem>> -> memref<1x!tpu.dma_semaphore, #tpu.memory_space<semaphore_mem>>
    %219 = tpu.memref_squeeze %218 : memref<1x!tpu.dma_semaphore, #tpu.memory_space<semaphore_mem>> -> memref<!tpu.dma_semaphore, #tpu.memory_space<semaphore_mem>>
    tpu.wait_dma2 semaphore(%219 : memref<!tpu.dma_semaphore, #tpu.memory_space<semaphore_mem>>) src(%216 : memref<1x64xf32, #tpu.memory_space<any>>) dst(%217 : memref<1x64xf32, #tpu.memory_space<vmem>>)
    %c0_i32_212 = arith.constant 0 : i32
    %c0_i32_213 = arith.constant 0 : i32
    %220 = tpu.memref_slice %arg2[%75, %c0_i32_213] : memref<4000x64xf32, #tpu.memory_space<any>> -> memref<1x64xf32, #tpu.memory_space<any>>
    %c15_i32_214 = arith.constant 15 : i32
    %c0_i32_215 = arith.constant 0 : i32
    %221 = tpu.memref_slice %arg4[%c15_i32_214, %c0_i32_215] : memref<32x64xf32, #tpu.memory_space<vmem>> -> memref<1x64xf32, #tpu.memory_space<vmem>>
    %222 = tpu.memref_slice %arg5[%c0_i32_212] : memref<1x!tpu.dma_semaphore, #tpu.memory_space<semaphore_mem>> -> memref<1x!tpu.dma_semaphore, #tpu.memory_space<semaphore_mem>>
    %223 = tpu.memref_squeeze %222 : memref<1x!tpu.dma_semaphore, #tpu.memory_space<semaphore_mem>> -> memref<!tpu.dma_semaphore, #tpu.memory_space<semaphore_mem>>
    tpu.wait_dma2 semaphore(%223 : memref<!tpu.dma_semaphore, #tpu.memory_space<semaphore_mem>>) src(%220 : memref<1x64xf32, #tpu.memory_space<any>>) dst(%221 : memref<1x64xf32, #tpu.memory_space<vmem>>)
    %c0_i32_216 = arith.constant 0 : i32
    %c0_i32_217 = arith.constant 0 : i32
    %224 = tpu.memref_slice %arg2[%80, %c0_i32_217] : memref<4000x64xf32, #tpu.memory_space<any>> -> memref<1x64xf32, #tpu.memory_space<any>>
    %c16_i32_218 = arith.constant 16 : i32
    %c0_i32_219 = arith.constant 0 : i32
    %225 = tpu.memref_slice %arg4[%c16_i32_218, %c0_i32_219] : memref<32x64xf32, #tpu.memory_space<vmem>> -> memref<1x64xf32, #tpu.memory_space<vmem>>
    %226 = tpu.memref_slice %arg5[%c0_i32_216] : memref<1x!tpu.dma_semaphore, #tpu.memory_space<semaphore_mem>> -> memref<1x!tpu.dma_semaphore, #tpu.memory_space<semaphore_mem>>
    %227 = tpu.memref_squeeze %226 : memref<1x!tpu.dma_semaphore, #tpu.memory_space<semaphore_mem>> -> memref<!tpu.dma_semaphore, #tpu.memory_space<semaphore_mem>>
    tpu.wait_dma2 semaphore(%227 : memref<!tpu.dma_semaphore, #tpu.memory_space<semaphore_mem>>) src(%224 : memref<1x64xf32, #tpu.memory_space<any>>) dst(%225 : memref<1x64xf32, #tpu.memory_space<vmem>>)
    %c0_i32_220 = arith.constant 0 : i32
    %c0_i32_221 = arith.constant 0 : i32
    %228 = tpu.memref_slice %arg2[%85, %c0_i32_221] : memref<4000x64xf32, #tpu.memory_space<any>> -> memref<1x64xf32, #tpu.memory_space<any>>
    %c17_i32_222 = arith.constant 17 : i32
    %c0_i32_223 = arith.constant 0 : i32
    %229 = tpu.memref_slice %arg4[%c17_i32_222, %c0_i32_223] : memref<32x64xf32, #tpu.memory_space<vmem>> -> memref<1x64xf32, #tpu.memory_space<vmem>>
    %230 = tpu.memref_slice %arg5[%c0_i32_220] : memref<1x!tpu.dma_semaphore, #tpu.memory_space<semaphore_mem>> -> memref<1x!tpu.dma_semaphore, #tpu.memory_space<semaphore_mem>>
    %231 = tpu.memref_squeeze %230 : memref<1x!tpu.dma_semaphore, #tpu.memory_space<semaphore_mem>> -> memref<!tpu.dma_semaphore, #tpu.memory_space<semaphore_mem>>
    tpu.wait_dma2 semaphore(%231 : memref<!tpu.dma_semaphore, #tpu.memory_space<semaphore_mem>>) src(%228 : memref<1x64xf32, #tpu.memory_space<any>>) dst(%229 : memref<1x64xf32, #tpu.memory_space<vmem>>)
    %c0_i32_224 = arith.constant 0 : i32
    %c0_i32_225 = arith.constant 0 : i32
    %232 = tpu.memref_slice %arg2[%90, %c0_i32_225] : memref<4000x64xf32, #tpu.memory_space<any>> -> memref<1x64xf32, #tpu.memory_space<any>>
    %c18_i32_226 = arith.constant 18 : i32
    %c0_i32_227 = arith.constant 0 : i32
    %233 = tpu.memref_slice %arg4[%c18_i32_226, %c0_i32_227] : memref<32x64xf32, #tpu.memory_space<vmem>> -> memref<1x64xf32, #tpu.memory_space<vmem>>
    %234 = tpu.memref_slice %arg5[%c0_i32_224] : memref<1x!tpu.dma_semaphore, #tpu.memory_space<semaphore_mem>> -> memref<1x!tpu.dma_semaphore, #tpu.memory_space<semaphore_mem>>
    %235 = tpu.memref_squeeze %234 : memref<1x!tpu.dma_semaphore, #tpu.memory_space<semaphore_mem>> -> memref<!tpu.dma_semaphore, #tpu.memory_space<semaphore_mem>>
    tpu.wait_dma2 semaphore(%235 : memref<!tpu.dma_semaphore, #tpu.memory_space<semaphore_mem>>) src(%232 : memref<1x64xf32, #tpu.memory_space<any>>) dst(%233 : memref<1x64xf32, #tpu.memory_space<vmem>>)
    %c0_i32_228 = arith.constant 0 : i32
    %c0_i32_229 = arith.constant 0 : i32
    %236 = tpu.memref_slice %arg2[%95, %c0_i32_229] : memref<4000x64xf32, #tpu.memory_space<any>> -> memref<1x64xf32, #tpu.memory_space<any>>
    %c19_i32_230 = arith.constant 19 : i32
    %c0_i32_231 = arith.constant 0 : i32
    %237 = tpu.memref_slice %arg4[%c19_i32_230, %c0_i32_231] : memref<32x64xf32, #tpu.memory_space<vmem>> -> memref<1x64xf32, #tpu.memory_space<vmem>>
    %238 = tpu.memref_slice %arg5[%c0_i32_228] : memref<1x!tpu.dma_semaphore, #tpu.memory_space<semaphore_mem>> -> memref<1x!tpu.dma_semaphore, #tpu.memory_space<semaphore_mem>>
    %239 = tpu.memref_squeeze %238 : memref<1x!tpu.dma_semaphore, #tpu.memory_space<semaphore_mem>> -> memref<!tpu.dma_semaphore, #tpu.memory_space<semaphore_mem>>
    tpu.wait_dma2 semaphore(%239 : memref<!tpu.dma_semaphore, #tpu.memory_space<semaphore_mem>>) src(%236 : memref<1x64xf32, #tpu.memory_space<any>>) dst(%237 : memref<1x64xf32, #tpu.memory_space<vmem>>)
    %c0_i32_232 = arith.constant 0 : i32
    %c0_i32_233 = arith.constant 0 : i32
    %240 = tpu.memref_slice %arg2[%100, %c0_i32_233] : memref<4000x64xf32, #tpu.memory_space<any>> -> memref<1x64xf32, #tpu.memory_space<any>>
    %c20_i32_234 = arith.constant 20 : i32
    %c0_i32_235 = arith.constant 0 : i32
    %241 = tpu.memref_slice %arg4[%c20_i32_234, %c0_i32_235] : memref<32x64xf32, #tpu.memory_space<vmem>> -> memref<1x64xf32, #tpu.memory_space<vmem>>
    %242 = tpu.memref_slice %arg5[%c0_i32_232] : memref<1x!tpu.dma_semaphore, #tpu.memory_space<semaphore_mem>> -> memref<1x!tpu.dma_semaphore, #tpu.memory_space<semaphore_mem>>
    %243 = tpu.memref_squeeze %242 : memref<1x!tpu.dma_semaphore, #tpu.memory_space<semaphore_mem>> -> memref<!tpu.dma_semaphore, #tpu.memory_space<semaphore_mem>>
    tpu.wait_dma2 semaphore(%243 : memref<!tpu.dma_semaphore, #tpu.memory_space<semaphore_mem>>) src(%240 : memref<1x64xf32, #tpu.memory_space<any>>) dst(%241 : memref<1x64xf32, #tpu.memory_space<vmem>>)
    %c0_i32_236 = arith.constant 0 : i32
    %c0_i32_237 = arith.constant 0 : i32
    %244 = tpu.memref_slice %arg2[%105, %c0_i32_237] : memref<4000x64xf32, #tpu.memory_space<any>> -> memref<1x64xf32, #tpu.memory_space<any>>
    %c21_i32_238 = arith.constant 21 : i32
    %c0_i32_239 = arith.constant 0 : i32
    %245 = tpu.memref_slice %arg4[%c21_i32_238, %c0_i32_239] : memref<32x64xf32, #tpu.memory_space<vmem>> -> memref<1x64xf32, #tpu.memory_space<vmem>>
    %246 = tpu.memref_slice %arg5[%c0_i32_236] : memref<1x!tpu.dma_semaphore, #tpu.memory_space<semaphore_mem>> -> memref<1x!tpu.dma_semaphore, #tpu.memory_space<semaphore_mem>>
    %247 = tpu.memref_squeeze %246 : memref<1x!tpu.dma_semaphore, #tpu.memory_space<semaphore_mem>> -> memref<!tpu.dma_semaphore, #tpu.memory_space<semaphore_mem>>
    tpu.wait_dma2 semaphore(%247 : memref<!tpu.dma_semaphore, #tpu.memory_space<semaphore_mem>>) src(%244 : memref<1x64xf32, #tpu.memory_space<any>>) dst(%245 : memref<1x64xf32, #tpu.memory_space<vmem>>)
    %c0_i32_240 = arith.constant 0 : i32
    %c0_i32_241 = arith.constant 0 : i32
    %248 = tpu.memref_slice %arg2[%110, %c0_i32_241] : memref<4000x64xf32, #tpu.memory_space<any>> -> memref<1x64xf32, #tpu.memory_space<any>>
    %c22_i32_242 = arith.constant 22 : i32
    %c0_i32_243 = arith.constant 0 : i32
    %249 = tpu.memref_slice %arg4[%c22_i32_242, %c0_i32_243] : memref<32x64xf32, #tpu.memory_space<vmem>> -> memref<1x64xf32, #tpu.memory_space<vmem>>
    %250 = tpu.memref_slice %arg5[%c0_i32_240] : memref<1x!tpu.dma_semaphore, #tpu.memory_space<semaphore_mem>> -> memref<1x!tpu.dma_semaphore, #tpu.memory_space<semaphore_mem>>
    %251 = tpu.memref_squeeze %250 : memref<1x!tpu.dma_semaphore, #tpu.memory_space<semaphore_mem>> -> memref<!tpu.dma_semaphore, #tpu.memory_space<semaphore_mem>>
    tpu.wait_dma2 semaphore(%251 : memref<!tpu.dma_semaphore, #tpu.memory_space<semaphore_mem>>) src(%248 : memref<1x64xf32, #tpu.memory_space<any>>) dst(%249 : memref<1x64xf32, #tpu.memory_space<vmem>>)
    %c0_i32_244 = arith.constant 0 : i32
    %c0_i32_245 = arith.constant 0 : i32
    %252 = tpu.memref_slice %arg2[%115, %c0_i32_245] : memref<4000x64xf32, #tpu.memory_space<any>> -> memref<1x64xf32, #tpu.memory_space<any>>
    %c23_i32_246 = arith.constant 23 : i32
    %c0_i32_247 = arith.constant 0 : i32
    %253 = tpu.memref_slice %arg4[%c23_i32_246, %c0_i32_247] : memref<32x64xf32, #tpu.memory_space<vmem>> -> memref<1x64xf32, #tpu.memory_space<vmem>>
    %254 = tpu.memref_slice %arg5[%c0_i32_244] : memref<1x!tpu.dma_semaphore, #tpu.memory_space<semaphore_mem>> -> memref<1x!tpu.dma_semaphore, #tpu.memory_space<semaphore_mem>>
    %255 = tpu.memref_squeeze %254 : memref<1x!tpu.dma_semaphore, #tpu.memory_space<semaphore_mem>> -> memref<!tpu.dma_semaphore, #tpu.memory_space<semaphore_mem>>
    tpu.wait_dma2 semaphore(%255 : memref<!tpu.dma_semaphore, #tpu.memory_space<semaphore_mem>>) src(%252 : memref<1x64xf32, #tpu.memory_space<any>>) dst(%253 : memref<1x64xf32, #tpu.memory_space<vmem>>)
    %c0_i32_248 = arith.constant 0 : i32
    %c0_i32_249 = arith.constant 0 : i32
    %256 = tpu.memref_slice %arg2[%120, %c0_i32_249] : memref<4000x64xf32, #tpu.memory_space<any>> -> memref<1x64xf32, #tpu.memory_space<any>>
    %c24_i32_250 = arith.constant 24 : i32
    %c0_i32_251 = arith.constant 0 : i32
    %257 = tpu.memref_slice %arg4[%c24_i32_250, %c0_i32_251] : memref<32x64xf32, #tpu.memory_space<vmem>> -> memref<1x64xf32, #tpu.memory_space<vmem>>
    %258 = tpu.memref_slice %arg5[%c0_i32_248] : memref<1x!tpu.dma_semaphore, #tpu.memory_space<semaphore_mem>> -> memref<1x!tpu.dma_semaphore, #tpu.memory_space<semaphore_mem>>
    %259 = tpu.memref_squeeze %258 : memref<1x!tpu.dma_semaphore, #tpu.memory_space<semaphore_mem>> -> memref<!tpu.dma_semaphore, #tpu.memory_space<semaphore_mem>>
    tpu.wait_dma2 semaphore(%259 : memref<!tpu.dma_semaphore, #tpu.memory_space<semaphore_mem>>) src(%256 : memref<1x64xf32, #tpu.memory_space<any>>) dst(%257 : memref<1x64xf32, #tpu.memory_space<vmem>>)
    %c0_i32_252 = arith.constant 0 : i32
    %c0_i32_253 = arith.constant 0 : i32
    %260 = tpu.memref_slice %arg2[%125, %c0_i32_253] : memref<4000x64xf32, #tpu.memory_space<any>> -> memref<1x64xf32, #tpu.memory_space<any>>
    %c25_i32_254 = arith.constant 25 : i32
    %c0_i32_255 = arith.constant 0 : i32
    %261 = tpu.memref_slice %arg4[%c25_i32_254, %c0_i32_255] : memref<32x64xf32, #tpu.memory_space<vmem>> -> memref<1x64xf32, #tpu.memory_space<vmem>>
    %262 = tpu.memref_slice %arg5[%c0_i32_252] : memref<1x!tpu.dma_semaphore, #tpu.memory_space<semaphore_mem>> -> memref<1x!tpu.dma_semaphore, #tpu.memory_space<semaphore_mem>>
    %263 = tpu.memref_squeeze %262 : memref<1x!tpu.dma_semaphore, #tpu.memory_space<semaphore_mem>> -> memref<!tpu.dma_semaphore, #tpu.memory_space<semaphore_mem>>
    tpu.wait_dma2 semaphore(%263 : memref<!tpu.dma_semaphore, #tpu.memory_space<semaphore_mem>>) src(%260 : memref<1x64xf32, #tpu.memory_space<any>>) dst(%261 : memref<1x64xf32, #tpu.memory_space<vmem>>)
    %c0_i32_256 = arith.constant 0 : i32
    %c0_i32_257 = arith.constant 0 : i32
    %264 = tpu.memref_slice %arg2[%130, %c0_i32_257] : memref<4000x64xf32, #tpu.memory_space<any>> -> memref<1x64xf32, #tpu.memory_space<any>>
    %c26_i32_258 = arith.constant 26 : i32
    %c0_i32_259 = arith.constant 0 : i32
    %265 = tpu.memref_slice %arg4[%c26_i32_258, %c0_i32_259] : memref<32x64xf32, #tpu.memory_space<vmem>> -> memref<1x64xf32, #tpu.memory_space<vmem>>
    %266 = tpu.memref_slice %arg5[%c0_i32_256] : memref<1x!tpu.dma_semaphore, #tpu.memory_space<semaphore_mem>> -> memref<1x!tpu.dma_semaphore, #tpu.memory_space<semaphore_mem>>
    %267 = tpu.memref_squeeze %266 : memref<1x!tpu.dma_semaphore, #tpu.memory_space<semaphore_mem>> -> memref<!tpu.dma_semaphore, #tpu.memory_space<semaphore_mem>>
    tpu.wait_dma2 semaphore(%267 : memref<!tpu.dma_semaphore, #tpu.memory_space<semaphore_mem>>) src(%264 : memref<1x64xf32, #tpu.memory_space<any>>) dst(%265 : memref<1x64xf32, #tpu.memory_space<vmem>>)
    %c0_i32_260 = arith.constant 0 : i32
    %c0_i32_261 = arith.constant 0 : i32
    %268 = tpu.memref_slice %arg2[%135, %c0_i32_261] : memref<4000x64xf32, #tpu.memory_space<any>> -> memref<1x64xf32, #tpu.memory_space<any>>
    %c27_i32_262 = arith.constant 27 : i32
    %c0_i32_263 = arith.constant 0 : i32
    %269 = tpu.memref_slice %arg4[%c27_i32_262, %c0_i32_263] : memref<32x64xf32, #tpu.memory_space<vmem>> -> memref<1x64xf32, #tpu.memory_space<vmem>>
    %270 = tpu.memref_slice %arg5[%c0_i32_260] : memref<1x!tpu.dma_semaphore, #tpu.memory_space<semaphore_mem>> -> memref<1x!tpu.dma_semaphore, #tpu.memory_space<semaphore_mem>>
    %271 = tpu.memref_squeeze %270 : memref<1x!tpu.dma_semaphore, #tpu.memory_space<semaphore_mem>> -> memref<!tpu.dma_semaphore, #tpu.memory_space<semaphore_mem>>
    tpu.wait_dma2 semaphore(%271 : memref<!tpu.dma_semaphore, #tpu.memory_space<semaphore_mem>>) src(%268 : memref<1x64xf32, #tpu.memory_space<any>>) dst(%269 : memref<1x64xf32, #tpu.memory_space<vmem>>)
    %c0_i32_264 = arith.constant 0 : i32
    %c0_i32_265 = arith.constant 0 : i32
    %272 = tpu.memref_slice %arg2[%140, %c0_i32_265] : memref<4000x64xf32, #tpu.memory_space<any>> -> memref<1x64xf32, #tpu.memory_space<any>>
    %c28_i32_266 = arith.constant 28 : i32
    %c0_i32_267 = arith.constant 0 : i32
    %273 = tpu.memref_slice %arg4[%c28_i32_266, %c0_i32_267] : memref<32x64xf32, #tpu.memory_space<vmem>> -> memref<1x64xf32, #tpu.memory_space<vmem>>
    %274 = tpu.memref_slice %arg5[%c0_i32_264] : memref<1x!tpu.dma_semaphore, #tpu.memory_space<semaphore_mem>> -> memref<1x!tpu.dma_semaphore, #tpu.memory_space<semaphore_mem>>
    %275 = tpu.memref_squeeze %274 : memref<1x!tpu.dma_semaphore, #tpu.memory_space<semaphore_mem>> -> memref<!tpu.dma_semaphore, #tpu.memory_space<semaphore_mem>>
    tpu.wait_dma2 semaphore(%275 : memref<!tpu.dma_semaphore, #tpu.memory_space<semaphore_mem>>) src(%272 : memref<1x64xf32, #tpu.memory_space<any>>) dst(%273 : memref<1x64xf32, #tpu.memory_space<vmem>>)
    %c0_i32_268 = arith.constant 0 : i32
    %c0_i32_269 = arith.constant 0 : i32
    %276 = tpu.memref_slice %arg2[%145, %c0_i32_269] : memref<4000x64xf32, #tpu.memory_space<any>> -> memref<1x64xf32, #tpu.memory_space<any>>
    %c29_i32_270 = arith.constant 29 : i32
    %c0_i32_271 = arith.constant 0 : i32
    %277 = tpu.memref_slice %arg4[%c29_i32_270, %c0_i32_271] : memref<32x64xf32, #tpu.memory_space<vmem>> -> memref<1x64xf32, #tpu.memory_space<vmem>>
    %278 = tpu.memref_slice %arg5[%c0_i32_268] : memref<1x!tpu.dma_semaphore, #tpu.memory_space<semaphore_mem>> -> memref<1x!tpu.dma_semaphore, #tpu.memory_space<semaphore_mem>>
    %279 = tpu.memref_squeeze %278 : memref<1x!tpu.dma_semaphore, #tpu.memory_space<semaphore_mem>> -> memref<!tpu.dma_semaphore, #tpu.memory_space<semaphore_mem>>
    tpu.wait_dma2 semaphore(%279 : memref<!tpu.dma_semaphore, #tpu.memory_space<semaphore_mem>>) src(%276 : memref<1x64xf32, #tpu.memory_space<any>>) dst(%277 : memref<1x64xf32, #tpu.memory_space<vmem>>)
    %c0_i32_272 = arith.constant 0 : i32
    %c0_i32_273 = arith.constant 0 : i32
    %280 = tpu.memref_slice %arg2[%150, %c0_i32_273] : memref<4000x64xf32, #tpu.memory_space<any>> -> memref<1x64xf32, #tpu.memory_space<any>>
    %c30_i32_274 = arith.constant 30 : i32
    %c0_i32_275 = arith.constant 0 : i32
    %281 = tpu.memref_slice %arg4[%c30_i32_274, %c0_i32_275] : memref<32x64xf32, #tpu.memory_space<vmem>> -> memref<1x64xf32, #tpu.memory_space<vmem>>
    %282 = tpu.memref_slice %arg5[%c0_i32_272] : memref<1x!tpu.dma_semaphore, #tpu.memory_space<semaphore_mem>> -> memref<1x!tpu.dma_semaphore, #tpu.memory_space<semaphore_mem>>
    %283 = tpu.memref_squeeze %282 : memref<1x!tpu.dma_semaphore, #tpu.memory_space<semaphore_mem>> -> memref<!tpu.dma_semaphore, #tpu.memory_space<semaphore_mem>>
    tpu.wait_dma2 semaphore(%283 : memref<!tpu.dma_semaphore, #tpu.memory_space<semaphore_mem>>) src(%280 : memref<1x64xf32, #tpu.memory_space<any>>) dst(%281 : memref<1x64xf32, #tpu.memory_space<vmem>>)
    %c0_i32_276 = arith.constant 0 : i32
    %c0_i32_277 = arith.constant 0 : i32
    %284 = tpu.memref_slice %arg2[%155, %c0_i32_277] : memref<4000x64xf32, #tpu.memory_space<any>> -> memref<1x64xf32, #tpu.memory_space<any>>
    %c31_i32_278 = arith.constant 31 : i32
    %c0_i32_279 = arith.constant 0 : i32
    %285 = tpu.memref_slice %arg4[%c31_i32_278, %c0_i32_279] : memref<32x64xf32, #tpu.memory_space<vmem>> -> memref<1x64xf32, #tpu.memory_space<vmem>>
    %286 = tpu.memref_slice %arg5[%c0_i32_276] : memref<1x!tpu.dma_semaphore, #tpu.memory_space<semaphore_mem>> -> memref<1x!tpu.dma_semaphore, #tpu.memory_space<semaphore_mem>>
    %287 = tpu.memref_squeeze %286 : memref<1x!tpu.dma_semaphore, #tpu.memory_space<semaphore_mem>> -> memref<!tpu.dma_semaphore, #tpu.memory_space<semaphore_mem>>
    tpu.wait_dma2 semaphore(%287 : memref<!tpu.dma_semaphore, #tpu.memory_space<semaphore_mem>>) src(%284 : memref<1x64xf32, #tpu.memory_space<any>>) dst(%285 : memref<1x64xf32, #tpu.memory_space<vmem>>)
    %c0_280 = arith.constant 0 : index
    %c0_281 = arith.constant 0 : index
    %288 = vector.load %arg4[%c0_280, %c0_281] : memref<32x64xf32, #tpu.memory_space<vmem>>, vector<32x64xf32>
    %289 = vector.shape_cast %288 : vector<32x64xf32> to vector<4x8x64xf32>
    %290 = arith.mulf %289, %289 : vector<4x8x64xf32>
    %cst = arith.constant dense<0.000000e+00> : vector<4x8xf32>
    %291 = vector.multi_reduction <add>, %290, %cst [2] : vector<4x8x64xf32> to vector<4x8xf32>
    %292 = vector.shape_cast %291 : vector<4x8xf32> to vector<4x8x1xf32>
    %293 = math.sqrt %292 : vector<4x8x1xf32>
    %cst_282 = arith.constant 1.000000e+00 : f32
    %294 = vector.broadcast %cst_282 : f32 to vector<4x8x1xf32>
    %295 = arith.cmpf ogt, %293, %294 : vector<4x8x1xf32>
    %cst_283 = arith.constant 1.000000e-07 : f32
    %296 = vector.broadcast %cst_283 : f32 to vector<4x8x1xf32>
    %297 = arith.addf %293, %296 : vector<4x8x1xf32>
    %298 = tpu.reciprocal %297 : vector<4x8x1xf32> -> vector<4x8x1xf32>
    %cst_284 = arith.constant 1.000000e+00 : f32
    %299 = vector.broadcast %cst_284 : f32 to vector<4x8x1xf32>
    %300 = arith.select %295, %298, %299 : vector<4x8x1xi1>, vector<4x8x1xf32>
    %301 = vector.broadcast %300 : vector<4x8x1xf32> to vector<4x8x64xf32>
    %302 = arith.mulf %289, %301 : vector<4x8x64xf32>
    %cst_285 = arith.constant dense<0.000000e+00> : vector<4x64xf32>
    %303 = vector.multi_reduction <add>, %302, %cst_285 [1] : vector<4x8x64xf32> to vector<4x64xf32>
    %cst_286 = arith.constant 8.000000e+00 : f32
    %304 = vector.broadcast %cst_286 : f32 to vector<4x64xf32>
    %305 = arith.divf %303, %304 : vector<4x64xf32>
    %cst_287 = arith.constant 0.000000e+00 : f32
    %306 = vector.broadcast %cst_287 : f32 to vector<16x64xf32>
    %c0_288 = arith.constant 0 : index
    %c0_289 = arith.constant 0 : index
    %307 = vector.load %arg3[%c0_288, %c0_289] : memref<16x64xf32, #tpu.memory_space<vmem>>, vector<16x64xf32>
    tpu.vector_store %arg3[%c0_288, %c0_289], %306 {strides = array<i32>} : memref<16x64xf32, #tpu.memory_space<vmem>>, vector<16x64xf32>,
    %c0_290 = arith.constant 0 : index
    %c0_291 = arith.constant 0 : index
    %308 = vector.load %arg3[%c0_290, %c0_291] : memref<16x64xf32, #tpu.memory_space<vmem>>, vector<4x64xf32>
    tpu.vector_store %arg3[%c0_290, %c0_291], %305 {strides = array<i32>} : memref<16x64xf32, #tpu.memory_space<vmem>>, vector<4x64xf32>,
    return
  }
  func.func @transform_1(%arg0: i32, %arg1: memref<4x8xi32, #tpu.memory_space<smem>>) -> (i32, i32) {
    %c0_i32 = arith.constant 0 : i32
    %c0_i32_0 = arith.constant 0 : i32
    %c0_i32_1 = arith.constant 0 : i32
    return %c0_i32, %c0_i32_0 : i32, i32
  }
}

</mosaic_0001>

<llo_original>
// kernel: tpu_custom_call.1
$region0: #{tpu_custom_call.1}
  #allocation0 [shape = 'u32[]', space=smem, size = 0x4, offset = 0x4, fixed_abs, tag = 'smem constant byte address 0x4 - core index']
  #allocation1 [shape = 'u32[72,128]{1,0:T(1,128)}', space=vmem, size = 0x9000, scoped, tag = 'internal scratch']
  #allocation2 [shape = 'f32[32,64]{1,0:T(8,128)}', space=vmem, size = 0x4000, scoped, tag = 'scratch operand']
  #allocation3 [shape = 's32[1]{0}', space=sflag, size = 0x4, scoped, tag = 'scratch operand']
  #allocation4 [shape = 's32[1]{0}', space=sflag, size = 0x4, scoped, tag = 'scoped memory for tpu_custom_call.1']
  #allocation5 [shape = 'u8[2048]{0}', space=smem, size = 0x800, scoped, tag = 'prefetched SMEM operand 0']
  #allocation8 [shape = 's32[]', space=sflag, size = 0x4, offset = 0, fixed_abs, tag = 'sflag constant byte address 0x0 - dummy sync flag']
  #allocation9 [shape = 's32[]', space=sflag, size = 0x4, offset = 0, fixed_abs, tag = 'sflag constant byte address 0x0 - dummy sync flag']
  #allocation10 [shape = 's32[]', space=sflag, size = 0x4, offset = 0, fixed_abs, tag = 'sflag constant byte address 0x0 - dummy sync flag']
  #allocation11 [shape = 's32[]', space=sflag, size = 0x4, offset = 0, fixed_abs, tag = 'sflag constant byte address 0x0 - dummy sync flag']
  #allocation12 [shape = 's32[]', space=sflag, size = 0x4, offset = 0, fixed_abs, tag = 'sflag constant byte address 0x0 - dummy sync flag']
  #allocation13 [shape = 's32[]', space=sflag, size = 0x4, offset = 0, fixed_abs, tag = 'sflag constant byte address 0x0 - dummy sync flag']
  #allocation14 [shape = 's32[]', space=sflag, size = 0x4, offset = 0, fixed_abs, tag = 'sflag constant byte address 0x0 - dummy sync flag']
  #allocation15 [shape = 's32[]', space=sflag, size = 0x4, offset = 0, fixed_abs, tag = 'sflag constant byte address 0x0 - dummy sync flag']
  #allocation16 [shape = 's32[]', space=sflag, size = 0x4, offset = 0, fixed_abs, tag = 'sflag constant byte address 0x0 - dummy sync flag']
  #allocation17 [shape = 's32[]', space=sflag, size = 0x4, offset = 0, fixed_abs, tag = 'sflag constant byte address 0x0 - dummy sync flag']
  #allocation18 [shape = 's32[]', space=sflag, size = 0x4, offset = 0, fixed_abs, tag = 'sflag constant byte address 0x0 - dummy sync flag']
  #allocation19 [shape = 's32[]', space=sflag, size = 0x4, offset = 0, fixed_abs, tag = 'sflag constant byte address 0x0 - dummy sync flag']
  #allocation20 [shape = 's32[]', space=sflag, size = 0x4, offset = 0, fixed_abs, tag = 'sflag constant byte address 0x0 - dummy sync flag']
  #allocation21 [shape = 's32[]', space=sflag, size = 0x4, offset = 0, fixed_abs, tag = 'sflag constant byte address 0x0 - dummy sync flag']
  #allocation22 [shape = 's32[]', space=sflag, size = 0x4, offset = 0, fixed_abs, tag = 'sflag constant byte address 0x0 - dummy sync flag']
  #allocation23 [shape = 's32[]', space=sflag, size = 0x4, offset = 0, fixed_abs, tag = 'sflag constant byte address 0x0 - dummy sync flag']
  #allocation24 [shape = 's32[]', space=sflag, size = 0x4, offset = 0, fixed_abs, tag = 'sflag constant byte address 0x0 - dummy sync flag']
  #allocation25 [shape = 's32[]', space=sflag, size = 0x4, offset = 0, fixed_abs, tag = 'sflag constant byte address 0x0 - dummy sync flag']
  #allocation26 [shape = 's32[]', space=sflag, size = 0x4, offset = 0, fixed_abs, tag = 'sflag constant byte address 0x0 - dummy sync flag']
  #allocation27 [shape = 's32[]', space=sflag, size = 0x4, offset = 0, fixed_abs, tag = 'sflag constant byte address 0x0 - dummy sync flag']
  #allocation28 [shape = 's32[]', space=sflag, size = 0x4, offset = 0, fixed_abs, tag = 'sflag constant byte address 0x0 - dummy sync flag']
  #allocation29 [shape = 's32[]', space=sflag, size = 0x4, offset = 0, fixed_abs, tag = 'sflag constant byte address 0x0 - dummy sync flag']
  #allocation30 [shape = 's32[]', space=sflag, size = 0x4, offset = 0, fixed_abs, tag = 'sflag constant byte address 0x0 - dummy sync flag']
  #allocation31 [shape = 's32[]', space=sflag, size = 0x4, offset = 0, fixed_abs, tag = 'sflag constant byte address 0x0 - dummy sync flag']
  #allocation32 [shape = 's32[]', space=sflag, size = 0x4, offset = 0, fixed_abs, tag = 'sflag constant byte address 0x0 - dummy sync flag']
  #allocation33 [shape = 's32[]', space=sflag, size = 0x4, offset = 0, fixed_abs, tag = 'sflag constant byte address 0x0 - dummy sync flag']
  #allocation34 [shape = 's32[]', space=sflag, size = 0x4, offset = 0, fixed_abs, tag = 'sflag constant byte address 0x0 - dummy sync flag']
  #allocation35 [shape = 's32[]', space=sflag, size = 0x4, offset = 0, fixed_abs, tag = 'sflag constant byte address 0x0 - dummy sync flag']
  #allocation36 [shape = 's32[]', space=sflag, size = 0x4, offset = 0, fixed_abs, tag = 'sflag constant byte address 0x0 - dummy sync flag']
  #allocation37 [shape = 's32[]', space=sflag, size = 0x4, offset = 0, fixed_abs, tag = 'sflag constant byte address 0x0 - dummy sync flag']
  #allocation38 [shape = 's32[]', space=sflag, size = 0x4, offset = 0, fixed_abs, tag = 'sflag constant byte address 0x0 - dummy sync flag']
  #allocation39 [shape = 's32[]', space=sflag, size = 0x4, offset = 0, fixed_abs, tag = 'sflag constant byte address 0x0 - dummy sync flag']
  %s0 = inlined_call_operand.vmem [shape: s32[4,8], index: 0, kind: input, shape index: {}]
  %s1 = inlined_call_operand.vmem [shape: f32[4000,64], index: 1, kind: input, shape index: {}]
  %s2 = inlined_call_operand.hbm [shape: f32[16,64], index: 2, kind: output, shape index: {}]
  %s3 = sld [smem:[#allocation0]]
  $region970: #{tpu_custom_call.1} parent=0
    _
  %s5 = ssub.s32 1, %s3
  %s6 = scalar_select 0, %s5, %s3
  %s8 = sshll.u32 %s0, 4
  %s9 = int_to_ptr.vmem [resolvable:$true] %s8
  %11 = dma.vmem_to_smem %s9, 64, [#allocation5], [#allocation4]
  %13 = dma.done [#allocation4], 64
  %14 = sfence
  $region1: #{tpu_custom_call.1} parent=0
    #allocation6 [shape = 'u8[8192]{0}', space=vmem, size = 0x2000, scoped, tag = 'output window, operand 0, single buffered']
    #allocation7 [shape = 's32[1]{0}', space=sflag, size = 0x4, scoped, tag = 'scoped memory for tpu_custom_call.1']
    %15 = vsyncpa [#allocation7], 0
    %s16 = sld [smem:[#allocation5]]
    %s17 = scalar_lea.vmem %s1, %s16
    // Predicated region
    $region2: #{tpu_custom_call.1} parent=1 // pred_check
      _
    $region3: #{tpu_custom_call.1} parent=1 // pred_check_branch
      %19 = sbr.rel target = $region5
    $region4: #{tpu_custom_call.1} parent=1 // pred_region
      // Predicated region
      $region17: #{tpu_custom_call.1} parent=4 // pred_check
        _
      $region18: #{tpu_custom_call.1} parent=4 // pred_check_branch
        %35 = sbr.rel (0) target = $region20
      $region19: #{tpu_custom_call.1} parent=4 // pred_region
        %s37 = ssub.s32 2, 1
        loop: start=0, step=1, limit=1
        $region21: #{tpu_custom_call.1} parent=19 // loop_pre_header
          _
        $region22: #{tpu_custom_call.1} parent=19 // loop_header
          %s39 = sphi 0, %s43
          %p40 = scmp.ge.s32.totalorder %s39, 1
          %s44 = sphi %s17, %s17
          %s45 = sphi [#allocation2], [#allocation2]
        $region23: #{tpu_custom_call.1} parent=19 // loop_header_branch
          %42 = sbr.rel (%p40) target = $region27
        $region24: #{tpu_custom_call.1} parent=19 // loop_body
          %v46 = vld [vmem:[%s44] sm:%s37]
          %47 = vst [vmem:[%s45] sm:%s37] %v46
        $region25: #{tpu_custom_call.1} parent=19 // loop_footer
          %s43 = sadd.s32 1, %s39
        $region26: #{tpu_custom_call.1} parent=19 // loop_footer_branch
          %38 = sbr.rel target = $region22
        $region27: #{tpu_custom_call.1} parent=19 // loop_exit
          _
      $region20: #{tpu_custom_call.1} parent=4 // pred_fallthru
        _
    $region5: #{tpu_custom_call.1} parent=1 // pred_fallthru
      _
    // Predicated region
    $region6: #{tpu_custom_call.1} parent=1 // pred_check
      _
    $region7: #{tpu_custom_call.1} parent=1 // pred_check_branch
      %21 = sbr.rel (0) target = $region9
    $region8: #{tpu_custom_call.1} parent=1 // pred_region
      %s23 = ssub.s32 2, 1
      loop: start=0, step=1, limit=1
      $region10: #{tpu_custom_call.1} parent=8 // loop_pre_header
        _
      $region11: #{tpu_custom_call.1} parent=8 // loop_header
        %s25 = sphi 0, %s29
        %p26 = scmp.ge.s32.totalorder %s25, 1
        %s30 = sphi %s17, %s17
        %s31 = sphi [#allocation2], [#allocation2]
      $region12: #{tpu_custom_call.1} parent=8 // loop_header_branch
        %28 = sbr.rel (%p26) target = $region16
      $region13: #{tpu_custom_call.1} parent=8 // loop_body
        %v32 = vld [vmem:[%s30] sm:%s23]
        %33 = vst [vmem:[%s31] sm:%s23] %v32
      $region14: #{tpu_custom_call.1} parent=8 // loop_footer
        %s29 = sadd.s32 1, %s25
      $region15: #{tpu_custom_call.1} parent=8 // loop_footer_branch
        %24 = sbr.rel target = $region11
      $region16: #{tpu_custom_call.1} parent=8 // loop_exit
        _
    $region9: #{tpu_custom_call.1} parent=1 // pred_fallthru
      _
    // Predicated region
    $region28: #{tpu_custom_call.1} parent=1 // pred_check
      _
    $region29: #{tpu_custom_call.1} parent=1 // pred_check_branch
      %50 = sbr.rel (0) target = $region31
    $region30: #{tpu_custom_call.1} parent=1 // pred_region
      %51 = vsyncadd [#allocation3], 16
    $region31: #{tpu_custom_call.1} parent=1 // pred_fallthru
      _
    %s52 = sld [smem:[#allocation5 + $0x1]]
    %s53 = scalar_lea.vmem %s1, %s52
    %s54 = scalar_lea.vmem [#allocation2], 1
    // Predicated region
    $region32: #{tpu_custom_call.1} parent=1 // pred_check
      _
    $region33: #{tpu_custom_call.1} parent=1 // pred_check_branch
      %56 = sbr.rel target = $region35
    $region34: #{tpu_custom_call.1} parent=1 // pred_region
      // Predicated region
      $region47: #{tpu_custom_call.1} parent=34 // pred_check
        _
      $region48: #{tpu_custom_call.1} parent=34 // pred_check_branch
        %72 = sbr.rel (0) target = $region50
      $region49: #{tpu_custom_call.1} parent=34 // pred_region
        %s74 = ssub.s32 2, 1
        loop: start=0, step=1, limit=1
        $region51: #{tpu_custom_call.1} parent=49 // loop_pre_header
          _
        $region52: #{tpu_custom_call.1} parent=49 // loop_header
          %s76 = sphi 0, %s80
          %p77 = scmp.ge.s32.totalorder %s76, 1
          %s81 = sphi %s53, %s53
          %s82 = sphi %s54, %s54
        $region53: #{tpu_custom_call.1} parent=49 // loop_header_branch
          %79 = sbr.rel (%p77) target = $region57
        $region54: #{tpu_custom_call.1} parent=49 // loop_body
          %v83 = vld [vmem:[%s81] sm:%s74]
          %84 = vst [vmem:[%s82] sm:%s74] %v83
        $region55: #{tpu_custom_call.1} parent=49 // loop_footer
          %s80 = sadd.s32 1, %s76
        $region56: #{tpu_custom_call.1} parent=49 // loop_footer_branch
          %75 = sbr.rel target = $region52
        $region57: #{tpu_custom_call.1} parent=49 // loop_exit
          _
      $region50: #{tpu_custom_call.1} parent=34 // pred_fallthru
        _
    $region35: #{tpu_custom_call.1} parent=1 // pred_fallthru
      _
    // Predicated region
    $region36: #{tpu_custom_call.1} parent=1 // pred_check
      _
    $region37: #{tpu_custom_call.1} parent=1 // pred_check_branch
      %58 = sbr.rel (0) target = $region39
    $region38: #{tpu_custom_call.1} parent=1 // pred_region
      %s60 = ssub.s32 2, 1
      loop: start=0, step=1, limit=1
      $region40: #{tpu_custom_call.1} parent=38 // loop_pre_header
        _
      $region41: #{tpu_custom_call.1} parent=38 // loop_header
        %s62 = sphi 0, %s66
        %p63 = scmp.ge.s32.totalorder %s62, 1
        %s67 = sphi %s53, %s53
        %s68 = sphi %s54, %s54
      $region42: #{tpu_custom_call.1} parent=38 // loop_header_branch
        %65 = sbr.rel (%p63) target = $region46
      $region43: #{tpu_custom_call.1} parent=38 // loop_body
        %v69 = vld [vmem:[%s67] sm:%s60]
        %70 = vst [vmem:[%s68] sm:%s60] %v69
      $region44: #{tpu_custom_call.1} parent=38 // loop_footer
        %s66 = sadd.s32 1, %s62
      $region45: #{tpu_custom_call.1} parent=38 // loop_footer_branch
        %61 = sbr.rel target = $region41
      $region46: #{tpu_custom_call.1} parent=38 // loop_exit
        _
    $region39: #{tpu_custom_call.1} parent=1 // pred_fallthru
      _
    // Predicated region
    $region58: #{tpu_custom_call.1} parent=1 // pred_check
      _
    $region59: #{tpu_custom_call.1} parent=1 // pred_check_branch
      %87 = sbr.rel (0) target = $region61
    $region60: #{tpu_custom_call.1} parent=1 // pred_region
      %88 = vsyncadd [#allocation3], 16
    $region61: #{tpu_custom_call.1} parent=1 // pred_fallthru
      _
    %s89 = sld [smem:[#allocation5 + $0x2]]
    %s90 = scalar_lea.vmem %s1, %s89
    %s91 = scalar_lea.vmem [#allocation2], 2
    // Predicated region
    $region62: #{tpu_custom_call.1} parent=1 // pred_check
      _
    $region63: #{tpu_custom_call.1} parent=1 // pred_check_branch
      %93 = sbr.rel target = $region65
    $region64: #{tpu_custom_call.1} parent=1 // pred_region
      // Predicated region
      $region77: #{tpu_custom_call.1} parent=64 // pred_check
        _
      $region78: #{tpu_custom_call.1} parent=64 // pred_check_branch
        %109 = sbr.rel (0) target = $region80
      $region79: #{tpu_custom_call.1} parent=64 // pred_region
        %s111 = ssub.s32 2, 1
        loop: start=0, step=1, limit=1
        $region81: #{tpu_custom_call.1} parent=79 // loop_pre_header
          _
        $region82: #{tpu_custom_call.1} parent=79 // loop_header
          %s113 = sphi 0, %s117
          %p114 = scmp.ge.s32.totalorder %s113, 1
          %s118 = sphi %s90, %s90
          %s119 = sphi %s91, %s91
        $region83: #{tpu_custom_call.1} parent=79 // loop_header_branch
          %116 = sbr.rel (%p114) target = $region87
        $region84: #{tpu_custom_call.1} parent=79 // loop_body
          %v120 = vld [vmem:[%s118] sm:%s111]
          %121 = vst [vmem:[%s119] sm:%s111] %v120
        $region85: #{tpu_custom_call.1} parent=79 // loop_footer
          %s117 = sadd.s32 1, %s113
        $region86: #{tpu_custom_call.1} parent=79 // loop_footer_branch
          %112 = sbr.rel target = $region82
        $region87: #{tpu_custom_call.1} parent=79 // loop_exit
          _
      $region80: #{tpu_custom_call.1} parent=64 // pred_fallthru
        _
    $region65: #{tpu_custom_call.1} parent=1 // pred_fallthru
      _
    // Predicated region
    $region66: #{tpu_custom_call.1} parent=1 // pred_check
      _
    $region67: #{tpu_custom_call.1} parent=1 // pred_check_branch
      %95 = sbr.rel (0) target = $region69
    $region68: #{tpu_custom_call.1} parent=1 // pred_region
      %s97 = ssub.s32 2, 1
      loop: start=0, step=1, limit=1
      $region70: #{tpu_custom_call.1} parent=68 // loop_pre_header
        _
      $region71: #{tpu_custom_call.1} parent=68 // loop_header
        %s99 = sphi 0, %s103
        %p100 = scmp.ge.s32.totalorder %s99, 1
        %s104 = sphi %s90, %s90
        %s105 = sphi %s91, %s91
      $region72: #{tpu_custom_call.1} parent=68 // loop_header_branch
        %102 = sbr.rel (%p100) target = $region76
      $region73: #{tpu_custom_call.1} parent=68 // loop_body
        %v106 = vld [vmem:[%s104] sm:%s97]
        %107 = vst [vmem:[%s105] sm:%s97] %v106
      $region74: #{tpu_custom_call.1} parent=68 // loop_footer
        %s103 = sadd.s32 1, %s99
      $region75: #{tpu_custom_call.1} parent=68 // loop_footer_branch
        %98 = sbr.rel target = $region71
      $region76: #{tpu_custom_call.1} parent=68 // loop_exit
        _
    $region69: #{tpu_custom_call.1} parent=1 // pred_fallthru
      _
    // Predicated region
    $region88: #{tpu_custom_call.1} parent=1 // pred_check
      _
    $region89: #{tpu_custom_call.1} parent=1 // pred_check_branch
      %124 = sbr.rel (0) target = $region91
    $region90: #{tpu_custom_call.1} parent=1 // pred_region
      %125 = vsyncadd [#allocation3], 16
    $region91: #{tpu_custom_call.1} parent=1 // pred_fallthru
      _
    %s126 = sld [smem:[#allocation5 + $0x3]]
    %s127 = scalar_lea.vmem %s1, %s126
    %s128 = scalar_lea.vmem [#allocation2], 3
    // Predicated region
    $region92: #{tpu_custom_call.1} parent=1 // pred_check
      _
    $region93: #{tpu_custom_call.1} parent=1 // pred_check_branch
      %130 = sbr.rel target = $region95
    $region94: #{tpu_custom_call.1} parent=1 // pred_region
      // Predicated region
      $region107: #{tpu_custom_call.1} parent=94 // pred_check
        _
      $region108: #{tpu_custom_call.1} parent=94 // pred_check_branch
        %146 = sbr.rel (0) target = $region110
      $region109: #{tpu_custom_call.1} parent=94 // pred_region
        %s148 = ssub.s32 2, 1
        loop: start=0, step=1, limit=1
        $region111: #{tpu_custom_call.1} parent=109 // loop_pre_header
          _
        $region112: #{tpu_custom_call.1} parent=109 // loop_header
          %s150 = sphi 0, %s154
          %p151 = scmp.ge.s32.totalorder %s150, 1
          %s155 = sphi %s127, %s127
          %s156 = sphi %s128, %s128
        $region113: #{tpu_custom_call.1} parent=109 // loop_header_branch
          %153 = sbr.rel (%p151) target = $region117
        $region114: #{tpu_custom_call.1} parent=109 // loop_body
          %v157 = vld [vmem:[%s155] sm:%s148]
          %158 = vst [vmem:[%s156] sm:%s148] %v157
        $region115: #{tpu_custom_call.1} parent=109 // loop_footer
          %s154 = sadd.s32 1, %s150
        $region116: #{tpu_custom_call.1} parent=109 // loop_footer_branch
          %149 = sbr.rel target = $region112
        $region117: #{tpu_custom_call.1} parent=109 // loop_exit
          _
      $region110: #{tpu_custom_call.1} parent=94 // pred_fallthru
        _
    $region95: #{tpu_custom_call.1} parent=1 // pred_fallthru
      _
    // Predicated region
    $region96: #{tpu_custom_call.1} parent=1 // pred_check
      _
    $region97: #{tpu_custom_call.1} parent=1 // pred_check_branch
      %132 = sbr.rel (0) target = $region99
    $region98: #{tpu_custom_call.1} parent=1 // pred_region
      %s134 = ssub.s32 2, 1
      loop: start=0, step=1, limit=1
      $region100: #{tpu_custom_call.1} parent=98 // loop_pre_header
        _
      $region101: #{tpu_custom_call.1} parent=98 // loop_header
        %s136 = sphi 0, %s140
        %p137 = scmp.ge.s32.totalorder %s136, 1
        %s141 = sphi %s127, %s127
        %s142 = sphi %s128, %s128
      $region102: #{tpu_custom_call.1} parent=98 // loop_header_branch
        %139 = sbr.rel (%p137) target = $region106
      $region103: #{tpu_custom_call.1} parent=98 // loop_body
        %v143 = vld [vmem:[%s141] sm:%s134]
        %144 = vst [vmem:[%s142] sm:%s134] %v143
      $region104: #{tpu_custom_call.1} parent=98 // loop_footer
        %s140 = sadd.s32 1, %s136
      $region105: #{tpu_custom_call.1} parent=98 // loop_footer_branch
        %135 = sbr.rel target = $region101
      $region106: #{tpu_custom_call.1} parent=98 // loop_exit
        _
    $region99: #{tpu_custom_call.1} parent=1 // pred_fallthru
      _
    // Predicated region
    $region118: #{tpu_custom_call.1} parent=1 // pred_check
      _
    $region119: #{tpu_custom_call.1} parent=1 // pred_check_branch
      %161 = sbr.rel (0) target = $region121
    $region120: #{tpu_custom_call.1} parent=1 // pred_region
      %162 = vsyncadd [#allocation3], 16
    $region121: #{tpu_custom_call.1} parent=1 // pred_fallthru
      _
    %s163 = sld [smem:[#allocation5 + $0x4]]
    %s164 = scalar_lea.vmem %s1, %s163
    %s165 = scalar_lea.vmem [#allocation2], 4
    // Predicated region
    $region122: #{tpu_custom_call.1} parent=1 // pred_check
      _
    $region123: #{tpu_custom_call.1} parent=1 // pred_check_branch
      %167 = sbr.rel target = $region125
    $region124: #{tpu_custom_call.1} parent=1 // pred_region
      // Predicated region
      $region137: #{tpu_custom_call.1} parent=124 // pred_check
        _
      $region138: #{tpu_custom_call.1} parent=124 // pred_check_branch
        %183 = sbr.rel (0) target = $region140
      $region139: #{tpu_custom_call.1} parent=124 // pred_region
        %s185 = ssub.s32 2, 1
        loop: start=0, step=1, limit=1
        $region141: #{tpu_custom_call.1} parent=139 // loop_pre_header
          _
        $region142: #{tpu_custom_call.1} parent=139 // loop_header
          %s187 = sphi 0, %s191
          %p188 = scmp.ge.s32.totalorder %s187, 1
          %s192 = sphi %s164, %s164
          %s193 = sphi %s165, %s165
        $region143: #{tpu_custom_call.1} parent=139 // loop_header_branch
          %190 = sbr.rel (%p188) target = $region147
        $region144: #{tpu_custom_call.1} parent=139 // loop_body
          %v194 = vld [vmem:[%s192] sm:%s185]
          %195 = vst [vmem:[%s193] sm:%s185] %v194
        $region145: #{tpu_custom_call.1} parent=139 // loop_footer
          %s191 = sadd.s32 1, %s187
        $region146: #{tpu_custom_call.1} parent=139 // loop_footer_branch
          %186 = sbr.rel target = $region142
        $region147: #{tpu_custom_call.1} parent=139 // loop_exit
          _
      $region140: #{tpu_custom_call.1} parent=124 // pred_fallthru
        _
    $region125: #{tpu_custom_call.1} parent=1 // pred_fallthru
      _
    // Predicated region
    $region126: #{tpu_custom_call.1} parent=1 // pred_check
      _
    $region127: #{tpu_custom_call.1} parent=1 // pred_check_branch
      %169 = sbr.rel (0) target = $region129
    $region128: #{tpu_custom_call.1} parent=1 // pred_region
      %s171 = ssub.s32 2, 1
      loop: start=0, step=1, limit=1
      $region130: #{tpu_custom_call.1} parent=128 // loop_pre_header
        _
      $region131: #{tpu_custom_call.1} parent=128 // loop_header
        %s173 = sphi 0, %s177
        %p174 = scmp.ge.s32.totalorder %s173, 1
        %s178 = sphi %s164, %s164
        %s179 = sphi %s165, %s165
      $region132: #{tpu_custom_call.1} parent=128 // loop_header_branch
        %176 = sbr.rel (%p174) target = $region136
      $region133: #{tpu_custom_call.1} parent=128 // loop_body
        %v180 = vld [vmem:[%s178] sm:%s171]
        %181 = vst [vmem:[%s179] sm:%s171] %v180
      $region134: #{tpu_custom_call.1} parent=128 // loop_footer
        %s177 = sadd.s32 1, %s173
      $region135: #{tpu_custom_call.1} parent=128 // loop_footer_branch
        %172 = sbr.rel target = $region131
      $region136: #{tpu_custom_call.1} parent=128 // loop_exit
        _
    $region129: #{tpu_custom_call.1} parent=1 // pred_fallthru
      _
    // Predicated region
    $region148: #{tpu_custom_call.1} parent=1 // pred_check
      _
    $region149: #{tpu_custom_call.1} parent=1 // pred_check_branch
      %198 = sbr.rel (0) target = $region151
    $region150: #{tpu_custom_call.1} parent=1 // pred_region
      %199 = vsyncadd [#allocation3], 16
    $region151: #{tpu_custom_call.1} parent=1 // pred_fallthru
      _
    %s200 = sld [smem:[#allocation5 + $0x5]]
    %s201 = scalar_lea.vmem %s1, %s200
    %s202 = scalar_lea.vmem [#allocation2], 5
    // Predicated region
    $region152: #{tpu_custom_call.1} parent=1 // pred_check
      _
    $region153: #{tpu_custom_call.1} parent=1 // pred_check_branch
      %204 = sbr.rel target = $region155
    $region154: #{tpu_custom_call.1} parent=1 // pred_region
      // Predicated region
      $region167: #{tpu_custom_call.1} parent=154 // pred_check
        _
      $region168: #{tpu_custom_call.1} parent=154 // pred_check_branch
        %220 = sbr.rel (0) target = $region170
      $region169: #{tpu_custom_call.1} parent=154 // pred_region
        %s222 = ssub.s32 2, 1
        loop: start=0, step=1, limit=1
        $region171: #{tpu_custom_call.1} parent=169 // loop_pre_header
          _
        $region172: #{tpu_custom_call.1} parent=169 // loop_header
          %s224 = sphi 0, %s228
          %p225 = scmp.ge.s32.totalorder %s224, 1
          %s229 = sphi %s201, %s201
          %s230 = sphi %s202, %s202
        $region173: #{tpu_custom_call.1} parent=169 // loop_header_branch
          %227 = sbr.rel (%p225) target = $region177
        $region174: #{tpu_custom_call.1} parent=169 // loop_body
          %v231 = vld [vmem:[%s229] sm:%s222]
          %232 = vst [vmem:[%s230] sm:%s222] %v231
        $region175: #{tpu_custom_call.1} parent=169 // loop_footer
          %s228 = sadd.s32 1, %s224
        $region176: #{tpu_custom_call.1} parent=169 // loop_footer_branch
          %223 = sbr.rel target = $region172
        $region177: #{tpu_custom_call.1} parent=169 // loop_exit
          _
      $region170: #{tpu_custom_call.1} parent=154 // pred_fallthru
        _
    $region155: #{tpu_custom_call.1} parent=1 // pred_fallthru
      _
    // Predicated region
    $region156: #{tpu_custom_call.1} parent=1 // pred_check
      _
    $region157: #{tpu_custom_call.1} parent=1 // pred_check_branch
      %206 = sbr.rel (0) target = $region159
    $region158: #{tpu_custom_call.1} parent=1 // pred_region
      %s208 = ssub.s32 2, 1
      loop: start=0, step=1, limit=1
      $region160: #{tpu_custom_call.1} parent=158 // loop_pre_header
        _
      $region161: #{tpu_custom_call.1} parent=158 // loop_header
        %s210 = sphi 0, %s214
        %p211 = scmp.ge.s32.totalorder %s210, 1
        %s215 = sphi %s201, %s201
        %s216 = sphi %s202, %s202
      $region162: #{tpu_custom_call.1} parent=158 // loop_header_branch
        %213 = sbr.rel (%p211) target = $region166
      $region163: #{tpu_custom_call.1} parent=158 // loop_body
        %v217 = vld [vmem:[%s215] sm:%s208]
        %218 = vst [vmem:[%s216] sm:%s208] %v217
      $region164: #{tpu_custom_call.1} parent=158 // loop_footer
        %s214 = sadd.s32 1, %s210
      $region165: #{tpu_custom_call.1} parent=158 // loop_footer_branch
        %209 = sbr.rel target = $region161
      $region166: #{tpu_custom_call.1} parent=158 // loop_exit
        _
    $region159: #{tpu_custom_call.1} parent=1 // pred_fallthru
      _
    // Predicated region
    $region178: #{tpu_custom_call.1} parent=1 // pred_check
      _
    $region179: #{tpu_custom_call.1} parent=1 // pred_check_branch
      %235 = sbr.rel (0) target = $region181
    $region180: #{tpu_custom_call.1} parent=1 // pred_region
      %236 = vsyncadd [#allocation3], 16
    $region181: #{tpu_custom_call.1} parent=1 // pred_fallthru
      _
    %s237 = sld [smem:[#allocation5 + $0x6]]
    %s238 = scalar_lea.vmem %s1, %s237
    %s239 = scalar_lea.vmem [#allocation2], 6
    // Predicated region
    $region182: #{tpu_custom_call.1} parent=1 // pred_check
      _
    $region183: #{tpu_custom_call.1} parent=1 // pred_check_branch
      %241 = sbr.rel target = $region185
    $region184: #{tpu_custom_call.1} parent=1 // pred_region
      // Predicated region
      $region197: #{tpu_custom_call.1} parent=184 // pred_check
        _
      $region198: #{tpu_custom_call.1} parent=184 // pred_check_branch
        %257 = sbr.rel (0) target = $region200
      $region199: #{tpu_custom_call.1} parent=184 // pred_region
        %s259 = ssub.s32 2, 1
        loop: start=0, step=1, limit=1
        $region201: #{tpu_custom_call.1} parent=199 // loop_pre_header
          _
        $region202: #{tpu_custom_call.1} parent=199 // loop_header
          %s261 = sphi 0, %s265
          %p262 = scmp.ge.s32.totalorder %s261, 1
          %s266 = sphi %s238, %s238
          %s267 = sphi %s239, %s239
        $region203: #{tpu_custom_call.1} parent=199 // loop_header_branch
          %264 = sbr.rel (%p262) target = $region207
        $region204: #{tpu_custom_call.1} parent=199 // loop_body
          %v268 = vld [vmem:[%s266] sm:%s259]
          %269 = vst [vmem:[%s267] sm:%s259] %v268
        $region205: #{tpu_custom_call.1} parent=199 // loop_footer
          %s265 = sadd.s32 1, %s261
        $region206: #{tpu_custom_call.1} parent=199 // loop_footer_branch
          %260 = sbr.rel target = $region202
        $region207: #{tpu_custom_call.1} parent=199 // loop_exit
          _
      $region200: #{tpu_custom_call.1} parent=184 // pred_fallthru
        _
    $region185: #{tpu_custom_call.1} parent=1 // pred_fallthru
      _
    // Predicated region
    $region186: #{tpu_custom_call.1} parent=1 // pred_check
      _
    $region187: #{tpu_custom_call.1} parent=1 // pred_check_branch
      %243 = sbr.rel (0) target = $region189
    $region188: #{tpu_custom_call.1} parent=1 // pred_region
      %s245 = ssub.s32 2, 1
      loop: start=0, step=1, limit=1
      $region190: #{tpu_custom_call.1} parent=188 // loop_pre_header
        _
      $region191: #{tpu_custom_call.1} parent=188 // loop_header
        %s247 = sphi 0, %s251
        %p248 = scmp.ge.s32.totalorder %s247, 1
        %s252 = sphi %s238, %s238
        %s253 = sphi %s239, %s239
      $region192: #{tpu_custom_call.1} parent=188 // loop_header_branch
        %250 = sbr.rel (%p248) target = $region196
      $region193: #{tpu_custom_call.1} parent=188 // loop_body
        %v254 = vld [vmem:[%s252] sm:%s245]
        %255 = vst [vmem:[%s253] sm:%s245] %v254
      $region194: #{tpu_custom_call.1} parent=188 // loop_footer
        %s251 = sadd.s32 1, %s247
      $region195: #{tpu_custom_call.1} parent=188 // loop_footer_branch
        %246 = sbr.rel target = $region191
      $region196: #{tpu_custom_call.1} parent=188 // loop_exit
        _
    $region189: #{tpu_custom_call.1} parent=1 // pred_fallthru
      _
    // Predicated region
    $region208: #{tpu_custom_call.1} parent=1 // pred_check
      _
    $region209: #{tpu_custom_call.1} parent=1 // pred_check_branch
      %272 = sbr.rel (0) target = $region211
    $region210: #{tpu_custom_call.1} parent=1 // pred_region
      %273 = vsyncadd [#allocation3], 16
    $region211: #{tpu_custom_call.1} parent=1 // pred_fallthru
      _
    %s274 = sld [smem:[#allocation5 + $0x7]]
    %s275 = scalar_lea.vmem %s1, %s274
    %s276 = scalar_lea.vmem [#allocation2], 7
    // Predicated region
    $region212: #{tpu_custom_call.1} parent=1 // pred_check
      _
    $region213: #{tpu_custom_call.1} parent=1 // pred_check_branch
      %278 = sbr.rel target = $region215
    $region214: #{tpu_custom_call.1} parent=1 // pred_region
      // Predicated region
      $region227: #{tpu_custom_call.1} parent=214 // pred_check
        _
      $region228: #{tpu_custom_call.1} parent=214 // pred_check_branch
        %294 = sbr.rel (0) target = $region230
      $region229: #{tpu_custom_call.1} parent=214 // pred_region
        %s296 = ssub.s32 2, 1
        loop: start=0, step=1, limit=1
        $region231: #{tpu_custom_call.1} parent=229 // loop_pre_header
          _
        $region232: #{tpu_custom_call.1} parent=229 // loop_header
          %s298 = sphi 0, %s302
          %p299 = scmp.ge.s32.totalorder %s298, 1
          %s303 = sphi %s275, %s275
          %s304 = sphi %s276, %s276
        $region233: #{tpu_custom_call.1} parent=229 // loop_header_branch
          %301 = sbr.rel (%p299) target = $region237
        $region234: #{tpu_custom_call.1} parent=229 // loop_body
          %v305 = vld [vmem:[%s303] sm:%s296]
          %306 = vst [vmem:[%s304] sm:%s296] %v305
        $region235: #{tpu_custom_call.1} parent=229 // loop_footer
          %s302 = sadd.s32 1, %s298
        $region236: #{tpu_custom_call.1} parent=229 // loop_footer_branch
          %297 = sbr.rel target = $region232
        $region237: #{tpu_custom_call.1} parent=229 // loop_exit
          _
      $region230: #{tpu_custom_call.1} parent=214 // pred_fallthru
        _
    $region215: #{tpu_custom_call.1} parent=1 // pred_fallthru
      _
    // Predicated region
    $region216: #{tpu_custom_call.1} parent=1 // pred_check
      _
    $region217: #{tpu_custom_call.1} parent=1 // pred_check_branch
      %280 = sbr.rel (0) target = $region219
    $region218: #{tpu_custom_call.1} parent=1 // pred_region
      %s282 = ssub.s32 2, 1
      loop: start=0, step=1, limit=1
      $region220: #{tpu_custom_call.1} parent=218 // loop_pre_header
        _
      $region221: #{tpu_custom_call.1} parent=218 // loop_header
        %s284 = sphi 0, %s288
        %p285 = scmp.ge.s32.totalorder %s284, 1
        %s289 = sphi %s275, %s275
        %s290 = sphi %s276, %s276
      $region222: #{tpu_custom_call.1} parent=218 // loop_header_branch
        %287 = sbr.rel (%p285) target = $region226
      $region223: #{tpu_custom_call.1} parent=218 // loop_body
        %v291 = vld [vmem:[%s289] sm:%s282]
        %292 = vst [vmem:[%s290] sm:%s282] %v291
      $region224: #{tpu_custom_call.1} parent=218 // loop_footer
        %s288 = sadd.s32 1, %s284
      $region225: #{tpu_custom_call.1} parent=218 // loop_footer_branch
        %283 = sbr.rel target = $region221
      $region226: #{tpu_custom_call.1} parent=218 // loop_exit
        _
    $region219: #{tpu_custom_call.1} parent=1 // pred_fallthru
      _
    // Predicated region
    $region238: #{tpu_custom_call.1} parent=1 // pred_check
      _
    $region239: #{tpu_custom_call.1} parent=1 // pred_check_branch
      %309 = sbr.rel (0) target = $region241
    $region240: #{tpu_custom_call.1} parent=1 // pred_region
      %310 = vsyncadd [#allocation3], 16
    $region241: #{tpu_custom_call.1} parent=1 // pred_fallthru
      _
    %s311 = sld [smem:[#allocation5 + $0x80]]
    %s312 = scalar_lea.vmem %s1, %s311
    %s313 = scalar_lea.vmem [#allocation2], 8
    // Predicated region
    $region242: #{tpu_custom_call.1} parent=1 // pred_check
      _
    $region243: #{tpu_custom_call.1} parent=1 // pred_check_branch
      %315 = sbr.rel target = $region245
    $region244: #{tpu_custom_call.1} parent=1 // pred_region
      // Predicated region
      $region257: #{tpu_custom_call.1} parent=244 // pred_check
        _
      $region258: #{tpu_custom_call.1} parent=244 // pred_check_branch
        %331 = sbr.rel (0) target = $region260
      $region259: #{tpu_custom_call.1} parent=244 // pred_region
        %s333 = ssub.s32 2, 1
        loop: start=0, step=1, limit=1
        $region261: #{tpu_custom_call.1} parent=259 // loop_pre_header
          _
        $region262: #{tpu_custom_call.1} parent=259 // loop_header
          %s335 = sphi 0, %s339
          %p336 = scmp.ge.s32.totalorder %s335, 1
          %s340 = sphi %s312, %s312
          %s341 = sphi %s313, %s313
        $region263: #{tpu_custom_call.1} parent=259 // loop_header_branch
          %338 = sbr.rel (%p336) target = $region267
        $region264: #{tpu_custom_call.1} parent=259 // loop_body
          %v342 = vld [vmem:[%s340] sm:%s333]
          %343 = vst [vmem:[%s341] sm:%s333] %v342
        $region265: #{tpu_custom_call.1} parent=259 // loop_footer
          %s339 = sadd.s32 1, %s335
        $region266: #{tpu_custom_call.1} parent=259 // loop_footer_branch
          %334 = sbr.rel target = $region262
        $region267: #{tpu_custom_call.1} parent=259 // loop_exit
          _
      $region260: #{tpu_custom_call.1} parent=244 // pred_fallthru
        _
    $region245: #{tpu_custom_call.1} parent=1 // pred_fallthru
      _
    // Predicated region
    $region246: #{tpu_custom_call.1} parent=1 // pred_check
      _
    $region247: #{tpu_custom_call.1} parent=1 // pred_check_branch
      %317 = sbr.rel (0) target = $region249
    $region248: #{tpu_custom_call.1} parent=1 // pred_region
      %s319 = ssub.s32 2, 1
      loop: start=0, step=1, limit=1
      $region250: #{tpu_custom_call.1} parent=248 // loop_pre_header
        _
      $region251: #{tpu_custom_call.1} parent=248 // loop_header
        %s321 = sphi 0, %s325
        %p322 = scmp.ge.s32.totalorder %s321, 1
        %s326 = sphi %s312, %s312
        %s327 = sphi %s313, %s313
      $region252: #{tpu_custom_call.1} parent=248 // loop_header_branch
        %324 = sbr.rel (%p322) target = $region256
      $region253: #{tpu_custom_call.1} parent=248 // loop_body
        %v328 = vld [vmem:[%s326] sm:%s319]
        %329 = vst [vmem:[%s327] sm:%s319] %v328
      $region254: #{tpu_custom_call.1} parent=248 // loop_footer
        %s325 = sadd.s32 1, %s321
      $region255: #{tpu_custom_call.1} parent=248 // loop_footer_branch
        %320 = sbr.rel target = $region251
      $region256: #{tpu_custom_call.1} parent=248 // loop_exit
        _
    $region249: #{tpu_custom_call.1} parent=1 // pred_fallthru
      _
    // Predicated region
    $region268: #{tpu_custom_call.1} parent=1 // pred_check
      _
    $region269: #{tpu_custom_call.1} parent=1 // pred_check_branch
      %346 = sbr.rel (0) target = $region271
    $region270: #{tpu_custom_call.1} parent=1 // pred_region
      %347 = vsyncadd [#allocation3], 16
    $region271: #{tpu_custom_call.1} parent=1 // pred_fallthru
      _
    %s348 = sld [smem:[#allocation5 + $0x81]]
    %s349 = scalar_lea.vmem %s1, %s348
    %s350 = scalar_lea.vmem [#allocation2], 9
    // Predicated region
    $region272: #{tpu_custom_call.1} parent=1 // pred_check
      _
    $region273: #{tpu_custom_call.1} parent=1 // pred_check_branch
      %352 = sbr.rel target = $region275
    $region274: #{tpu_custom_call.1} parent=1 // pred_region
      // Predicated region
      $region287: #{tpu_custom_call.1} parent=274 // pred_check
        _
      $region288: #{tpu_custom_call.1} parent=274 // pred_check_branch
        %368 = sbr.rel (0) target = $region290
      $region289: #{tpu_custom_call.1} parent=274 // pred_region
        %s370 = ssub.s32 2, 1
        loop: start=0, step=1, limit=1
        $region291: #{tpu_custom_call.1} parent=289 // loop_pre_header
          _
        $region292: #{tpu_custom_call.1} parent=289 // loop_header
          %s372 = sphi 0, %s376
          %p373 = scmp.ge.s32.totalorder %s372, 1
          %s377 = sphi %s349, %s349
          %s378 = sphi %s350, %s350
        $region293: #{tpu_custom_call.1} parent=289 // loop_header_branch
          %375 = sbr.rel (%p373) target = $region297
        $region294: #{tpu_custom_call.1} parent=289 // loop_body
          %v379 = vld [vmem:[%s377] sm:%s370]
          %380 = vst [vmem:[%s378] sm:%s370] %v379
        $region295: #{tpu_custom_call.1} parent=289 // loop_footer
          %s376 = sadd.s32 1, %s372
        $region296: #{tpu_custom_call.1} parent=289 // loop_footer_branch
          %371 = sbr.rel target = $region292
        $region297: #{tpu_custom_call.1} parent=289 // loop_exit
          _
      $region290: #{tpu_custom_call.1} parent=274 // pred_fallthru
        _
    $region275: #{tpu_custom_call.1} parent=1 // pred_fallthru
      _
    // Predicated region
    $region276: #{tpu_custom_call.1} parent=1 // pred_check
      _
    $region277: #{tpu_custom_call.1} parent=1 // pred_check_branch
      %354 = sbr.rel (0) target = $region279
    $region278: #{tpu_custom_call.1} parent=1 // pred_region
      %s356 = ssub.s32 2, 1
      loop: start=0, step=1, limit=1
      $region280: #{tpu_custom_call.1} parent=278 // loop_pre_header
        _
      $region281: #{tpu_custom_call.1} parent=278 // loop_header
        %s358 = sphi 0, %s362
        %p359 = scmp.ge.s32.totalorder %s358, 1
        %s363 = sphi %s349, %s349
        %s364 = sphi %s350, %s350
      $region282: #{tpu_custom_call.1} parent=278 // loop_header_branch
        %361 = sbr.rel (%p359) target = $region286
      $region283: #{tpu_custom_call.1} parent=278 // loop_body
        %v365 = vld [vmem:[%s363] sm:%s356]
        %366 = vst [vmem:[%s364] sm:%s356] %v365
      $region284: #{tpu_custom_call.1} parent=278 // loop_footer
        %s362 = sadd.s32 1, %s358
      $region285: #{tpu_custom_call.1} parent=278 // loop_footer_branch
        %357 = sbr.rel target = $region281
      $region286: #{tpu_custom_call.1} parent=278 // loop_exit
        _
    $region279: #{tpu_custom_call.1} parent=1 // pred_fallthru
      _
    // Predicated region
    $region298: #{tpu_custom_call.1} parent=1 // pred_check
      _
    $region299: #{tpu_custom_call.1} parent=1 // pred_check_branch
      %383 = sbr.rel (0) target = $region301
    $region300: #{tpu_custom_call.1} parent=1 // pred_region
      %384 = vsyncadd [#allocation3], 16
    $region301: #{tpu_custom_call.1} parent=1 // pred_fallthru
      _
    %s385 = sld [smem:[#allocation5 + $0x82]]
    %s386 = scalar_lea.vmem %s1, %s385
    %s387 = scalar_lea.vmem [#allocation2], 10
    // Predicated region
    $region302: #{tpu_custom_call.1} parent=1 // pred_check
      _
    $region303: #{tpu_custom_call.1} parent=1 // pred_check_branch
      %389 = sbr.rel target = $region305
    $region304: #{tpu_custom_call.1} parent=1 // pred_region
      // Predicated region
      $region317: #{tpu_custom_call.1} parent=304 // pred_check
        _
      $region318: #{tpu_custom_call.1} parent=304 // pred_check_branch
        %405 = sbr.rel (0) target = $region320
      $region319: #{tpu_custom_call.1} parent=304 // pred_region
        %s407 = ssub.s32 2, 1
        loop: start=0, step=1, limit=1
        $region321: #{tpu_custom_call.1} parent=319 // loop_pre_header
          _
        $region322: #{tpu_custom_call.1} parent=319 // loop_header
          %s409 = sphi 0, %s413
          %p410 = scmp.ge.s32.totalorder %s409, 1
          %s414 = sphi %s386, %s386
          %s415 = sphi %s387, %s387
        $region323: #{tpu_custom_call.1} parent=319 // loop_header_branch
          %412 = sbr.rel (%p410) target = $region327
        $region324: #{tpu_custom_call.1} parent=319 // loop_body
          %v416 = vld [vmem:[%s414] sm:%s407]
          %417 = vst [vmem:[%s415] sm:%s407] %v416
        $region325: #{tpu_custom_call.1} parent=319 // loop_footer
          %s413 = sadd.s32 1, %s409
        $region326: #{tpu_custom_call.1} parent=319 // loop_footer_branch
          %408 = sbr.rel target = $region322
        $region327: #{tpu_custom_call.1} parent=319 // loop_exit
          _
      $region320: #{tpu_custom_call.1} parent=304 // pred_fallthru
        _
    $region305: #{tpu_custom_call.1} parent=1 // pred_fallthru
      _
    // Predicated region
    $region306: #{tpu_custom_call.1} parent=1 // pred_check
      _
    $region307: #{tpu_custom_call.1} parent=1 // pred_check_branch
      %391 = sbr.rel (0) target = $region309
    $region308: #{tpu_custom_call.1} parent=1 // pred_region
      %s393 = ssub.s32 2, 1
      loop: start=0, step=1, limit=1
      $region310: #{tpu_custom_call.1} parent=308 // loop_pre_header
        _
      $region311: #{tpu_custom_call.1} parent=308 // loop_header
        %s395 = sphi 0, %s399
        %p396 = scmp.ge.s32.totalorder %s395, 1
        %s400 = sphi %s386, %s386
        %s401 = sphi %s387, %s387
      $region312: #{tpu_custom_call.1} parent=308 // loop_header_branch
        %398 = sbr.rel (%p396) target = $region316
      $region313: #{tpu_custom_call.1} parent=308 // loop_body
        %v402 = vld [vmem:[%s400] sm:%s393]
        %403 = vst [vmem:[%s401] sm:%s393] %v402
      $region314: #{tpu_custom_call.1} parent=308 // loop_footer
        %s399 = sadd.s32 1, %s395
      $region315: #{tpu_custom_call.1} parent=308 // loop_footer_branch
        %394 = sbr.rel target = $region311
      $region316: #{tpu_custom_call.1} parent=308 // loop_exit
        _
    $region309: #{tpu_custom_call.1} parent=1 // pred_fallthru
      _
    // Predicated region
    $region328: #{tpu_custom_call.1} parent=1 // pred_check
      _
    $region329: #{tpu_custom_call.1} parent=1 // pred_check_branch
      %420 = sbr.rel (0) target = $region331
    $region330: #{tpu_custom_call.1} parent=1 // pred_region
      %421 = vsyncadd [#allocation3], 16
    $region331: #{tpu_custom_call.1} parent=1 // pred_fallthru
      _
    %s422 = sld [smem:[#allocation5 + $0x83]]
    %s423 = scalar_lea.vmem %s1, %s422
    %s424 = scalar_lea.vmem [#allocation2], 11
    // Predicated region
    $region332: #{tpu_custom_call.1} parent=1 // pred_check
      _
    $region333: #{tpu_custom_call.1} parent=1 // pred_check_branch
      %426 = sbr.rel target = $region335
    $region334: #{tpu_custom_call.1} parent=1 // pred_region
      // Predicated region
      $region347: #{tpu_custom_call.1} parent=334 // pred_check
        _
      $region348: #{tpu_custom_call.1} parent=334 // pred_check_branch
        %442 = sbr.rel (0) target = $region350
      $region349: #{tpu_custom_call.1} parent=334 // pred_region
        %s444 = ssub.s32 2, 1
        loop: start=0, step=1, limit=1
        $region351: #{tpu_custom_call.1} parent=349 // loop_pre_header
          _
        $region352: #{tpu_custom_call.1} parent=349 // loop_header
          %s446 = sphi 0, %s450
          %p447 = scmp.ge.s32.totalorder %s446, 1
          %s451 = sphi %s423, %s423
          %s452 = sphi %s424, %s424
        $region353: #{tpu_custom_call.1} parent=349 // loop_header_branch
          %449 = sbr.rel (%p447) target = $region357
        $region354: #{tpu_custom_call.1} parent=349 // loop_body
          %v453 = vld [vmem:[%s451] sm:%s444]
          %454 = vst [vmem:[%s452] sm:%s444] %v453
        $region355: #{tpu_custom_call.1} parent=349 // loop_footer
          %s450 = sadd.s32 1, %s446
        $region356: #{tpu_custom_call.1} parent=349 // loop_footer_branch
          %445 = sbr.rel target = $region352
        $region357: #{tpu_custom_call.1} parent=349 // loop_exit
          _
      $region350: #{tpu_custom_call.1} parent=334 // pred_fallthru
        _
    $region335: #{tpu_custom_call.1} parent=1 // pred_fallthru
      _
    // Predicated region
    $region336: #{tpu_custom_call.1} parent=1 // pred_check
      _
    $region337: #{tpu_custom_call.1} parent=1 // pred_check_branch
      %428 = sbr.rel (0) target = $region339
    $region338: #{tpu_custom_call.1} parent=1 // pred_region
      %s430 = ssub.s32 2, 1
      loop: start=0, step=1, limit=1
      $region340: #{tpu_custom_call.1} parent=338 // loop_pre_header
        _
      $region341: #{tpu_custom_call.1} parent=338 // loop_header
        %s432 = sphi 0, %s436
        %p433 = scmp.ge.s32.totalorder %s432, 1
        %s437 = sphi %s423, %s423
        %s438 = sphi %s424, %s424
      $region342: #{tpu_custom_call.1} parent=338 // loop_header_branch
        %435 = sbr.rel (%p433) target = $region346
      $region343: #{tpu_custom_call.1} parent=338 // loop_body
        %v439 = vld [vmem:[%s437] sm:%s430]
        %440 = vst [vmem:[%s438] sm:%s430] %v439
      $region344: #{tpu_custom_call.1} parent=338 // loop_footer
        %s436 = sadd.s32 1, %s432
      $region345: #{tpu_custom_call.1} parent=338 // loop_footer_branch
        %431 = sbr.rel target = $region341
      $region346: #{tpu_custom_call.1} parent=338 // loop_exit
        _
    $region339: #{tpu_custom_call.1} parent=1 // pred_fallthru
      _
    // Predicated region
    $region358: #{tpu_custom_call.1} parent=1 // pred_check
      _
    $region359: #{tpu_custom_call.1} parent=1 // pred_check_branch
      %457 = sbr.rel (0) target = $region361
    $region360: #{tpu_custom_call.1} parent=1 // pred_region
      %458 = vsyncadd [#allocation3], 16
    $region361: #{tpu_custom_call.1} parent=1 // pred_fallthru
      _
    %s459 = sld [smem:[#allocation5 + $0x84]]
    %s460 = scalar_lea.vmem %s1, %s459
    %s461 = scalar_lea.vmem [#allocation2], 12
    // Predicated region
    $region362: #{tpu_custom_call.1} parent=1 // pred_check
      _
    $region363: #{tpu_custom_call.1} parent=1 // pred_check_branch
      %463 = sbr.rel target = $region365
    $region364: #{tpu_custom_call.1} parent=1 // pred_region
      // Predicated region
      $region377: #{tpu_custom_call.1} parent=364 // pred_check
        _
      $region378: #{tpu_custom_call.1} parent=364 // pred_check_branch
        %479 = sbr.rel (0) target = $region380
      $region379: #{tpu_custom_call.1} parent=364 // pred_region
        %s481 = ssub.s32 2, 1
        loop: start=0, step=1, limit=1
        $region381: #{tpu_custom_call.1} parent=379 // loop_pre_header
          _
        $region382: #{tpu_custom_call.1} parent=379 // loop_header
          %s483 = sphi 0, %s487
          %p484 = scmp.ge.s32.totalorder %s483, 1
          %s488 = sphi %s460, %s460
          %s489 = sphi %s461, %s461
        $region383: #{tpu_custom_call.1} parent=379 // loop_header_branch
          %486 = sbr.rel (%p484) target = $region387
        $region384: #{tpu_custom_call.1} parent=379 // loop_body
          %v490 = vld [vmem:[%s488] sm:%s481]
          %491 = vst [vmem:[%s489] sm:%s481] %v490
        $region385: #{tpu_custom_call.1} parent=379 // loop_footer
          %s487 = sadd.s32 1, %s483
        $region386: #{tpu_custom_call.1} parent=379 // loop_footer_branch
          %482 = sbr.rel target = $region382
        $region387: #{tpu_custom_call.1} parent=379 // loop_exit
          _
      $region380: #{tpu_custom_call.1} parent=364 // pred_fallthru
        _
    $region365: #{tpu_custom_call.1} parent=1 // pred_fallthru
      _
    // Predicated region
    $region366: #{tpu_custom_call.1} parent=1 // pred_check
      _
    $region367: #{tpu_custom_call.1} parent=1 // pred_check_branch
      %465 = sbr.rel (0) target = $region369
    $region368: #{tpu_custom_call.1} parent=1 // pred_region
      %s467 = ssub.s32 2, 1
      loop: start=0, step=1, limit=1
      $region370: #{tpu_custom_call.1} parent=368 // loop_pre_header
        _
      $region371: #{tpu_custom_call.1} parent=368 // loop_header
        %s469 = sphi 0, %s473
        %p470 = scmp.ge.s32.totalorder %s469, 1
        %s474 = sphi %s460, %s460
        %s475 = sphi %s461, %s461
      $region372: #{tpu_custom_call.1} parent=368 // loop_header_branch
        %472 = sbr.rel (%p470) target = $region376
      $region373: #{tpu_custom_call.1} parent=368 // loop_body
        %v476 = vld [vmem:[%s474] sm:%s467]
        %477 = vst [vmem:[%s475] sm:%s467] %v476
      $region374: #{tpu_custom_call.1} parent=368 // loop_footer
        %s473 = sadd.s32 1, %s469
      $region375: #{tpu_custom_call.1} parent=368 // loop_footer_branch
        %468 = sbr.rel target = $region371
      $region376: #{tpu_custom_call.1} parent=368 // loop_exit
        _
    $region369: #{tpu_custom_call.1} parent=1 // pred_fallthru
      _
    // Predicated region
    $region388: #{tpu_custom_call.1} parent=1 // pred_check
      _
    $region389: #{tpu_custom_call.1} parent=1 // pred_check_branch
      %494 = sbr.rel (0) target = $region391
    $region390: #{tpu_custom_call.1} parent=1 // pred_region
      %495 = vsyncadd [#allocation3], 16
    $region391: #{tpu_custom_call.1} parent=1 // pred_fallthru
      _
    %s496 = sld [smem:[#allocation5 + $0x85]]
    %s497 = scalar_lea.vmem %s1, %s496
    %s498 = scalar_lea.vmem [#allocation2], 13
    // Predicated region
    $region392: #{tpu_custom_call.1} parent=1 // pred_check
      _
    $region393: #{tpu_custom_call.1} parent=1 // pred_check_branch
      %500 = sbr.rel target = $region395
    $region394: #{tpu_custom_call.1} parent=1 // pred_region
      // Predicated region
      $region407: #{tpu_custom_call.1} parent=394 // pred_check
        _
      $region408: #{tpu_custom_call.1} parent=394 // pred_check_branch
        %516 = sbr.rel (0) target = $region410
      $region409: #{tpu_custom_call.1} parent=394 // pred_region
        %s518 = ssub.s32 2, 1
        loop: start=0, step=1, limit=1
        $region411: #{tpu_custom_call.1} parent=409 // loop_pre_header
          _
        $region412: #{tpu_custom_call.1} parent=409 // loop_header
          %s520 = sphi 0, %s524
          %p521 = scmp.ge.s32.totalorder %s520, 1
          %s525 = sphi %s497, %s497
          %s526 = sphi %s498, %s498
        $region413: #{tpu_custom_call.1} parent=409 // loop_header_branch
          %523 = sbr.rel (%p521) target = $region417
        $region414: #{tpu_custom_call.1} parent=409 // loop_body
          %v527 = vld [vmem:[%s525] sm:%s518]
          %528 = vst [vmem:[%s526] sm:%s518] %v527
        $region415: #{tpu_custom_call.1} parent=409 // loop_footer
          %s524 = sadd.s32 1, %s520
        $region416: #{tpu_custom_call.1} parent=409 // loop_footer_branch
          %519 = sbr.rel target = $region412
        $region417: #{tpu_custom_call.1} parent=409 // loop_exit
          _
      $region410: #{tpu_custom_call.1} parent=394 // pred_fallthru
        _
    $region395: #{tpu_custom_call.1} parent=1 // pred_fallthru
      _
    // Predicated region
    $region396: #{tpu_custom_call.1} parent=1 // pred_check
      _
    $region397: #{tpu_custom_call.1} parent=1 // pred_check_branch
      %502 = sbr.rel (0) target = $region399
    $region398: #{tpu_custom_call.1} parent=1 // pred_region
      %s504 = ssub.s32 2, 1
      loop: start=0, step=1, limit=1
      $region400: #{tpu_custom_call.1} parent=398 // loop_pre_header
        _
      $region401: #{tpu_custom_call.1} parent=398 // loop_header
        %s506 = sphi 0, %s510
        %p507 = scmp.ge.s32.totalorder %s506, 1
        %s511 = sphi %s497, %s497
        %s512 = sphi %s498, %s498
      $region402: #{tpu_custom_call.1} parent=398 // loop_header_branch
        %509 = sbr.rel (%p507) target = $region406
      $region403: #{tpu_custom_call.1} parent=398 // loop_body
        %v513 = vld [vmem:[%s511] sm:%s504]
        %514 = vst [vmem:[%s512] sm:%s504] %v513
      $region404: #{tpu_custom_call.1} parent=398 // loop_footer
        %s510 = sadd.s32 1, %s506
      $region405: #{tpu_custom_call.1} parent=398 // loop_footer_branch
        %505 = sbr.rel target = $region401
      $region406: #{tpu_custom_call.1} parent=398 // loop_exit
        _
    $region399: #{tpu_custom_call.1} parent=1 // pred_fallthru
      _
    // Predicated region
    $region418: #{tpu_custom_call.1} parent=1 // pred_check
      _
    $region419: #{tpu_custom_call.1} parent=1 // pred_check_branch
      %531 = sbr.rel (0) target = $region421
    $region420: #{tpu_custom_call.1} parent=1 // pred_region
      %532 = vsyncadd [#allocation3], 16
    $region421: #{tpu_custom_call.1} parent=1 // pred_fallthru
      _
    %s533 = sld [smem:[#allocation5 + $0x86]]
    %s534 = scalar_lea.vmem %s1, %s533
    %s535 = scalar_lea.vmem [#allocation2], 14
    // Predicated region
    $region422: #{tpu_custom_call.1} parent=1 // pred_check
      _
    $region423: #{tpu_custom_call.1} parent=1 // pred_check_branch
      %537 = sbr.rel target = $region425
    $region424: #{tpu_custom_call.1} parent=1 // pred_region
      // Predicated region
      $region437: #{tpu_custom_call.1} parent=424 // pred_check
        _
      $region438: #{tpu_custom_call.1} parent=424 // pred_check_branch
        %553 = sbr.rel (0) target = $region440
      $region439: #{tpu_custom_call.1} parent=424 // pred_region
        %s555 = ssub.s32 2, 1
        loop: start=0, step=1, limit=1
        $region441: #{tpu_custom_call.1} parent=439 // loop_pre_header
          _
        $region442: #{tpu_custom_call.1} parent=439 // loop_header
          %s557 = sphi 0, %s561
          %p558 = scmp.ge.s32.totalorder %s557, 1
          %s562 = sphi %s534, %s534
          %s563 = sphi %s535, %s535
        $region443: #{tpu_custom_call.1} parent=439 // loop_header_branch
          %560 = sbr.rel (%p558) target = $region447
        $region444: #{tpu_custom_call.1} parent=439 // loop_body
          %v564 = vld [vmem:[%s562] sm:%s555]
          %565 = vst [vmem:[%s563] sm:%s555] %v564
        $region445: #{tpu_custom_call.1} parent=439 // loop_footer
          %s561 = sadd.s32 1, %s557
        $region446: #{tpu_custom_call.1} parent=439 // loop_footer_branch
          %556 = sbr.rel target = $region442
        $region447: #{tpu_custom_call.1} parent=439 // loop_exit
          _
      $region440: #{tpu_custom_call.1} parent=424 // pred_fallthru
        _
    $region425: #{tpu_custom_call.1} parent=1 // pred_fallthru
      _
    // Predicated region
    $region426: #{tpu_custom_call.1} parent=1 // pred_check
      _
    $region427: #{tpu_custom_call.1} parent=1 // pred_check_branch
      %539 = sbr.rel (0) target = $region429
    $region428: #{tpu_custom_call.1} parent=1 // pred_region
      %s541 = ssub.s32 2, 1
      loop: start=0, step=1, limit=1
      $region430: #{tpu_custom_call.1} parent=428 // loop_pre_header
        _
      $region431: #{tpu_custom_call.1} parent=428 // loop_header
        %s543 = sphi 0, %s547
        %p544 = scmp.ge.s32.totalorder %s543, 1
        %s548 = sphi %s534, %s534
        %s549 = sphi %s535, %s535
      $region432: #{tpu_custom_call.1} parent=428 // loop_header_branch
        %546 = sbr.rel (%p544) target = $region436
      $region433: #{tpu_custom_call.1} parent=428 // loop_body
        %v550 = vld [vmem:[%s548] sm:%s541]
        %551 = vst [vmem:[%s549] sm:%s541] %v550
      $region434: #{tpu_custom_call.1} parent=428 // loop_footer
        %s547 = sadd.s32 1, %s543
      $region435: #{tpu_custom_call.1} parent=428 // loop_footer_branch
        %542 = sbr.rel target = $region431
      $region436: #{tpu_custom_call.1} parent=428 // loop_exit
        _
    $region429: #{tpu_custom_call.1} parent=1 // pred_fallthru
      _
    // Predicated region
    $region448: #{tpu_custom_call.1} parent=1 // pred_check
      _
    $region449: #{tpu_custom_call.1} parent=1 // pred_check_branch
      %568 = sbr.rel (0) target = $region451
    $region450: #{tpu_custom_call.1} parent=1 // pred_region
      %569 = vsyncadd [#allocation3], 16
    $region451: #{tpu_custom_call.1} parent=1 // pred_fallthru
      _
    %s570 = sld [smem:[#allocation5 + $0x87]]
    %s571 = scalar_lea.vmem %s1, %s570
    %s572 = scalar_lea.vmem [#allocation2], 15
    // Predicated region
    $region452: #{tpu_custom_call.1} parent=1 // pred_check
      _
    $region453: #{tpu_custom_call.1} parent=1 // pred_check_branch
      %574 = sbr.rel target = $region455
    $region454: #{tpu_custom_call.1} parent=1 // pred_region
      // Predicated region
      $region467: #{tpu_custom_call.1} parent=454 // pred_check
        _
      $region468: #{tpu_custom_call.1} parent=454 // pred_check_branch
        %590 = sbr.rel (0) target = $region470
      $region469: #{tpu_custom_call.1} parent=454 // pred_region
        %s592 = ssub.s32 2, 1
        loop: start=0, step=1, limit=1
        $region471: #{tpu_custom_call.1} parent=469 // loop_pre_header
          _
        $region472: #{tpu_custom_call.1} parent=469 // loop_header
          %s594 = sphi 0, %s598
          %p595 = scmp.ge.s32.totalorder %s594, 1
          %s599 = sphi %s571, %s571
          %s600 = sphi %s572, %s572
        $region473: #{tpu_custom_call.1} parent=469 // loop_header_branch
          %597 = sbr.rel (%p595) target = $region477
        $region474: #{tpu_custom_call.1} parent=469 // loop_body
          %v601 = vld [vmem:[%s599] sm:%s592]
          %602 = vst [vmem:[%s600] sm:%s592] %v601
        $region475: #{tpu_custom_call.1} parent=469 // loop_footer
          %s598 = sadd.s32 1, %s594
        $region476: #{tpu_custom_call.1} parent=469 // loop_footer_branch
          %593 = sbr.rel target = $region472
        $region477: #{tpu_custom_call.1} parent=469 // loop_exit
          _
      $region470: #{tpu_custom_call.1} parent=454 // pred_fallthru
        _
    $region455: #{tpu_custom_call.1} parent=1 // pred_fallthru
      _
    // Predicated region
    $region456: #{tpu_custom_call.1} parent=1 // pred_check
      _
    $region457: #{tpu_custom_call.1} parent=1 // pred_check_branch
      %576 = sbr.rel (0) target = $region459
    $region458: #{tpu_custom_call.1} parent=1 // pred_region
      %s578 = ssub.s32 2, 1
      loop: start=0, step=1, limit=1
      $region460: #{tpu_custom_call.1} parent=458 // loop_pre_header
        _
      $region461: #{tpu_custom_call.1} parent=458 // loop_header
        %s580 = sphi 0, %s584
        %p581 = scmp.ge.s32.totalorder %s580, 1
        %s585 = sphi %s571, %s571
        %s586 = sphi %s572, %s572
      $region462: #{tpu_custom_call.1} parent=458 // loop_header_branch
        %583 = sbr.rel (%p581) target = $region466
      $region463: #{tpu_custom_call.1} parent=458 // loop_body
        %v587 = vld [vmem:[%s585] sm:%s578]
        %588 = vst [vmem:[%s586] sm:%s578] %v587
      $region464: #{tpu_custom_call.1} parent=458 // loop_footer
        %s584 = sadd.s32 1, %s580
      $region465: #{tpu_custom_call.1} parent=458 // loop_footer_branch
        %579 = sbr.rel target = $region461
      $region466: #{tpu_custom_call.1} parent=458 // loop_exit
        _
    $region459: #{tpu_custom_call.1} parent=1 // pred_fallthru
      _
    // Predicated region
    $region478: #{tpu_custom_call.1} parent=1 // pred_check
      _
    $region479: #{tpu_custom_call.1} parent=1 // pred_check_branch
      %605 = sbr.rel (0) target = $region481
    $region480: #{tpu_custom_call.1} parent=1 // pred_region
      %606 = vsyncadd [#allocation3], 16
    $region481: #{tpu_custom_call.1} parent=1 // pred_fallthru
      _
    %s607 = sld [smem:[#allocation5 + $0x100]]
    %s608 = scalar_lea.vmem %s1, %s607
    %s609 = scalar_lea.vmem [#allocation2], 16
    // Predicated region
    $region482: #{tpu_custom_call.1} parent=1 // pred_check
      _
    $region483: #{tpu_custom_call.1} parent=1 // pred_check_branch
      %611 = sbr.rel target = $region485
    $region484: #{tpu_custom_call.1} parent=1 // pred_region
      // Predicated region
      $region497: #{tpu_custom_call.1} parent=484 // pred_check
        _
      $region498: #{tpu_custom_call.1} parent=484 // pred_check_branch
        %627 = sbr.rel (0) target = $region500
      $region499: #{tpu_custom_call.1} parent=484 // pred_region
        %s629 = ssub.s32 2, 1
        loop: start=0, step=1, limit=1
        $region501: #{tpu_custom_call.1} parent=499 // loop_pre_header
          _
        $region502: #{tpu_custom_call.1} parent=499 // loop_header
          %s631 = sphi 0, %s635
          %p632 = scmp.ge.s32.totalorder %s631, 1
          %s636 = sphi %s608, %s608
          %s637 = sphi %s609, %s609
        $region503: #{tpu_custom_call.1} parent=499 // loop_header_branch
          %634 = sbr.rel (%p632) target = $region507
        $region504: #{tpu_custom_call.1} parent=499 // loop_body
          %v638 = vld [vmem:[%s636] sm:%s629]
          %639 = vst [vmem:[%s637] sm:%s629] %v638
        $region505: #{tpu_custom_call.1} parent=499 // loop_footer
          %s635 = sadd.s32 1, %s631
        $region506: #{tpu_custom_call.1} parent=499 // loop_footer_branch
          %630 = sbr.rel target = $region502
        $region507: #{tpu_custom_call.1} parent=499 // loop_exit
          _
      $region500: #{tpu_custom_call.1} parent=484 // pred_fallthru
        _
    $region485: #{tpu_custom_call.1} parent=1 // pred_fallthru
      _
    // Predicated region
    $region486: #{tpu_custom_call.1} parent=1 // pred_check
      _
    $region487: #{tpu_custom_call.1} parent=1 // pred_check_branch
      %613 = sbr.rel (0) target = $region489
    $region488: #{tpu_custom_call.1} parent=1 // pred_region
      %s615 = ssub.s32 2, 1
      loop: start=0, step=1, limit=1
      $region490: #{tpu_custom_call.1} parent=488 // loop_pre_header
        _
      $region491: #{tpu_custom_call.1} parent=488 // loop_header
        %s617 = sphi 0, %s621
        %p618 = scmp.ge.s32.totalorder %s617, 1
        %s622 = sphi %s608, %s608
        %s623 = sphi %s609, %s609
      $region492: #{tpu_custom_call.1} parent=488 // loop_header_branch
        %620 = sbr.rel (%p618) target = $region496
      $region493: #{tpu_custom_call.1} parent=488 // loop_body
        %v624 = vld [vmem:[%s622] sm:%s615]
        %625 = vst [vmem:[%s623] sm:%s615] %v624
      $region494: #{tpu_custom_call.1} parent=488 // loop_footer
        %s621 = sadd.s32 1, %s617
      $region495: #{tpu_custom_call.1} parent=488 // loop_footer_branch
        %616 = sbr.rel target = $region491
      $region496: #{tpu_custom_call.1} parent=488 // loop_exit
        _
    $region489: #{tpu_custom_call.1} parent=1 // pred_fallthru
      _
    // Predicated region
    $region508: #{tpu_custom_call.1} parent=1 // pred_check
      _
    $region509: #{tpu_custom_call.1} parent=1 // pred_check_branch
      %642 = sbr.rel (0) target = $region511
    $region510: #{tpu_custom_call.1} parent=1 // pred_region
      %643 = vsyncadd [#allocation3], 16
    $region511: #{tpu_custom_call.1} parent=1 // pred_fallthru
      _
    %s644 = sld [smem:[#allocation5 + $0x101]]
    %s645 = scalar_lea.vmem %s1, %s644
    %s646 = scalar_lea.vmem [#allocation2], 17
    // Predicated region
    $region512: #{tpu_custom_call.1} parent=1 // pred_check
      _
    $region513: #{tpu_custom_call.1} parent=1 // pred_check_branch
      %648 = sbr.rel target = $region515
    $region514: #{tpu_custom_call.1} parent=1 // pred_region
      // Predicated region
      $region527: #{tpu_custom_call.1} parent=514 // pred_check
        _
      $region528: #{tpu_custom_call.1} parent=514 // pred_check_branch
        %664 = sbr.rel (0) target = $region530
      $region529: #{tpu_custom_call.1} parent=514 // pred_region
        %s666 = ssub.s32 2, 1
        loop: start=0, step=1, limit=1
        $region531: #{tpu_custom_call.1} parent=529 // loop_pre_header
          _
        $region532: #{tpu_custom_call.1} parent=529 // loop_header
          %s668 = sphi 0, %s672
          %p669 = scmp.ge.s32.totalorder %s668, 1
          %s673 = sphi %s645, %s645
          %s674 = sphi %s646, %s646
        $region533: #{tpu_custom_call.1} parent=529 // loop_header_branch
          %671 = sbr.rel (%p669) target = $region537
        $region534: #{tpu_custom_call.1} parent=529 // loop_body
          %v675 = vld [vmem:[%s673] sm:%s666]
          %676 = vst [vmem:[%s674] sm:%s666] %v675
        $region535: #{tpu_custom_call.1} parent=529 // loop_footer
          %s672 = sadd.s32 1, %s668
        $region536: #{tpu_custom_call.1} parent=529 // loop_footer_branch
          %667 = sbr.rel target = $region532
        $region537: #{tpu_custom_call.1} parent=529 // loop_exit
          _
      $region530: #{tpu_custom_call.1} parent=514 // pred_fallthru
        _
    $region515: #{tpu_custom_call.1} parent=1 // pred_fallthru
      _
    // Predicated region
    $region516: #{tpu_custom_call.1} parent=1 // pred_check
      _
    $region517: #{tpu_custom_call.1} parent=1 // pred_check_branch
      %650 = sbr.rel (0) target = $region519
    $region518: #{tpu_custom_call.1} parent=1 // pred_region
      %s652 = ssub.s32 2, 1
      loop: start=0, step=1, limit=1
      $region520: #{tpu_custom_call.1} parent=518 // loop_pre_header
        _
      $region521: #{tpu_custom_call.1} parent=518 // loop_header
        %s654 = sphi 0, %s658
        %p655 = scmp.ge.s32.totalorder %s654, 1
        %s659 = sphi %s645, %s645
        %s660 = sphi %s646, %s646
      $region522: #{tpu_custom_call.1} parent=518 // loop_header_branch
        %657 = sbr.rel (%p655) target = $region526
      $region523: #{tpu_custom_call.1} parent=518 // loop_body
        %v661 = vld [vmem:[%s659] sm:%s652]
        %662 = vst [vmem:[%s660] sm:%s652] %v661
      $region524: #{tpu_custom_call.1} parent=518 // loop_footer
        %s658 = sadd.s32 1, %s654
      $region525: #{tpu_custom_call.1} parent=518 // loop_footer_branch
        %653 = sbr.rel target = $region521
      $region526: #{tpu_custom_call.1} parent=518 // loop_exit
        _
    $region519: #{tpu_custom_call.1} parent=1 // pred_fallthru
      _
    // Predicated region
    $region538: #{tpu_custom_call.1} parent=1 // pred_check
      _
    $region539: #{tpu_custom_call.1} parent=1 // pred_check_branch
      %679 = sbr.rel (0) target = $region541
    $region540: #{tpu_custom_call.1} parent=1 // pred_region
      %680 = vsyncadd [#allocation3], 16
    $region541: #{tpu_custom_call.1} parent=1 // pred_fallthru
      _
    %s681 = sld [smem:[#allocation5 + $0x102]]
    %s682 = scalar_lea.vmem %s1, %s681
    %s683 = scalar_lea.vmem [#allocation2], 18
    // Predicated region
    $region542: #{tpu_custom_call.1} parent=1 // pred_check
      _
    $region543: #{tpu_custom_call.1} parent=1 // pred_check_branch
      %685 = sbr.rel target = $region545
    $region544: #{tpu_custom_call.1} parent=1 // pred_region
      // Predicated region
      $region557: #{tpu_custom_call.1} parent=544 // pred_check
        _
      $region558: #{tpu_custom_call.1} parent=544 // pred_check_branch
        %701 = sbr.rel (0) target = $region560
      $region559: #{tpu_custom_call.1} parent=544 // pred_region
        %s703 = ssub.s32 2, 1
        loop: start=0, step=1, limit=1
        $region561: #{tpu_custom_call.1} parent=559 // loop_pre_header
          _
        $region562: #{tpu_custom_call.1} parent=559 // loop_header
          %s705 = sphi 0, %s709
          %p706 = scmp.ge.s32.totalorder %s705, 1
          %s710 = sphi %s682, %s682
          %s711 = sphi %s683, %s683
        $region563: #{tpu_custom_call.1} parent=559 // loop_header_branch
          %708 = sbr.rel (%p706) target = $region567
        $region564: #{tpu_custom_call.1} parent=559 // loop_body
          %v712 = vld [vmem:[%s710] sm:%s703]
          %713 = vst [vmem:[%s711] sm:%s703] %v712
        $region565: #{tpu_custom_call.1} parent=559 // loop_footer
          %s709 = sadd.s32 1, %s705
        $region566: #{tpu_custom_call.1} parent=559 // loop_footer_branch
          %704 = sbr.rel target = $region562
        $region567: #{tpu_custom_call.1} parent=559 // loop_exit
          _
      $region560: #{tpu_custom_call.1} parent=544 // pred_fallthru
        _
    $region545: #{tpu_custom_call.1} parent=1 // pred_fallthru
      _
    // Predicated region
    $region546: #{tpu_custom_call.1} parent=1 // pred_check
      _
    $region547: #{tpu_custom_call.1} parent=1 // pred_check_branch
      %687 = sbr.rel (0) target = $region549
    $region548: #{tpu_custom_call.1} parent=1 // pred_region
      %s689 = ssub.s32 2, 1
      loop: start=0, step=1, limit=1
      $region550: #{tpu_custom_call.1} parent=548 // loop_pre_header
        _
      $region551: #{tpu_custom_call.1} parent=548 // loop_header
        %s691 = sphi 0, %s695
        %p692 = scmp.ge.s32.totalorder %s691, 1
        %s696 = sphi %s682, %s682
        %s697 = sphi %s683, %s683
      $region552: #{tpu_custom_call.1} parent=548 // loop_header_branch
        %694 = sbr.rel (%p692) target = $region556
      $region553: #{tpu_custom_call.1} parent=548 // loop_body
        %v698 = vld [vmem:[%s696] sm:%s689]
        %699 = vst [vmem:[%s697] sm:%s689] %v698
      $region554: #{tpu_custom_call.1} parent=548 // loop_footer
        %s695 = sadd.s32 1, %s691
      $region555: #{tpu_custom_call.1} parent=548 // loop_footer_branch
        %690 = sbr.rel target = $region551
      $region556: #{tpu_custom_call.1} parent=548 // loop_exit
        _
    $region549: #{tpu_custom_call.1} parent=1 // pred_fallthru
      _
    // Predicated region
    $region568: #{tpu_custom_call.1} parent=1 // pred_check
      _
    $region569: #{tpu_custom_call.1} parent=1 // pred_check_branch
      %716 = sbr.rel (0) target = $region571
    $region570: #{tpu_custom_call.1} parent=1 // pred_region
      %717 = vsyncadd [#allocation3], 16
    $region571: #{tpu_custom_call.1} parent=1 // pred_fallthru
      _
    %s718 = sld [smem:[#allocation5 + $0x103]]
    %s719 = scalar_lea.vmem %s1, %s718
    %s720 = scalar_lea.vmem [#allocation2], 19
    // Predicated region
    $region572: #{tpu_custom_call.1} parent=1 // pred_check
      _
    $region573: #{tpu_custom_call.1} parent=1 // pred_check_branch
      %722 = sbr.rel target = $region575
    $region574: #{tpu_custom_call.1} parent=1 // pred_region
      // Predicated region
      $region587: #{tpu_custom_call.1} parent=574 // pred_check
        _
      $region588: #{tpu_custom_call.1} parent=574 // pred_check_branch
        %738 = sbr.rel (0) target = $region590
      $region589: #{tpu_custom_call.1} parent=574 // pred_region
        %s740 = ssub.s32 2, 1
        loop: start=0, step=1, limit=1
        $region591: #{tpu_custom_call.1} parent=589 // loop_pre_header
          _
        $region592: #{tpu_custom_call.1} parent=589 // loop_header
          %s742 = sphi 0, %s746
          %p743 = scmp.ge.s32.totalorder %s742, 1
          %s747 = sphi %s719, %s719
          %s748 = sphi %s720, %s720
        $region593: #{tpu_custom_call.1} parent=589 // loop_header_branch
          %745 = sbr.rel (%p743) target = $region597
        $region594: #{tpu_custom_call.1} parent=589 // loop_body
          %v749 = vld [vmem:[%s747] sm:%s740]
          %750 = vst [vmem:[%s748] sm:%s740] %v749
        $region595: #{tpu_custom_call.1} parent=589 // loop_footer
          %s746 = sadd.s32 1, %s742
        $region596: #{tpu_custom_call.1} parent=589 // loop_footer_branch
          %741 = sbr.rel target = $region592
        $region597: #{tpu_custom_call.1} parent=589 // loop_exit
          _
      $region590: #{tpu_custom_call.1} parent=574 // pred_fallthru
        _
    $region575: #{tpu_custom_call.1} parent=1 // pred_fallthru
      _
    // Predicated region
    $region576: #{tpu_custom_call.1} parent=1 // pred_check
      _
    $region577: #{tpu_custom_call.1} parent=1 // pred_check_branch
      %724 = sbr.rel (0) target = $region579
    $region578: #{tpu_custom_call.1} parent=1 // pred_region
      %s726 = ssub.s32 2, 1
      loop: start=0, step=1, limit=1
      $region580: #{tpu_custom_call.1} parent=578 // loop_pre_header
        _
      $region581: #{tpu_custom_call.1} parent=578 // loop_header
        %s728 = sphi 0, %s732
        %p729 = scmp.ge.s32.totalorder %s728, 1
        %s733 = sphi %s719, %s719
        %s734 = sphi %s720, %s720
      $region582: #{tpu_custom_call.1} parent=578 // loop_header_branch
        %731 = sbr.rel (%p729) target = $region586
      $region583: #{tpu_custom_call.1} parent=578 // loop_body
        %v735 = vld [vmem:[%s733] sm:%s726]
        %736 = vst [vmem:[%s734] sm:%s726] %v735
      $region584: #{tpu_custom_call.1} parent=578 // loop_footer
        %s732 = sadd.s32 1, %s728
      $region585: #{tpu_custom_call.1} parent=578 // loop_footer_branch
        %727 = sbr.rel target = $region581
      $region586: #{tpu_custom_call.1} parent=578 // loop_exit
        _
    $region579: #{tpu_custom_call.1} parent=1 // pred_fallthru
      _
    // Predicated region
    $region598: #{tpu_custom_call.1} parent=1 // pred_check
      _
    $region599: #{tpu_custom_call.1} parent=1 // pred_check_branch
      %753 = sbr.rel (0) target = $region601
    $region600: #{tpu_custom_call.1} parent=1 // pred_region
      %754 = vsyncadd [#allocation3], 16
    $region601: #{tpu_custom_call.1} parent=1 // pred_fallthru
      _
    %s755 = sld [smem:[#allocation5 + $0x104]]
    %s756 = scalar_lea.vmem %s1, %s755
    %s757 = scalar_lea.vmem [#allocation2], 20
    // Predicated region
    $region602: #{tpu_custom_call.1} parent=1 // pred_check
      _
    $region603: #{tpu_custom_call.1} parent=1 // pred_check_branch
      %759 = sbr.rel target = $region605
    $region604: #{tpu_custom_call.1} parent=1 // pred_region
      // Predicated region
      $region617: #{tpu_custom_call.1} parent=604 // pred_check
        _
      $region618: #{tpu_custom_call.1} parent=604 // pred_check_branch
        %775 = sbr.rel (0) target = $region620
      $region619: #{tpu_custom_call.1} parent=604 // pred_region
        %s777 = ssub.s32 2, 1
        loop: start=0, step=1, limit=1
        $region621: #{tpu_custom_call.1} parent=619 // loop_pre_header
          _
        $region622: #{tpu_custom_call.1} parent=619 // loop_header
          %s779 = sphi 0, %s783
          %p780 = scmp.ge.s32.totalorder %s779, 1
          %s784 = sphi %s756, %s756
          %s785 = sphi %s757, %s757
        $region623: #{tpu_custom_call.1} parent=619 // loop_header_branch
          %782 = sbr.rel (%p780) target = $region627
        $region624: #{tpu_custom_call.1} parent=619 // loop_body
          %v786 = vld [vmem:[%s784] sm:%s777]
          %787 = vst [vmem:[%s785] sm:%s777] %v786
        $region625: #{tpu_custom_call.1} parent=619 // loop_footer
          %s783 = sadd.s32 1, %s779
        $region626: #{tpu_custom_call.1} parent=619 // loop_footer_branch
          %778 = sbr.rel target = $region622
        $region627: #{tpu_custom_call.1} parent=619 // loop_exit
          _
      $region620: #{tpu_custom_call.1} parent=604 // pred_fallthru
        _
    $region605: #{tpu_custom_call.1} parent=1 // pred_fallthru
      _
    // Predicated region
    $region606: #{tpu_custom_call.1} parent=1 // pred_check
      _
    $region607: #{tpu_custom_call.1} parent=1 // pred_check_branch
      %761 = sbr.rel (0) target = $region609
    $region608: #{tpu_custom_call.1} parent=1 // pred_region
      %s763 = ssub.s32 2, 1
      loop: start=0, step=1, limit=1
      $region610: #{tpu_custom_call.1} parent=608 // loop_pre_header
        _
      $region611: #{tpu_custom_call.1} parent=608 // loop_header
        %s765 = sphi 0, %s769
        %p766 = scmp.ge.s32.totalorder %s765, 1
        %s770 = sphi %s756, %s756
        %s771 = sphi %s757, %s757
      $region612: #{tpu_custom_call.1} parent=608 // loop_header_branch
        %768 = sbr.rel (%p766) target = $region616
      $region613: #{tpu_custom_call.1} parent=608 // loop_body
        %v772 = vld [vmem:[%s770] sm:%s763]
        %773 = vst [vmem:[%s771] sm:%s763] %v772
      $region614: #{tpu_custom_call.1} parent=608 // loop_footer
        %s769 = sadd.s32 1, %s765
      $region615: #{tpu_custom_call.1} parent=608 // loop_footer_branch
        %764 = sbr.rel target = $region611
      $region616: #{tpu_custom_call.1} parent=608 // loop_exit
        _
    $region609: #{tpu_custom_call.1} parent=1 // pred_fallthru
      _
    // Predicated region
    $region628: #{tpu_custom_call.1} parent=1 // pred_check
      _
    $region629: #{tpu_custom_call.1} parent=1 // pred_check_branch
      %790 = sbr.rel (0) target = $region631
    $region630: #{tpu_custom_call.1} parent=1 // pred_region
      %791 = vsyncadd [#allocation3], 16
    $region631: #{tpu_custom_call.1} parent=1 // pred_fallthru
      _
    %s792 = sld [smem:[#allocation5 + $0x105]]
    %s793 = scalar_lea.vmem %s1, %s792
    %s794 = scalar_lea.vmem [#allocation2], 21
    // Predicated region
    $region632: #{tpu_custom_call.1} parent=1 // pred_check
      _
    $region633: #{tpu_custom_call.1} parent=1 // pred_check_branch
      %796 = sbr.rel target = $region635
    $region634: #{tpu_custom_call.1} parent=1 // pred_region
      // Predicated region
      $region647: #{tpu_custom_call.1} parent=634 // pred_check
        _
      $region648: #{tpu_custom_call.1} parent=634 // pred_check_branch
        %812 = sbr.rel (0) target = $region650
      $region649: #{tpu_custom_call.1} parent=634 // pred_region
        %s814 = ssub.s32 2, 1
        loop: start=0, step=1, limit=1
        $region651: #{tpu_custom_call.1} parent=649 // loop_pre_header
          _
        $region652: #{tpu_custom_call.1} parent=649 // loop_header
          %s816 = sphi 0, %s820
          %p817 = scmp.ge.s32.totalorder %s816, 1
          %s821 = sphi %s793, %s793
          %s822 = sphi %s794, %s794
        $region653: #{tpu_custom_call.1} parent=649 // loop_header_branch
          %819 = sbr.rel (%p817) target = $region657
        $region654: #{tpu_custom_call.1} parent=649 // loop_body
          %v823 = vld [vmem:[%s821] sm:%s814]
          %824 = vst [vmem:[%s822] sm:%s814] %v823
        $region655: #{tpu_custom_call.1} parent=649 // loop_footer
          %s820 = sadd.s32 1, %s816
        $region656: #{tpu_custom_call.1} parent=649 // loop_footer_branch
          %815 = sbr.rel target = $region652
        $region657: #{tpu_custom_call.1} parent=649 // loop_exit
          _
      $region650: #{tpu_custom_call.1} parent=634 // pred_fallthru
        _
    $region635: #{tpu_custom_call.1} parent=1 // pred_fallthru
      _
    // Predicated region
    $region636: #{tpu_custom_call.1} parent=1 // pred_check
      _
    $region637: #{tpu_custom_call.1} parent=1 // pred_check_branch
      %798 = sbr.rel (0) target = $region639
    $region638: #{tpu_custom_call.1} parent=1 // pred_region
      %s800 = ssub.s32 2, 1
      loop: start=0, step=1, limit=1
      $region640: #{tpu_custom_call.1} parent=638 // loop_pre_header
        _
      $region641: #{tpu_custom_call.1} parent=638 // loop_header
        %s802 = sphi 0, %s806
        %p803 = scmp.ge.s32.totalorder %s802, 1
        %s807 = sphi %s793, %s793
        %s808 = sphi %s794, %s794
      $region642: #{tpu_custom_call.1} parent=638 // loop_header_branch
        %805 = sbr.rel (%p803) target = $region646
      $region643: #{tpu_custom_call.1} parent=638 // loop_body
        %v809 = vld [vmem:[%s807] sm:%s800]
        %810 = vst [vmem:[%s808] sm:%s800] %v809
      $region644: #{tpu_custom_call.1} parent=638 // loop_footer
        %s806 = sadd.s32 1, %s802
      $region645: #{tpu_custom_call.1} parent=638 // loop_footer_branch
        %801 = sbr.rel target = $region641
      $region646: #{tpu_custom_call.1} parent=638 // loop_exit
        _
    $region639: #{tpu_custom_call.1} parent=1 // pred_fallthru
      _
    // Predicated region
    $region658: #{tpu_custom_call.1} parent=1 // pred_check
      _
    $region659: #{tpu_custom_call.1} parent=1 // pred_check_branch
      %827 = sbr.rel (0) target = $region661
    $region660: #{tpu_custom_call.1} parent=1 // pred_region
      %828 = vsyncadd [#allocation3], 16
    $region661: #{tpu_custom_call.1} parent=1 // pred_fallthru
      _
    %s829 = sld [smem:[#allocation5 + $0x106]]
    %s830 = scalar_lea.vmem %s1, %s829
    %s831 = scalar_lea.vmem [#allocation2], 22
    // Predicated region
    $region662: #{tpu_custom_call.1} parent=1 // pred_check
      _
    $region663: #{tpu_custom_call.1} parent=1 // pred_check_branch
      %833 = sbr.rel target = $region665
    $region664: #{tpu_custom_call.1} parent=1 // pred_region
      // Predicated region
      $region677: #{tpu_custom_call.1} parent=664 // pred_check
        _
      $region678: #{tpu_custom_call.1} parent=664 // pred_check_branch
        %849 = sbr.rel (0) target = $region680
      $region679: #{tpu_custom_call.1} parent=664 // pred_region
        %s851 = ssub.s32 2, 1
        loop: start=0, step=1, limit=1
        $region681: #{tpu_custom_call.1} parent=679 // loop_pre_header
          _
        $region682: #{tpu_custom_call.1} parent=679 // loop_header
          %s853 = sphi 0, %s857
          %p854 = scmp.ge.s32.totalorder %s853, 1
          %s858 = sphi %s830, %s830
          %s859 = sphi %s831, %s831
        $region683: #{tpu_custom_call.1} parent=679 // loop_header_branch
          %856 = sbr.rel (%p854) target = $region687
        $region684: #{tpu_custom_call.1} parent=679 // loop_body
          %v860 = vld [vmem:[%s858] sm:%s851]
          %861 = vst [vmem:[%s859] sm:%s851] %v860
        $region685: #{tpu_custom_call.1} parent=679 // loop_footer
          %s857 = sadd.s32 1, %s853
        $region686: #{tpu_custom_call.1} parent=679 // loop_footer_branch
          %852 = sbr.rel target = $region682
        $region687: #{tpu_custom_call.1} parent=679 // loop_exit
          _
      $region680: #{tpu_custom_call.1} parent=664 // pred_fallthru
        _
    $region665: #{tpu_custom_call.1} parent=1 // pred_fallthru
      _
    // Predicated region
    $region666: #{tpu_custom_call.1} parent=1 // pred_check
      _
    $region667: #{tpu_custom_call.1} parent=1 // pred_check_branch
      %835 = sbr.rel (0) target = $region669
    $region668: #{tpu_custom_call.1} parent=1 // pred_region
      %s837 = ssub.s32 2, 1
      loop: start=0, step=1, limit=1
      $region670: #{tpu_custom_call.1} parent=668 // loop_pre_header
        _
      $region671: #{tpu_custom_call.1} parent=668 // loop_header
        %s839 = sphi 0, %s843
        %p840 = scmp.ge.s32.totalorder %s839, 1
        %s844 = sphi %s830, %s830
        %s845 = sphi %s831, %s831
      $region672: #{tpu_custom_call.1} parent=668 // loop_header_branch
        %842 = sbr.rel (%p840) target = $region676
      $region673: #{tpu_custom_call.1} parent=668 // loop_body
        %v846 = vld [vmem:[%s844] sm:%s837]
        %847 = vst [vmem:[%s845] sm:%s837] %v846
      $region674: #{tpu_custom_call.1} parent=668 // loop_footer
        %s843 = sadd.s32 1, %s839
      $region675: #{tpu_custom_call.1} parent=668 // loop_footer_branch
        %838 = sbr.rel target = $region671
      $region676: #{tpu_custom_call.1} parent=668 // loop_exit
        _
    $region669: #{tpu_custom_call.1} parent=1 // pred_fallthru
      _
    // Predicated region
    $region688: #{tpu_custom_call.1} parent=1 // pred_check
      _
    $region689: #{tpu_custom_call.1} parent=1 // pred_check_branch
      %864 = sbr.rel (0) target = $region691
    $region690: #{tpu_custom_call.1} parent=1 // pred_region
      %865 = vsyncadd [#allocation3], 16
    $region691: #{tpu_custom_call.1} parent=1 // pred_fallthru
      _
    %s866 = sld [smem:[#allocation5 + $0x107]]
    %s867 = scalar_lea.vmem %s1, %s866
    %s868 = scalar_lea.vmem [#allocation2], 23
    // Predicated region
    $region692: #{tpu_custom_call.1} parent=1 // pred_check
      _
    $region693: #{tpu_custom_call.1} parent=1 // pred_check_branch
      %870 = sbr.rel target = $region695
    $region694: #{tpu_custom_call.1} parent=1 // pred_region
      // Predicated region
      $region707: #{tpu_custom_call.1} parent=694 // pred_check
        _
      $region708: #{tpu_custom_call.1} parent=694 // pred_check_branch
        %886 = sbr.rel (0) target = $region710
      $region709: #{tpu_custom_call.1} parent=694 // pred_region
        %s888 = ssub.s32 2, 1
        loop: start=0, step=1, limit=1
        $region711: #{tpu_custom_call.1} parent=709 // loop_pre_header
          _
        $region712: #{tpu_custom_call.1} parent=709 // loop_header
          %s890 = sphi 0, %s894
          %p891 = scmp.ge.s32.totalorder %s890, 1
          %s895 = sphi %s867, %s867
          %s896 = sphi %s868, %s868
        $region713: #{tpu_custom_call.1} parent=709 // loop_header_branch
          %893 = sbr.rel (%p891) target = $region717
        $region714: #{tpu_custom_call.1} parent=709 // loop_body
          %v897 = vld [vmem:[%s895] sm:%s888]
          %898 = vst [vmem:[%s896] sm:%s888] %v897
        $region715: #{tpu_custom_call.1} parent=709 // loop_footer
          %s894 = sadd.s32 1, %s890
        $region716: #{tpu_custom_call.1} parent=709 // loop_footer_branch
          %889 = sbr.rel target = $region712
        $region717: #{tpu_custom_call.1} parent=709 // loop_exit
          _
      $region710: #{tpu_custom_call.1} parent=694 // pred_fallthru
        _
    $region695: #{tpu_custom_call.1} parent=1 // pred_fallthru
      _
    // Predicated region
    $region696: #{tpu_custom_call.1} parent=1 // pred_check
      _
    $region697: #{tpu_custom_call.1} parent=1 // pred_check_branch
      %872 = sbr.rel (0) target = $region699
    $region698: #{tpu_custom_call.1} parent=1 // pred_region
      %s874 = ssub.s32 2, 1
      loop: start=0, step=1, limit=1
      $region700: #{tpu_custom_call.1} parent=698 // loop_pre_header
        _
      $region701: #{tpu_custom_call.1} parent=698 // loop_header
        %s876 = sphi 0, %s880
        %p877 = scmp.ge.s32.totalorder %s876, 1
        %s881 = sphi %s867, %s867
        %s882 = sphi %s868, %s868
      $region702: #{tpu_custom_call.1} parent=698 // loop_header_branch
        %879 = sbr.rel (%p877) target = $region706
      $region703: #{tpu_custom_call.1} parent=698 // loop_body
        %v883 = vld [vmem:[%s881] sm:%s874]
        %884 = vst [vmem:[%s882] sm:%s874] %v883
      $region704: #{tpu_custom_call.1} parent=698 // loop_footer
        %s880 = sadd.s32 1, %s876
      $region705: #{tpu_custom_call.1} parent=698 // loop_footer_branch
        %875 = sbr.rel target = $region701
      $region706: #{tpu_custom_call.1} parent=698 // loop_exit
        _
    $region699: #{tpu_custom_call.1} parent=1 // pred_fallthru
      _
    // Predicated region
    $region718: #{tpu_custom_call.1} parent=1 // pred_check
      _
    $region719: #{tpu_custom_call.1} parent=1 // pred_check_branch
      %901 = sbr.rel (0) target = $region721
    $region720: #{tpu_custom_call.1} parent=1 // pred_region
      %902 = vsyncadd [#allocation3], 16
    $region721: #{tpu_custom_call.1} parent=1 // pred_fallthru
      _
    %s903 = sld [smem:[#allocation5 + $0x180]]
    %s904 = scalar_lea.vmem %s1, %s903
    %s905 = scalar_lea.vmem [#allocation2], 24
    // Predicated region
    $region722: #{tpu_custom_call.1} parent=1 // pred_check
      _
    $region723: #{tpu_custom_call.1} parent=1 // pred_check_branch
      %907 = sbr.rel target = $region725
    $region724: #{tpu_custom_call.1} parent=1 // pred_region
      // Predicated region
      $region737: #{tpu_custom_call.1} parent=724 // pred_check
        _
      $region738: #{tpu_custom_call.1} parent=724 // pred_check_branch
        %923 = sbr.rel (0) target = $region740
      $region739: #{tpu_custom_call.1} parent=724 // pred_region
        %s925 = ssub.s32 2, 1
        loop: start=0, step=1, limit=1
        $region741: #{tpu_custom_call.1} parent=739 // loop_pre_header
          _
        $region742: #{tpu_custom_call.1} parent=739 // loop_header
          %s927 = sphi 0, %s931
          %p928 = scmp.ge.s32.totalorder %s927, 1
          %s932 = sphi %s904, %s904
          %s933 = sphi %s905, %s905
        $region743: #{tpu_custom_call.1} parent=739 // loop_header_branch
          %930 = sbr.rel (%p928) target = $region747
        $region744: #{tpu_custom_call.1} parent=739 // loop_body
          %v934 = vld [vmem:[%s932] sm:%s925]
          %935 = vst [vmem:[%s933] sm:%s925] %v934
        $region745: #{tpu_custom_call.1} parent=739 // loop_footer
          %s931 = sadd.s32 1, %s927
        $region746: #{tpu_custom_call.1} parent=739 // loop_footer_branch
          %926 = sbr.rel target = $region742
        $region747: #{tpu_custom_call.1} parent=739 // loop_exit
          _
      $region740: #{tpu_custom_call.1} parent=724 // pred_fallthru
        _
    $region725: #{tpu_custom_call.1} parent=1 // pred_fallthru
      _
    // Predicated region
    $region726: #{tpu_custom_call.1} parent=1 // pred_check
      _
    $region727: #{tpu_custom_call.1} parent=1 // pred_check_branch
      %909 = sbr.rel (0) target = $region729
    $region728: #{tpu_custom_call.1} parent=1 // pred_region
      %s911 = ssub.s32 2, 1
      loop: start=0, step=1, limit=1
      $region730: #{tpu_custom_call.1} parent=728 // loop_pre_header
        _
      $region731: #{tpu_custom_call.1} parent=728 // loop_header
        %s913 = sphi 0, %s917
        %p914 = scmp.ge.s32.totalorder %s913, 1
        %s918 = sphi %s904, %s904
        %s919 = sphi %s905, %s905
      $region732: #{tpu_custom_call.1} parent=728 // loop_header_branch
        %916 = sbr.rel (%p914) target = $region736
      $region733: #{tpu_custom_call.1} parent=728 // loop_body
        %v920 = vld [vmem:[%s918] sm:%s911]
        %921 = vst [vmem:[%s919] sm:%s911] %v920
      $region734: #{tpu_custom_call.1} parent=728 // loop_footer
        %s917 = sadd.s32 1, %s913
      $region735: #{tpu_custom_call.1} parent=728 // loop_footer_branch
        %912 = sbr.rel target = $region731
      $region736: #{tpu_custom_call.1} parent=728 // loop_exit
        _
    $region729: #{tpu_custom_call.1} parent=1 // pred_fallthru
      _
    // Predicated region
    $region748: #{tpu_custom_call.1} parent=1 // pred_check
      _
    $region749: #{tpu_custom_call.1} parent=1 // pred_check_branch
      %938 = sbr.rel (0) target = $region751
    $region750: #{tpu_custom_call.1} parent=1 // pred_region
      %939 = vsyncadd [#allocation3], 16
    $region751: #{tpu_custom_call.1} parent=1 // pred_fallthru
      _
    %s940 = sld [smem:[#allocation5 + $0x181]]
    %s941 = scalar_lea.vmem %s1, %s940
    %s942 = scalar_lea.vmem [#allocation2], 25
    // Predicated region
    $region752: #{tpu_custom_call.1} parent=1 // pred_check
      _
    $region753: #{tpu_custom_call.1} parent=1 // pred_check_branch
      %944 = sbr.rel target = $region755
    $region754: #{tpu_custom_call.1} parent=1 // pred_region
      // Predicated region
      $region767: #{tpu_custom_call.1} parent=754 // pred_check
        _
      $region768: #{tpu_custom_call.1} parent=754 // pred_check_branch
        %960 = sbr.rel (0) target = $region770
      $region769: #{tpu_custom_call.1} parent=754 // pred_region
        %s962 = ssub.s32 2, 1
        loop: start=0, step=1, limit=1
        $region771: #{tpu_custom_call.1} parent=769 // loop_pre_header
          _
        $region772: #{tpu_custom_call.1} parent=769 // loop_header
          %s964 = sphi 0, %s968
          %p965 = scmp.ge.s32.totalorder %s964, 1
          %s969 = sphi %s941, %s941
          %s970 = sphi %s942, %s942
        $region773: #{tpu_custom_call.1} parent=769 // loop_header_branch
          %967 = sbr.rel (%p965) target = $region777
        $region774: #{tpu_custom_call.1} parent=769 // loop_body
          %v971 = vld [vmem:[%s969] sm:%s962]
          %972 = vst [vmem:[%s970] sm:%s962] %v971
        $region775: #{tpu_custom_call.1} parent=769 // loop_footer
          %s968 = sadd.s32 1, %s964
        $region776: #{tpu_custom_call.1} parent=769 // loop_footer_branch
          %963 = sbr.rel target = $region772
        $region777: #{tpu_custom_call.1} parent=769 // loop_exit
          _
      $region770: #{tpu_custom_call.1} parent=754 // pred_fallthru
        _
    $region755: #{tpu_custom_call.1} parent=1 // pred_fallthru
      _
    // Predicated region
    $region756: #{tpu_custom_call.1} parent=1 // pred_check
      _
    $region757: #{tpu_custom_call.1} parent=1 // pred_check_branch
      %946 = sbr.rel (0) target = $region759
    $region758: #{tpu_custom_call.1} parent=1 // pred_region
      %s948 = ssub.s32 2, 1
      loop: start=0, step=1, limit=1
      $region760: #{tpu_custom_call.1} parent=758 // loop_pre_header
        _
      $region761: #{tpu_custom_call.1} parent=758 // loop_header
        %s950 = sphi 0, %s954
        %p951 = scmp.ge.s32.totalorder %s950, 1
        %s955 = sphi %s941, %s941
        %s956 = sphi %s942, %s942
      $region762: #{tpu_custom_call.1} parent=758 // loop_header_branch
        %953 = sbr.rel (%p951) target = $region766
      $region763: #{tpu_custom_call.1} parent=758 // loop_body
        %v957 = vld [vmem:[%s955] sm:%s948]
        %958 = vst [vmem:[%s956] sm:%s948] %v957
      $region764: #{tpu_custom_call.1} parent=758 // loop_footer
        %s954 = sadd.s32 1, %s950
      $region765: #{tpu_custom_call.1} parent=758 // loop_footer_branch
        %949 = sbr.rel target = $region761
      $region766: #{tpu_custom_call.1} parent=758 // loop_exit
        _
    $region759: #{tpu_custom_call.1} parent=1 // pred_fallthru
      _
    // Predicated region
    $region778: #{tpu_custom_call.1} parent=1 // pred_check
      _
    $region779: #{tpu_custom_call.1} parent=1 // pred_check_branch
      %975 = sbr.rel (0) target = $region781
    $region780: #{tpu_custom_call.1} parent=1 // pred_region
      %976 = vsyncadd [#allocation3], 16
    $region781: #{tpu_custom_call.1} parent=1 // pred_fallthru
      _
    %s977 = sld [smem:[#allocation5 + $0x182]]
    %s978 = scalar_lea.vmem %s1, %s977
    %s979 = scalar_lea.vmem [#allocation2], 26
    // Predicated region
    $region782: #{tpu_custom_call.1} parent=1 // pred_check
      _
    $region783: #{tpu_custom_call.1} parent=1 // pred_check_branch
      %981 = sbr.rel target = $region785
    $region784: #{tpu_custom_call.1} parent=1 // pred_region
      // Predicated region
      $region797: #{tpu_custom_call.1} parent=784 // pred_check
        _
      $region798: #{tpu_custom_call.1} parent=784 // pred_check_branch
        %997 = sbr.rel (0) target = $region800
      $region799: #{tpu_custom_call.1} parent=784 // pred_region
        %s999 = ssub.s32 2, 1
        loop: start=0, step=1, limit=1
        $region801: #{tpu_custom_call.1} parent=799 // loop_pre_header
          _
        $region802: #{tpu_custom_call.1} parent=799 // loop_header
          %s1001 = sphi 0, %s1005
          %p1002 = scmp.ge.s32.totalorder %s1001, 1
          %s1006 = sphi %s978, %s978
          %s1007 = sphi %s979, %s979
        $region803: #{tpu_custom_call.1} parent=799 // loop_header_branch
          %1004 = sbr.rel (%p1002) target = $region807
        $region804: #{tpu_custom_call.1} parent=799 // loop_body
          %v1008 = vld [vmem:[%s1006] sm:%s999]
          %1009 = vst [vmem:[%s1007] sm:%s999] %v1008
        $region805: #{tpu_custom_call.1} parent=799 // loop_footer
          %s1005 = sadd.s32 1, %s1001
        $region806: #{tpu_custom_call.1} parent=799 // loop_footer_branch
          %1000 = sbr.rel target = $region802
        $region807: #{tpu_custom_call.1} parent=799 // loop_exit
          _
      $region800: #{tpu_custom_call.1} parent=784 // pred_fallthru
        _
    $region785: #{tpu_custom_call.1} parent=1 // pred_fallthru
      _
    // Predicated region
    $region786: #{tpu_custom_call.1} parent=1 // pred_check
      _
    $region787: #{tpu_custom_call.1} parent=1 // pred_check_branch
      %983 = sbr.rel (0) target = $region789
    $region788: #{tpu_custom_call.1} parent=1 // pred_region
      %s985 = ssub.s32 2, 1
      loop: start=0, step=1, limit=1
      $region790: #{tpu_custom_call.1} parent=788 // loop_pre_header
        _
      $region791: #{tpu_custom_call.1} parent=788 // loop_header
        %s987 = sphi 0, %s991
        %p988 = scmp.ge.s32.totalorder %s987, 1
        %s992 = sphi %s978, %s978
        %s993 = sphi %s979, %s979
      $region792: #{tpu_custom_call.1} parent=788 // loop_header_branch
        %990 = sbr.rel (%p988) target = $region796
      $region793: #{tpu_custom_call.1} parent=788 // loop_body
        %v994 = vld [vmem:[%s992] sm:%s985]
        %995 = vst [vmem:[%s993] sm:%s985] %v994
      $region794: #{tpu_custom_call.1} parent=788 // loop_footer
        %s991 = sadd.s32 1, %s987
      $region795: #{tpu_custom_call.1} parent=788 // loop_footer_branch
        %986 = sbr.rel target = $region791
      $region796: #{tpu_custom_call.1} parent=788 // loop_exit
        _
    $region789: #{tpu_custom_call.1} parent=1 // pred_fallthru
      _
    // Predicated region
    $region808: #{tpu_custom_call.1} parent=1 // pred_check
      _
    $region809: #{tpu_custom_call.1} parent=1 // pred_check_branch
      %1012 = sbr.rel (0) target = $region811
    $region810: #{tpu_custom_call.1} parent=1 // pred_region
      %1013 = vsyncadd [#allocation3], 16
    $region811: #{tpu_custom_call.1} parent=1 // pred_fallthru
      _
    %s1014 = sld [smem:[#allocation5 + $0x183]]
    %s1015 = scalar_lea.vmem %s1, %s1014
    %s1016 = scalar_lea.vmem [#allocation2], 27
    // Predicated region
    $region812: #{tpu_custom_call.1} parent=1 // pred_check
      _
    $region813: #{tpu_custom_call.1} parent=1 // pred_check_branch
      %1018 = sbr.rel target = $region815
    $region814: #{tpu_custom_call.1} parent=1 // pred_region
      // Predicated region
      $region827: #{tpu_custom_call.1} parent=814 // pred_check
        _
      $region828: #{tpu_custom_call.1} parent=814 // pred_check_branch
        %1034 = sbr.rel (0) target = $region830
      $region829: #{tpu_custom_call.1} parent=814 // pred_region
        %s1036 = ssub.s32 2, 1
        loop: start=0, step=1, limit=1
        $region831: #{tpu_custom_call.1} parent=829 // loop_pre_header
          _
        $region832: #{tpu_custom_call.1} parent=829 // loop_header
          %s1038 = sphi 0, %s1042
          %p1039 = scmp.ge.s32.totalorder %s1038, 1
          %s1043 = sphi %s1015, %s1015
          %s1044 = sphi %s1016, %s1016
        $region833: #{tpu_custom_call.1} parent=829 // loop_header_branch
          %1041 = sbr.rel (%p1039) target = $region837
        $region834: #{tpu_custom_call.1} parent=829 // loop_body
          %v1045 = vld [vmem:[%s1043] sm:%s1036]
          %1046 = vst [vmem:[%s1044] sm:%s1036] %v1045
        $region835: #{tpu_custom_call.1} parent=829 // loop_footer
          %s1042 = sadd.s32 1, %s1038
        $region836: #{tpu_custom_call.1} parent=829 // loop_footer_branch
          %1037 = sbr.rel target = $region832
        $region837: #{tpu_custom_call.1} parent=829 // loop_exit
          _
      $region830: #{tpu_custom_call.1} parent=814 // pred_fallthru
        _
    $region815: #{tpu_custom_call.1} parent=1 // pred_fallthru
      _
    // Predicated region
    $region816: #{tpu_custom_call.1} parent=1 // pred_check
      _
    $region817: #{tpu_custom_call.1} parent=1 // pred_check_branch
      %1020 = sbr.rel (0) target = $region819
    $region818: #{tpu_custom_call.1} parent=1 // pred_region
      %s1022 = ssub.s32 2, 1
      loop: start=0, step=1, limit=1
      $region820: #{tpu_custom_call.1} parent=818 // loop_pre_header
        _
      $region821: #{tpu_custom_call.1} parent=818 // loop_header
        %s1024 = sphi 0, %s1028
        %p1025 = scmp.ge.s32.totalorder %s1024, 1
        %s1029 = sphi %s1015, %s1015
        %s1030 = sphi %s1016, %s1016
      $region822: #{tpu_custom_call.1} parent=818 // loop_header_branch
        %1027 = sbr.rel (%p1025) target = $region826
      $region823: #{tpu_custom_call.1} parent=818 // loop_body
        %v1031 = vld [vmem:[%s1029] sm:%s1022]
        %1032 = vst [vmem:[%s1030] sm:%s1022] %v1031
      $region824: #{tpu_custom_call.1} parent=818 // loop_footer
        %s1028 = sadd.s32 1, %s1024
      $region825: #{tpu_custom_call.1} parent=818 // loop_footer_branch
        %1023 = sbr.rel target = $region821
      $region826: #{tpu_custom_call.1} parent=818 // loop_exit
        _
    $region819: #{tpu_custom_call.1} parent=1 // pred_fallthru
      _
    // Predicated region
    $region838: #{tpu_custom_call.1} parent=1 // pred_check
      _
    $region839: #{tpu_custom_call.1} parent=1 // pred_check_branch
      %1049 = sbr.rel (0) target = $region841
    $region840: #{tpu_custom_call.1} parent=1 // pred_region
      %1050 = vsyncadd [#allocation3], 16
    $region841: #{tpu_custom_call.1} parent=1 // pred_fallthru
      _
    %s1051 = sld [smem:[#allocation5 + $0x184]]
    %s1052 = scalar_lea.vmem %s1, %s1051
    %s1053 = scalar_lea.vmem [#allocation2], 28
    // Predicated region
    $region842: #{tpu_custom_call.1} parent=1 // pred_check
      _
    $region843: #{tpu_custom_call.1} parent=1 // pred_check_branch
      %1055 = sbr.rel target = $region845
    $region844: #{tpu_custom_call.1} parent=1 // pred_region
      // Predicated region
      $region857: #{tpu_custom_call.1} parent=844 // pred_check
        _
      $region858: #{tpu_custom_call.1} parent=844 // pred_check_branch
        %1071 = sbr.rel (0) target = $region860
      $region859: #{tpu_custom_call.1} parent=844 // pred_region
        %s1073 = ssub.s32 2, 1
        loop: start=0, step=1, limit=1
        $region861: #{tpu_custom_call.1} parent=859 // loop_pre_header
          _
        $region862: #{tpu_custom_call.1} parent=859 // loop_header
          %s1075 = sphi 0, %s1079
          %p1076 = scmp.ge.s32.totalorder %s1075, 1
          %s1080 = sphi %s1052, %s1052
          %s1081 = sphi %s1053, %s1053
        $region863: #{tpu_custom_call.1} parent=859 // loop_header_branch
          %1078 = sbr.rel (%p1076) target = $region867
        $region864: #{tpu_custom_call.1} parent=859 // loop_body
          %v1082 = vld [vmem:[%s1080] sm:%s1073]
          %1083 = vst [vmem:[%s1081] sm:%s1073] %v1082
        $region865: #{tpu_custom_call.1} parent=859 // loop_footer
          %s1079 = sadd.s32 1, %s1075
        $region866: #{tpu_custom_call.1} parent=859 // loop_footer_branch
          %1074 = sbr.rel target = $region862
        $region867: #{tpu_custom_call.1} parent=859 // loop_exit
          _
      $region860: #{tpu_custom_call.1} parent=844 // pred_fallthru
        _
    $region845: #{tpu_custom_call.1} parent=1 // pred_fallthru
      _
    // Predicated region
    $region846: #{tpu_custom_call.1} parent=1 // pred_check
      _
    $region847: #{tpu_custom_call.1} parent=1 // pred_check_branch
      %1057 = sbr.rel (0) target = $region849
    $region848: #{tpu_custom_call.1} parent=1 // pred_region
      %s1059 = ssub.s32 2, 1
      loop: start=0, step=1, limit=1
      $region850: #{tpu_custom_call.1} parent=848 // loop_pre_header
        _
      $region851: #{tpu_custom_call.1} parent=848 // loop_header
        %s1061 = sphi 0, %s1065
        %p1062 = scmp.ge.s32.totalorder %s1061, 1
        %s1066 = sphi %s1052, %s1052
        %s1067 = sphi %s1053, %s1053
      $region852: #{tpu_custom_call.1} parent=848 // loop_header_branch
        %1064 = sbr.rel (%p1062) target = $region856
      $region853: #{tpu_custom_call.1} parent=848 // loop_body
        %v1068 = vld [vmem:[%s1066] sm:%s1059]
        %1069 = vst [vmem:[%s1067] sm:%s1059] %v1068
      $region854: #{tpu_custom_call.1} parent=848 // loop_footer
        %s1065 = sadd.s32 1, %s1061
      $region855: #{tpu_custom_call.1} parent=848 // loop_footer_branch
        %1060 = sbr.rel target = $region851
      $region856: #{tpu_custom_call.1} parent=848 // loop_exit
        _
    $region849: #{tpu_custom_call.1} parent=1 // pred_fallthru
      _
    // Predicated region
    $region868: #{tpu_custom_call.1} parent=1 // pred_check
      _
    $region869: #{tpu_custom_call.1} parent=1 // pred_check_branch
      %1086 = sbr.rel (0) target = $region871
    $region870: #{tpu_custom_call.1} parent=1 // pred_region
      %1087 = vsyncadd [#allocation3], 16
    $region871: #{tpu_custom_call.1} parent=1 // pred_fallthru
      _
    %s1088 = sld [smem:[#allocation5 + $0x185]]
    %s1089 = scalar_lea.vmem %s1, %s1088
    %s1090 = scalar_lea.vmem [#allocation2], 29
    // Predicated region
    $region872: #{tpu_custom_call.1} parent=1 // pred_check
      _
    $region873: #{tpu_custom_call.1} parent=1 // pred_check_branch
      %1092 = sbr.rel target = $region875
    $region874: #{tpu_custom_call.1} parent=1 // pred_region
      // Predicated region
      $region887: #{tpu_custom_call.1} parent=874 // pred_check
        _
      $region888: #{tpu_custom_call.1} parent=874 // pred_check_branch
        %1108 = sbr.rel (0) target = $region890
      $region889: #{tpu_custom_call.1} parent=874 // pred_region
        %s1110 = ssub.s32 2, 1
        loop: start=0, step=1, limit=1
        $region891: #{tpu_custom_call.1} parent=889 // loop_pre_header
          _
        $region892: #{tpu_custom_call.1} parent=889 // loop_header
          %s1112 = sphi 0, %s1116
          %p1113 = scmp.ge.s32.totalorder %s1112, 1
          %s1117 = sphi %s1089, %s1089
          %s1118 = sphi %s1090, %s1090
        $region893: #{tpu_custom_call.1} parent=889 // loop_header_branch
          %1115 = sbr.rel (%p1113) target = $region897
        $region894: #{tpu_custom_call.1} parent=889 // loop_body
          %v1119 = vld [vmem:[%s1117] sm:%s1110]
          %1120 = vst [vmem:[%s1118] sm:%s1110] %v1119
        $region895: #{tpu_custom_call.1} parent=889 // loop_footer
          %s1116 = sadd.s32 1, %s1112
        $region896: #{tpu_custom_call.1} parent=889 // loop_footer_branch
          %1111 = sbr.rel target = $region892
        $region897: #{tpu_custom_call.1} parent=889 // loop_exit
          _
      $region890: #{tpu_custom_call.1} parent=874 // pred_fallthru
        _
    $region875: #{tpu_custom_call.1} parent=1 // pred_fallthru
      _
    // Predicated region
    $region876: #{tpu_custom_call.1} parent=1 // pred_check
      _
    $region877: #{tpu_custom_call.1} parent=1 // pred_check_branch
      %1094 = sbr.rel (0) target = $region879
    $region878: #{tpu_custom_call.1} parent=1 // pred_region
      %s1096 = ssub.s32 2, 1
      loop: start=0, step=1, limit=1
      $region880: #{tpu_custom_call.1} parent=878 // loop_pre_header
        _
      $region881: #{tpu_custom_call.1} parent=878 // loop_header
        %s1098 = sphi 0, %s1102
        %p1099 = scmp.ge.s32.totalorder %s1098, 1
        %s1103 = sphi %s1089, %s1089
        %s1104 = sphi %s1090, %s1090
      $region882: #{tpu_custom_call.1} parent=878 // loop_header_branch
        %1101 = sbr.rel (%p1099) target = $region886
      $region883: #{tpu_custom_call.1} parent=878 // loop_body
        %v1105 = vld [vmem:[%s1103] sm:%s1096]
        %1106 = vst [vmem:[%s1104] sm:%s1096] %v1105
      $region884: #{tpu_custom_call.1} parent=878 // loop_footer
        %s1102 = sadd.s32 1, %s1098
      $region885: #{tpu_custom_call.1} parent=878 // loop_footer_branch
        %1097 = sbr.rel target = $region881
      $region886: #{tpu_custom_call.1} parent=878 // loop_exit
        _
    $region879: #{tpu_custom_call.1} parent=1 // pred_fallthru
      _
    // Predicated region
    $region898: #{tpu_custom_call.1} parent=1 // pred_check
      _
    $region899: #{tpu_custom_call.1} parent=1 // pred_check_branch
      %1123 = sbr.rel (0) target = $region901
    $region900: #{tpu_custom_call.1} parent=1 // pred_region
      %1124 = vsyncadd [#allocation3], 16
    $region901: #{tpu_custom_call.1} parent=1 // pred_fallthru
      _
    %s1125 = sld [smem:[#allocation5 + $0x186]]
    %s1126 = scalar_lea.vmem %s1, %s1125
    %s1127 = scalar_lea.vmem [#allocation2], 30
    // Predicated region
    $region902: #{tpu_custom_call.1} parent=1 // pred_check
      _
    $region903: #{tpu_custom_call.1} parent=1 // pred_check_branch
      %1129 = sbr.rel target = $region905
    $region904: #{tpu_custom_call.1} parent=1 // pred_region
      // Predicated region
      $region917: #{tpu_custom_call.1} parent=904 // pred_check
        _
      $region918: #{tpu_custom_call.1} parent=904 // pred_check_branch
        %1145 = sbr.rel (0) target = $region920
      $region919: #{tpu_custom_call.1} parent=904 // pred_region
        %s1147 = ssub.s32 2, 1
        loop: start=0, step=1, limit=1
        $region921: #{tpu_custom_call.1} parent=919 // loop_pre_header
          _
        $region922: #{tpu_custom_call.1} parent=919 // loop_header
          %s1149 = sphi 0, %s1153
          %p1150 = scmp.ge.s32.totalorder %s1149, 1
          %s1154 = sphi %s1126, %s1126
          %s1155 = sphi %s1127, %s1127
        $region923: #{tpu_custom_call.1} parent=919 // loop_header_branch
          %1152 = sbr.rel (%p1150) target = $region927
        $region924: #{tpu_custom_call.1} parent=919 // loop_body
          %v1156 = vld [vmem:[%s1154] sm:%s1147]
          %1157 = vst [vmem:[%s1155] sm:%s1147] %v1156
        $region925: #{tpu_custom_call.1} parent=919 // loop_footer
          %s1153 = sadd.s32 1, %s1149
        $region926: #{tpu_custom_call.1} parent=919 // loop_footer_branch
          %1148 = sbr.rel target = $region922
        $region927: #{tpu_custom_call.1} parent=919 // loop_exit
          _
      $region920: #{tpu_custom_call.1} parent=904 // pred_fallthru
        _
    $region905: #{tpu_custom_call.1} parent=1 // pred_fallthru
      _
    // Predicated region
    $region906: #{tpu_custom_call.1} parent=1 // pred_check
      _
    $region907: #{tpu_custom_call.1} parent=1 // pred_check_branch
      %1131 = sbr.rel (0) target = $region909
    $region908: #{tpu_custom_call.1} parent=1 // pred_region
      %s1133 = ssub.s32 2, 1
      loop: start=0, step=1, limit=1
      $region910: #{tpu_custom_call.1} parent=908 // loop_pre_header
        _
      $region911: #{tpu_custom_call.1} parent=908 // loop_header
        %s1135 = sphi 0, %s1139
        %p1136 = scmp.ge.s32.totalorder %s1135, 1
        %s1140 = sphi %s1126, %s1126
        %s1141 = sphi %s1127, %s1127
      $region912: #{tpu_custom_call.1} parent=908 // loop_header_branch
        %1138 = sbr.rel (%p1136) target = $region916
      $region913: #{tpu_custom_call.1} parent=908 // loop_body
        %v1142 = vld [vmem:[%s1140] sm:%s1133]
        %1143 = vst [vmem:[%s1141] sm:%s1133] %v1142
      $region914: #{tpu_custom_call.1} parent=908 // loop_footer
        %s1139 = sadd.s32 1, %s1135
      $region915: #{tpu_custom_call.1} parent=908 // loop_footer_branch
        %1134 = sbr.rel target = $region911
      $region916: #{tpu_custom_call.1} parent=908 // loop_exit
        _
    $region909: #{tpu_custom_call.1} parent=1 // pred_fallthru
      _
    // Predicated region
    $region928: #{tpu_custom_call.1} parent=1 // pred_check
      _
    $region929: #{tpu_custom_call.1} parent=1 // pred_check_branch
      %1160 = sbr.rel (0) target = $region931
    $region930: #{tpu_custom_call.1} parent=1 // pred_region
      %1161 = vsyncadd [#allocation3], 16
    $region931: #{tpu_custom_call.1} parent=1 // pred_fallthru
      _
    %s1162 = sld [smem:[#allocation5 + $0x187]]
    %s1163 = scalar_lea.vmem %s1, %s1162
    %s1164 = scalar_lea.vmem [#allocation2], 31
    // Predicated region
    $region932: #{tpu_custom_call.1} parent=1 // pred_check
      _
    $region933: #{tpu_custom_call.1} parent=1 // pred_check_branch
      %1166 = sbr.rel target = $region935
    $region934: #{tpu_custom_call.1} parent=1 // pred_region
      // Predicated region
      $region947: #{tpu_custom_call.1} parent=934 // pred_check
        _
      $region948: #{tpu_custom_call.1} parent=934 // pred_check_branch
        %1182 = sbr.rel (0) target = $region950
      $region949: #{tpu_custom_call.1} parent=934 // pred_region
        %s1184 = ssub.s32 2, 1
        loop: start=0, step=1, limit=1
        $region951: #{tpu_custom_call.1} parent=949 // loop_pre_header
          _
        $region952: #{tpu_custom_call.1} parent=949 // loop_header
          %s1186 = sphi 0, %s1190
          %p1187 = scmp.ge.s32.totalorder %s1186, 1
          %s1191 = sphi %s1163, %s1163
          %s1192 = sphi %s1164, %s1164
        $region953: #{tpu_custom_call.1} parent=949 // loop_header_branch
          %1189 = sbr.rel (%p1187) target = $region957
        $region954: #{tpu_custom_call.1} parent=949 // loop_body
          %v1193 = vld [vmem:[%s1191] sm:%s1184]
          %1194 = vst [vmem:[%s1192] sm:%s1184] %v1193
        $region955: #{tpu_custom_call.1} parent=949 // loop_footer
          %s1190 = sadd.s32 1, %s1186
        $region956: #{tpu_custom_call.1} parent=949 // loop_footer_branch
          %1185 = sbr.rel target = $region952
        $region957: #{tpu_custom_call.1} parent=949 // loop_exit
          _
      $region950: #{tpu_custom_call.1} parent=934 // pred_fallthru
        _
    $region935: #{tpu_custom_call.1} parent=1 // pred_fallthru
      _
    // Predicated region
    $region936: #{tpu_custom_call.1} parent=1 // pred_check
      _
    $region937: #{tpu_custom_call.1} parent=1 // pred_check_branch
      %1168 = sbr.rel (0) target = $region939
    $region938: #{tpu_custom_call.1} parent=1 // pred_region
      %s1170 = ssub.s32 2, 1
      loop: start=0, step=1, limit=1
      $region940: #{tpu_custom_call.1} parent=938 // loop_pre_header
        _
      $region941: #{tpu_custom_call.1} parent=938 // loop_header
        %s1172 = sphi 0, %s1176
        %p1173 = scmp.ge.s32.totalorder %s1172, 1
        %s1177 = sphi %s1163, %s1163
        %s1178 = sphi %s1164, %s1164
      $region942: #{tpu_custom_call.1} parent=938 // loop_header_branch
        %1175 = sbr.rel (%p1173) target = $region946
      $region943: #{tpu_custom_call.1} parent=938 // loop_body
        %v1179 = vld [vmem:[%s1177] sm:%s1170]
        %1180 = vst [vmem:[%s1178] sm:%s1170] %v1179
      $region944: #{tpu_custom_call.1} parent=938 // loop_footer
        %s1176 = sadd.s32 1, %s1172
      $region945: #{tpu_custom_call.1} parent=938 // loop_footer_branch
        %1171 = sbr.rel target = $region941
      $region946: #{tpu_custom_call.1} parent=938 // loop_exit
        _
    $region939: #{tpu_custom_call.1} parent=1 // pred_fallthru
      _
    // Predicated region
    $region958: #{tpu_custom_call.1} parent=1 // pred_check
      _
    $region959: #{tpu_custom_call.1} parent=1 // pred_check_branch
      %1197 = sbr.rel (0) target = $region961
    $region960: #{tpu_custom_call.1} parent=1 // pred_region
      %1198 = vsyncadd [#allocation3], 16
    $region961: #{tpu_custom_call.1} parent=1 // pred_fallthru
      _
    %s1199 = smul.u32 1, 1
    %s1200 = sshll.u32 %s1199, 4
    %1201 = dma.done [#allocation3], %s1200
    %s1202 = sshll.u32 %s1199, 4
    %1203 = dma.done [#allocation3], %s1202
    %s1204 = sshll.u32 %s1199, 4
    %1205 = dma.done [#allocation3], %s1204
    %s1206 = sshll.u32 %s1199, 4
    %1207 = dma.done [#allocation3], %s1206
    %s1208 = sshll.u32 %s1199, 4
    %1209 = dma.done [#allocation3], %s1208
    %s1210 = sshll.u32 %s1199, 4
    %1211 = dma.done [#allocation3], %s1210
    %s1212 = sshll.u32 %s1199, 4
    %1213 = dma.done [#allocation3], %s1212
    %s1214 = sshll.u32 %s1199, 4
    %1215 = dma.done [#allocation3], %s1214
    %s1216 = sshll.u32 %s1199, 4
    %1217 = dma.done [#allocation3], %s1216
    %s1218 = sshll.u32 %s1199, 4
    %1219 = dma.done [#allocation3], %s1218
    %s1220 = sshll.u32 %s1199, 4
    %1221 = dma.done [#allocation3], %s1220
    %s1222 = sshll.u32 %s1199, 4
    %1223 = dma.done [#allocation3], %s1222
    %s1224 = sshll.u32 %s1199, 4
    %1225 = dma.done [#allocation3], %s1224
    %s1226 = sshll.u32 %s1199, 4
    %1227 = dma.done [#allocation3], %s1226
    %s1228 = sshll.u32 %s1199, 4
    %1229 = dma.done [#allocation3], %s1228
    %s1230 = sshll.u32 %s1199, 4
    %1231 = dma.done [#allocation3], %s1230
    %s1232 = sshll.u32 %s1199, 4
    %1233 = dma.done [#allocation3], %s1232
    %s1234 = sshll.u32 %s1199, 4
    %1235 = dma.done [#allocation3], %s1234
    %s1236 = sshll.u32 %s1199, 4
    %1237 = dma.done [#allocation3], %s1236
    %s1238 = sshll.u32 %s1199, 4
    %1239 = dma.done [#allocation3], %s1238
    %s1240 = sshll.u32 %s1199, 4
    %1241 = dma.done [#allocation3], %s1240
    %s1242 = sshll.u32 %s1199, 4
    %1243 = dma.done [#allocation3], %s1242
    %s1244 = sshll.u32 %s1199, 4
    %1245 = dma.done [#allocation3], %s1244
    %s1246 = sshll.u32 %s1199, 4
    %1247 = dma.done [#allocation3], %s1246
    %s1248 = sshll.u32 %s1199, 4
    %1249 = dma.done [#allocation3], %s1248
    %s1250 = sshll.u32 %s1199, 4
    %1251 = dma.done [#allocation3], %s1250
    %s1252 = sshll.u32 %s1199, 4
    %1253 = dma.done [#allocation3], %s1252
    %s1254 = sshll.u32 %s1199, 4
    %1255 = dma.done [#allocation3], %s1254
    %s1256 = sshll.u32 %s1199, 4
    %1257 = dma.done [#allocation3], %s1256
    %s1258 = sshll.u32 %s1199, 4
    %1259 = dma.done [#allocation3], %s1258
    %s1260 = sshll.u32 %s1199, 4
    %1261 = dma.done [#allocation3], %s1260
    %s1262 = sshll.u32 %s1199, 4
    %1263 = dma.done [#allocation3], %s1262
    %v1264 = vld [vmem:[#allocation2] sm:$0xff]
    %v1265 = vld [vmem:[#allocation2 + $0x8] sm:$0xff]
    %v1266 = vld [vmem:[#allocation2 + $0x10] sm:$0xff]
    %v1267 = vld [vmem:[#allocation2 + $0x18] sm:$0xff]
    %v1268 = vmul.f32 %v1264, %v1264
    %v1269 = vmul.f32 %v1265, %v1265
    %v1270 = vmul.f32 %v1266, %v1266
    %v1271 = vmul.f32 %v1267, %v1267
    %vm1272 = vcmask 523264
    %v1273 = vsel %vm1272, %v1268, 0.0
    %1274 = vadd.xlane.f32.xlu0 %v1273
    %v1275 = vpop.xlane.xlu0 %1274
    %v1276 = vsel %vm1272, %v1269, 0.0
    %1277 = vadd.xlane.f32.xlu0 %v1276
    %v1278 = vpop.xlane.xlu0 %1277
    %v1279 = vsel %vm1272, %v1270, 0.0
    %1280 = vadd.xlane.f32.xlu0 %v1279
    %v1281 = vpop.xlane.xlu0 %1280
    %v1282 = vsel %vm1272, %v1271, 0.0
    %1283 = vadd.xlane.f32.xlu0 %v1282
    %v1284 = vpop.xlane.xlu0 %1283
    %v1285 = vrsqrt.pop %v1275
    %v1286 = vmul.f32 %v1285, %v1275
    %v1287 = vmul.f32 %v1286, %v1285
    %v1288 = vmul.f32 0.5, %v1287
    %v1289 = vsub.f32 1.5, %v1288
    %v1290 = vmul.f32 %v1285, %v1289
    %v1291 = vmul.f32 %v1275, %v1290
    %vm1292 = vcmp.eq.f32.partialorder %v1275, inf
    %v1293 = vsel %vm1292, %v1275, %v1291
    %vm1294 = vcmp.eq.f32.partialorder %v1275, 0.0
    %v1295 = vand.u32 %v1275, 2147483648
    %v1296 = vsel %vm1294, %v1295, %v1293
    %v1297 = vrsqrt.pop %v1278
    %v1298 = vmul.f32 %v1297, %v1278
    %v1299 = vmul.f32 %v1298, %v1297
    %v1300 = vmul.f32 0.5, %v1299
    %v1301 = vsub.f32 1.5, %v1300
    %v1302 = vmul.f32 %v1297, %v1301
    %v1303 = vmul.f32 %v1278, %v1302
    %vm1304 = vcmp.eq.f32.partialorder %v1278, inf
    %v1305 = vsel %vm1304, %v1278, %v1303
    %vm1306 = vcmp.eq.f32.partialorder %v1278, 0.0
    %v1307 = vand.u32 %v1278, 2147483648
    %v1308 = vsel %vm1306, %v1307, %v1305
    %v1309 = vrsqrt.pop %v1281
    %v1310 = vmul.f32 %v1309, %v1281
    %v1311 = vmul.f32 %v1310, %v1309
    %v1312 = vmul.f32 0.5, %v1311
    %v1313 = vsub.f32 1.5, %v1312
    %v1314 = vmul.f32 %v1309, %v1313
    %v1315 = vmul.f32 %v1281, %v1314
    %vm1316 = vcmp.eq.f32.partialorder %v1281, inf
    %v1317 = vsel %vm1316, %v1281, %v1315
    %vm1318 = vcmp.eq.f32.partialorder %v1281, 0.0
    %v1319 = vand.u32 %v1281, 2147483648
    %v1320 = vsel %vm1318, %v1319, %v1317
    %v1321 = vrsqrt.pop %v1284
    %v1322 = vmul.f32 %v1321, %v1284
    %v1323 = vmul.f32 %v1322, %v1321
    %v1324 = vmul.f32 0.5, %v1323
    %v1325 = vsub.f32 1.5, %v1324
    %v1326 = vmul.f32 %v1321, %v1325
    %v1327 = vmul.f32 %v1284, %v1326
    %vm1328 = vcmp.eq.f32.partialorder %v1284, inf
    %v1329 = vsel %vm1328, %v1284, %v1327
    %vm1330 = vcmp.eq.f32.partialorder %v1284, 0.0
    %v1331 = vand.u32 %v1284, 2147483648
    %v1332 = vsel %vm1330, %v1331, %v1329
    %vm1333 = vcmp.gt.f32.partialorder %v1296, 1.0
    %vm1334 = vcmp.gt.f32.partialorder %v1308, 1.0
    %vm1335 = vcmp.gt.f32.partialorder %v1320, 1.0
    %vm1336 = vcmp.gt.f32.partialorder %v1332, 1.0
    %v1337 = vadd.f32 %v1296, 1e-07
    %v1338 = vadd.f32 %v1308, 1e-07
    %v1339 = vadd.f32 %v1320, 1e-07
    %v1340 = vadd.f32 %v1332, 1e-07
    %v1341 = vrcp.pop %v1337
    %v1342 = vmul.f32 %v1337, %v1341
    %v1343 = vsub.f32 1.0, %v1342
    %v1344 = vmul.f32 %v1341, %v1343
    %v1345 = vadd.f32 %v1341, %v1344
    %vm1346 = vweird.f32 %v1337
    %vm1347 = vweird.f32 %v1341
    %vm1348 = vmor %vm1346, %vm1347
    %v1349 = vsel %vm1348, %v1341, %v1345
    %v1350 = vand.u32 2147483647, %v1337
    %vm1351 = vcmp.eq.f32.partialorder %v1350, 8.507059e+37
    %v1352 = vand.u32 %v1337, 2147483648
    %v1353 = vor.u32 1.1754944e-38, %v1352
    %v1354 = vsel %vm1351, %v1353, %v1349
    %v1355 = vrcp.pop %v1338
    %v1356 = vmul.f32 %v1338, %v1355
    %v1357 = vsub.f32 1.0, %v1356
    %v1358 = vmul.f32 %v1355, %v1357
    %v1359 = vadd.f32 %v1355, %v1358
    %vm1360 = vweird.f32 %v1338
    %vm1361 = vweird.f32 %v1355
    %vm1362 = vmor %vm1360, %vm1361
    %v1363 = vsel %vm1362, %v1355, %v1359
    %v1364 = vand.u32 2147483647, %v1338
    %vm1365 = vcmp.eq.f32.partialorder %v1364, 8.507059e+37
    %v1366 = vand.u32 %v1338, 2147483648
    %v1367 = vor.u32 1.1754944e-38, %v1366
    %v1368 = vsel %vm1365, %v1367, %v1363
    %v1369 = vrcp.pop %v1339
    %v1370 = vmul.f32 %v1339, %v1369
    %v1371 = vsub.f32 1.0, %v1370
    %v1372 = vmul.f32 %v1369, %v1371
    %v1373 = vadd.f32 %v1369, %v1372
    %vm1374 = vweird.f32 %v1339
    %vm1375 = vweird.f32 %v1369
    %vm1376 = vmor %vm1374, %vm1375
    %v1377 = vsel %vm1376, %v1369, %v1373
    %v1378 = vand.u32 2147483647, %v1339
    %vm1379 = vcmp.eq.f32.partialorder %v1378, 8.507059e+37
    %v1380 = vand.u32 %v1339, 2147483648
    %v1381 = vor.u32 1.1754944e-38, %v1380
    %v1382 = vsel %vm1379, %v1381, %v1377
    %v1383 = vrcp.pop %v1340
    %v1384 = vmul.f32 %v1340, %v1383
    %v1385 = vsub.f32 1.0, %v1384
    %v1386 = vmul.f32 %v1383, %v1385
    %v1387 = vadd.f32 %v1383, %v1386
    %vm1388 = vweird.f32 %v1340
    %vm1389 = vweird.f32 %v1383
    %vm1390 = vmor %vm1388, %vm1389
    %v1391 = vsel %vm1390, %v1383, %v1387
    %v1392 = vand.u32 2147483647, %v1340
    %vm1393 = vcmp.eq.f32.partialorder %v1392, 8.507059e+37
    %v1394 = vand.u32 %v1340, 2147483648
    %v1395 = vor.u32 1.1754944e-38, %v1394
    %v1396 = vsel %vm1393, %v1395, %v1391
    %v1397 = vsel %vm1333, %v1354, 1.0
    %v1398 = vsel %vm1334, %v1368, 1.0
    %v1399 = vsel %vm1335, %v1382, 1.0
    %v1400 = vsel %vm1336, %v1396, 1.0
    %v1401 = vmul.f32 %v1264, %v1397
    %v1402 = vmul.f32 %v1265, %v1398
    %v1403 = vmul.f32 %v1266, %v1399
    %v1404 = vmul.f32 %v1267, %v1400
    %v1405 = vsel %vm1272, %v1401, 0.0
    %v1406 = vrot.slane %v1405, 4
    %v1407 = vadd.f32 %v1405, %v1406
    %v1408 = vrot.slane %v1407, 2
    %v1409 = vadd.f32 %v1407, %v1408
    %v1410 = vrot.slane %v1409, 1
    %v1411 = vadd.f32 %v1409, %v1410
    %v1412 = vsel %vm1272, %v1402, 0.0
    %v1413 = vrot.slane %v1412, 4
    %v1414 = vadd.f32 %v1412, %v1413
    %v1415 = vrot.slane %v1414, 2
    %v1416 = vadd.f32 %v1414, %v1415
    %v1417 = vrot.slane %v1416, 1
    %v1418 = vadd.f32 %v1416, %v1417
    %v1419 = vsel %vm1272, %v1403, 0.0
    %v1420 = vrot.slane %v1419, 4
    %v1421 = vadd.f32 %v1419, %v1420
    %v1422 = vrot.slane %v1421, 2
    %v1423 = vadd.f32 %v1421, %v1422
    %v1424 = vrot.slane %v1423, 1
    %v1425 = vadd.f32 %v1423, %v1424
    %v1426 = vsel %vm1272, %v1404, 0.0
    %v1427 = vrot.slane %v1426, 4
    %v1428 = vadd.f32 %v1426, %v1427
    %v1429 = vrot.slane %v1428, 2
    %v1430 = vadd.f32 %v1428, %v1429
    %v1431 = vrot.slane %v1430, 1
    %v1432 = vadd.f32 %v1430, %v1431
    %v1433 = vrcp.pop 8.0
    %v1434 = vmul.f32 8.0, %v1433
    %v1435 = vsub.f32 1.0, %v1434
    %v1436 = vmul.f32 %v1433, %v1435
    %v1437 = vadd.f32 %v1433, %v1436
    %vm1438 = vweird.f32 %v1433
    %v1439 = vsel %vm1438, %v1433, %v1437
    %v1440 = vmul.f32 %v1411, %v1439
    %v1441 = vmul.f32 %v1418, %v1439
    %v1442 = vmul.f32 %v1425, %v1439
    %v1443 = vmul.f32 %v1432, %v1439
    %1444 = vst.msk [vmem:[#allocation6] sm:$0xff] %vm1272, 0.0
    %1445 = vst.msk [vmem:[#allocation6 + $0x8] sm:$0xff] %vm1272, 0.0
    %vm1450 = vcmask 1041409
    %v1451 = vsel %vm1450, %v1441, %v1440
    %vm1452 = vcmask 1042434
    %v1453 = vsel %vm1452, %v1442, %v1451
    %vm1454 = vcmask 1043459
    %v1455 = vsel %vm1454, %v1443, %v1453
    %vm1457 = vcmask 519168
    %1458 = vst.msk [vmem:[#allocation6] sm:$0xf] %vm1457, %v1455
    // Predicated region
    $region962: #{tpu_custom_call.1} parent=1 // pred_check
      _
    $region963: #{tpu_custom_call.1} parent=1 // pred_check_branch
      %1460 = sbr.rel (0) target = $region965
    $region964: #{tpu_custom_call.1} parent=1 // pred_region
      %1462 = vsyncadd [#allocation7], 0
      %s1463 = sshll.u32 [#allocation6], 4
      %s1464 = int_to_ptr.vmem [resolvable:$true] %s1463
      %s1465 = sshll.u32 %s2, 4
      %s1466 = int_to_ptr.hbm [resolvable:$true] %s1465
      %1471 = dma.vmem_to_hbm [thread:$0]  %s1464, 256, %s1466, [#allocation7], 128, 128, 8
    $region965: #{tpu_custom_call.1} parent=1 // pred_fallthru
      _
    // Predicated region
    $region966: #{tpu_custom_call.1} parent=1 // pred_check
      _
    $region967: #{tpu_custom_call.1} parent=1 // pred_check_branch
      %1473 = sbr.rel (0) target = $region969
    $region968: #{tpu_custom_call.1} parent=1 // pred_region
      %1475 = dma.done [#allocation7], 256
    $region969: #{tpu_custom_call.1} parent=1 // pred_fallthru
      _
    %1476 = vsyncpa [#allocation7], 1
  %1477 = vsyncmov [#allocation3]
  %s1478 = vpop.sfrf %1477
  %p1479 = scmp.eq.s32.totalorder %s1478, 0
  %p1480 = pneg %p1479
  %1482 = shalt.err (%p1480)

</llo_original>
